<compile_context>
chip_gen: v5e
topology: v5e:2x2
jax: 0.10.0
libtpu: 0.0.40
codegen_flags: <defaults>
</compile_context>

<pallas_src>
import jax
import jax.numpy as jnp
from jax.experimental import pallas as pl
from jax.experimental.pallas import tpu as pltpu

# ---------------- problem sizes ----------------
B = 2            # batch
C_IN = 4         # num_channels per stream
H = W = 16       # spatial
C_FEAT = 256     # Features() output channels -> concat gives 512
N_CLS = 10       # Classifier output classes
K = 3            # conv kernel
PAD = 1

CHW = C_IN * H * W            # 1024 flattened pixels per stream
BIAS_ROW = 2 * CHW            # input lane holding the constant 1.0 (bias carrier)
K_TOTAL = 2 * CHW + 128       # 2176 = 17*128 lane-aligned contraction dim
ONES_COL = 2 * C_FEAT         # feature lane that is constant 1.0 (carries b_fc)
N_FEAT_PAD = 640              # 5*128: [rgb 0..255 | nir 256..511 | 1.0 | zeros]
N_CLS_PAD = 128               # lane-aligned class dim (sliced back to 10 outside)
B_PAD = 8                     # sublane-aligned batch (unmasked f32 output store)


# ------------------------------- Pallas kernel -------------------------------
def concatnet_kernel(x_ref, w1_ref, w2_ref, out_ref):
    # x_ref   : (B_PAD, K_TOTAL)        bf16  [rgb flat | nir flat | 1.0 | zeros]
    # w1_ref  : (K_TOTAL, N_FEAT_PAD)   bf16  block-diag pooled conv weights + bias row
    # w2_ref  : (N_FEAT_PAD, N_CLS_PAD) bf16  classifier weights + bias row
    # out_ref : (B_PAD, N_CLS_PAD)      f32   padded logits

    # Fused conv + global-avg-pool + concat + bias: one MXU matmul (f32 accumulate).
    feat = jnp.dot(x_ref[...], w1_ref[...], preferred_element_type=jnp.float32)
    # ReLU in f32 on the VPU (bias already added via the constant-1 input lane;
    # the constant-1 feature lane survives ReLU unchanged).
    feat = jnp.maximum(feat, 0.0)
    # Classifier (+ bias via the constant-1 feature lane).
    out_ref[...] = jnp.dot(feat.astype(jnp.bfloat16), w2_ref[...],
                           preferred_element_type=jnp.float32)


# --------------------------------- weight prep ---------------------------------
def _pool_matrix():
    """(C_IN*H*W, C_IN*K*K) linear map: x_flat -> HW-mean of zero-padded im2col
    patches.  Column order c*K*K + dy*K + dx matches PyTorch's Conv2d flatten."""
    ii = jnp.arange(H)
    jj = jnp.arange(W)
    dys = jnp.arange(K)
    # pixel row i contributes to kernel offset dy iff  dy-PAD <= i < H+dy-PAD
    my = ((ii[None, :] >= dys[:, None] - PAD)
          & (ii[None, :] < H + dys[:, None] - PAD)).astype(jnp.float32)   # (K, H)
    mx = ((jj[None, :] >= dys[:, None] - PAD)
          & (jj[None, :] < W + dys[:, None] - PAD)).astype(jnp.float32)   # (K, W)
    sp = jnp.einsum("yi,xj->ijyx", my, mx) / float(H * W)                 # (H, W, K, K)
    eye_c = jnp.eye(C_IN, dtype=jnp.float32)
    P = jnp.einsum("cd,ijyx->cijdyx", eye_c, sp)                          # (C,H,W,C,K,K)
    return P.reshape(C_IN * H * W, C_IN * K * K)


def prepare_params(params):
    """One-time weight prep: fold the global-avg-pool into the conv weights,
    build the block-diagonal fused matrices, fold both biases, pad, cast to bf16.
    Entirely outside the per-call forward path."""
    P = _pool_matrix()                                                    # (1024, 36)
    w_eff_rgb = P @ params["w_rgb"].reshape(C_FEAT, -1).T                 # (1024, 256)
    w_eff_nir = P @ params["w_nir"].reshape(C_FEAT, -1).T                 # (1024, 256)

    # First matmul weights: rgb block | nir block | bias row | ones-lane column.
    w1 = jnp.zeros((K_TOTAL, N_FEAT_PAD), jnp.float32)
    w1 = w1.at[0:CHW, 0:C_FEAT].set(w_eff_rgb)                            # rgb block
    w1 = w1.at[CHW:2 * CHW, C_FEAT:2 * C_FEAT].set(w_eff_nir)             # nir block
    w1 = w1.at[BIAS_ROW, 0:C_FEAT].set(params["b_rgb"])                   # conv biases
    w1 = w1.at[BIAS_ROW, C_FEAT:2 * C_FEAT].set(params["b_nir"])
    w1 = w1.at[BIAS_ROW, ONES_COL].set(1.0)         # constant-1 feature lane -> b_fc

    # Second matmul weights: classifier + its bias in the constant-1 feature row.
    w2 = jnp.zeros((N_FEAT_PAD, N_CLS_PAD), jnp.float32)
    w2 = w2.at[0:2 * C_FEAT, 0:N_CLS].set(params["w_fc"])
    w2 = w2.at[ONES_COL, 0:N_CLS].set(params["b_fc"])

    return {"w1": w1.astype(jnp.bfloat16), "w2": w2.astype(jnp.bfloat16)}


# --------------------------------- glue (JAX) ---------------------------------
@jax.jit
def concatnet_forward(rgb, nir, prep):
    b = rgb.shape[0]
    ones = jnp.ones((b, 1), rgb.dtype)                                    # bias lane
    # [rgb flat | nir flat | 1.0] — reshapes are free, single concat.
    x = jnp.concatenate([rgb.reshape(b, -1), nir.reshape(b, -1), ones], axis=1)
    # Row-pad to a full f32 sublane tile, lane-pad to K_TOTAL, cast to bf16.
    x = jnp.pad(x, ((0, B_PAD - b), (0, K_TOTAL - x.shape[1]))).astype(jnp.bfloat16)

    vmem = lambda: pl.BlockSpec(memory_space=pltpu.MemorySpace.VMEM)
    out = pl.pallas_call(
        concatnet_kernel,
        out_shape=jax.ShapeDtypeStruct((B_PAD, N_CLS_PAD), jnp.float32),
        in_specs=[vmem(), vmem(), vmem()],
        out_specs=vmem(),
    )(x, prep["w1"], prep["w2"])

    return out[:b, :N_CLS]                                                # (B, N_CLS)


# ------------------------------ pure-JAX reference -----------------------------
def im2col_nchw(x, k=K, pad=PAD):
    b, c, h, w = x.shape
    xp = jnp.pad(x, ((0, 0), (0, 0), (pad, pad), (pad, pad)))
    cols = []
    for dy in range(k):
        for dx in range(k):
            cols.append(xp[:, :, dy:dy + h, dx:dx + w])
    p = jnp.stack(cols, axis=2)                 # (B, C, k*k, H, W)
    p = p.reshape(b, c * k * k, h * w)
    return p.transpose(0, 2, 1)                 # (B, HW, C*k*k)


def reference_forward(rgb, nir, params):
    """f32 reference with the module's exact forward semantics."""
    def features(x, w, b):
        p = im2col_nchw(x)                                          # (B, HW, Cin*9)
        wf = w.reshape(w.shape[0], -1).T                            # (Cin*9, Cout)
        y = jnp.einsum("bpk,kc->bpc", p, wf) + b[None, None, :]     # conv
        return jnp.mean(y, axis=1)                                  # global avg pool
    r = jax.nn.relu(features(rgb, params["w_rgb"], params["b_rgb"]))
    n = jax.nn.relu(features(nir, params["w_nir"], params["b_nir"]))
    feat = jnp.concatenate([r, n], axis=1)                          # (B, 512)
    return feat @ params["w_fc"] + params["b_fc"]


def init_params(key):
    ks = jax.random.split(key, 6)
    s_conv = 1.0 / jnp.sqrt(C_IN * K * K)
    s_fc = 1.0 / jnp.sqrt(2 * C_FEAT)
    return {
        "w_rgb": jax.random.uniform(ks[0], (C_FEAT, C_IN, K, K), jnp.float32, -s_conv, s_conv),
        "b_rgb": jax.random.uniform(ks[1], (C_FEAT,), jnp.float32, -s_conv, s_conv),
        "w_nir": jax.random.uniform(ks[2], (C_FEAT, C_IN, K, K), jnp.float32, -s_conv, s_conv),
        "b_nir": jax.random.uniform(ks[3], (C_FEAT,), jnp.float32, -s_conv, s_conv),
        "w_fc": jax.random.uniform(ks[4], (2 * C_FEAT, N_CLS), jnp.float32, -s_fc, s_fc),
        "b_fc": jax.random.uniform(ks[5], (N_CLS,), jnp.float32, -s_fc, s_fc),
    }


if __name__ == "__main__":
    key = jax.random.PRNGKey(0)
    k_rgb, k_nir, k_par = jax.random.split(key, 3)
    rgb = jax.random.normal(k_rgb, (B, C_IN, H, W), jnp.float32)    # NCHW
    nir = jax.random.normal(k_nir, (B, C_IN, H, W), jnp.float32)    # NCHW
    params = init_params(k_par)
    prep = prepare_params(params)                                   # one-time weight prep

    out = concatnet_forward(rgb, nir, prep)
    out = jax.block_until_ready(out)

    ref = reference_forward(rgb, nir, params)
    assert out.shape == (B, N_CLS)
    # bf16 MXU operands (f32 accumulation, pool folded into weights) vs f32 reference.
    assert jnp.allclose(out, ref, atol=1e-2, rtol=1e-2), (out, ref)
    print("KERNEL_OK")
</pallas_src>

<mosaic_0001>
module attributes {stable_mosaic.version = 11 : i64} {
  func.func @concatnet_kernel(%arg0: memref<8x2176xbf16, #tpu.memory_space<vmem>>, %arg1: memref<2176x640xbf16, #tpu.memory_space<vmem>>, %arg2: memref<640x128xbf16, #tpu.memory_space<vmem>>, %arg3: memref<8x128xf32, #tpu.memory_space<vmem>>) attributes {dimension_semantics = [], scalar_prefetch = 0 : i64, scratch_operands = 0 : i64, tpu.core_type = #tpu.core_type<tc>} {
    %c0 = arith.constant 0 : index
    %c0_0 = arith.constant 0 : index
    %0 = vector.load %arg0[%c0, %c0_0] : memref<8x2176xbf16, #tpu.memory_space<vmem>>, vector<8x2176xbf16>
    %c0_1 = arith.constant 0 : index
    %c0_2 = arith.constant 0 : index
    %1 = vector.load %arg1[%c0_1, %c0_2] : memref<2176x640xbf16, #tpu.memory_space<vmem>>, vector<2176x640xbf16>
    %cst = arith.constant dense<0.000000e+00> : vector<8x640xf32>
    %2 = tpu.matmul %0, %1, %cst {dimension_numbers = #tpu.dot_dimension_numbers<[1], [0], [0], [1], [0, 0, 1, 1], [], []>} : vector<8x2176xbf16>, vector<2176x640xbf16>, vector<8x640xf32> -> vector<8x640xf32>
    %cst_3 = arith.constant 0.000000e+00 : f32
    %3 = vector.broadcast %cst_3 : f32 to vector<8x640xf32>
    %4 = arith.maximumf %2, %3 : vector<8x640xf32>
    %5 = arith.truncf %4 : vector<8x640xf32> to vector<8x640xbf16>
    %c0_4 = arith.constant 0 : index
    %c0_5 = arith.constant 0 : index
    %6 = vector.load %arg2[%c0_4, %c0_5] : memref<640x128xbf16, #tpu.memory_space<vmem>>, vector<640x128xbf16>
    %cst_6 = arith.constant dense<0.000000e+00> : vector<8x128xf32>
    %7 = tpu.matmul %5, %6, %cst_6 {dimension_numbers = #tpu.dot_dimension_numbers<[1], [0], [0], [1], [0, 0, 1, 1], [], []>} : vector<8x640xbf16>, vector<640x128xbf16>, vector<8x128xf32> -> vector<8x128xf32>
    %c0_7 = arith.constant 0 : index
    %c0_8 = arith.constant 0 : index
    %8 = vector.load %arg3[%c0_7, %c0_8] : memref<8x128xf32, #tpu.memory_space<vmem>>, vector<8x128xf32>
    tpu.vector_store %arg3[%c0_7, %c0_8], %7 {strides = array<i32>} : memref<8x128xf32, #tpu.memory_space<vmem>>, vector<8x128xf32>,
    return
  }
}

</mosaic_0001>

<llo_original>
// kernel: concatnet_forward.1
$region0: #{concatnet_forward.1}
  #allocation0 [shape = 'u32[]', space=smem, size = 0x4, offset = 0x4, fixed_abs, tag = 'smem constant byte address 0x4 - core index']
  #allocation1 [shape = 'u32[72,128]{1,0:T(1,128)}', space=vmem, size = 0x9000, scoped, tag = 'internal scratch']
  %s0 = inlined_call_operand.vmem [shape: bf16[8,2176], index: 0, kind: input, shape index: {}]
  %s1 = inlined_call_operand.hbm [shape: bf16[2176,640], index: 1, kind: input, shape index: {}]
  %s2 = inlined_call_operand.hbm [shape: bf16[640,128], index: 2, kind: input, shape index: {}]
  %s3 = inlined_call_operand.vmem [shape: f32[8,128], index: 3, kind: output, shape index: {}]
  %s4 = sld [smem:[#allocation0]]
  $region30: #{concatnet_forward.1} parent=0
    _
  %s6 = ssub.s32 1, %s4
  %s7 = scalar_select 0, %s6, %s4
  $region1: #{concatnet_forward.1} parent=0
    #allocation2 [shape = 'u8[2785280]{0}', space=vmem, size = 0x2a8000, scoped, tag = 'input window, operand 1, single buffered']
    #allocation3 [shape = 's32[1]{0}', space=sflag, size = 0x4, scoped, tag = 'scoped memory for concatnet_forward.1']
    #allocation4 [shape = 'u8[163840]{0}', space=vmem, size = 0x28000, scoped, tag = 'input window, operand 2, single buffered']
    #allocation5 [shape = 's32[1]{0}', space=sflag, size = 0x4, scoped, tag = 'scoped memory for concatnet_forward.1']
    %8 = vsyncpa [#allocation3], 0
    %9 = vsyncpa [#allocation5], 0
    // Predicated region
    $region2: #{concatnet_forward.1} parent=1 // pred_check
      _
    $region3: #{concatnet_forward.1} parent=1 // pred_check_branch
      %11 = sbr.rel (0) target = $region5
    $region4: #{concatnet_forward.1} parent=1 // pred_region
      _
    $region5: #{concatnet_forward.1} parent=1 // pred_fallthru
      _
    // Predicated region
    $region6: #{concatnet_forward.1} parent=1 // pred_check
      _
    $region7: #{concatnet_forward.1} parent=1 // pred_check_branch
      %13 = sbr.rel (0) target = $region9
    $region8: #{concatnet_forward.1} parent=1 // pred_region
      %15 = vsyncadd [#allocation3], 0
      %s16 = sshll.u32 %s1, 4
      %s17 = int_to_ptr.hbm [resolvable:$true] %s16
      %s18 = sshll.u32 [#allocation2], 4
      %s19 = int_to_ptr.vmem [resolvable:$true] %s18
      %24 = dma.hbm_to_vmem [thread:$0]  %s17, 87040, %s19, [#allocation3], 320, 320, 20
    $region9: #{concatnet_forward.1} parent=1 // pred_fallthru
      _
    // Predicated region
    $region10: #{concatnet_forward.1} parent=1 // pred_check
      _
    $region11: #{concatnet_forward.1} parent=1 // pred_check_branch
      %26 = sbr.rel (0) target = $region13
    $region12: #{concatnet_forward.1} parent=1 // pred_region
      %28 = vsyncadd [#allocation5], 0
      %s29 = sshll.u32 %s2, 4
      %s30 = int_to_ptr.hbm [resolvable:$true] %s29
      %s31 = sshll.u32 [#allocation4], 4
      %s32 = int_to_ptr.vmem [resolvable:$true] %s31
      %37 = dma.hbm_to_vmem [thread:$0]  %s30, 5120, %s32, [#allocation5], 64, 64, 4
    $region13: #{concatnet_forward.1} parent=1 // pred_fallthru
      _
    // Predicated region
    $region14: #{concatnet_forward.1} parent=1 // pred_check
      _
    $region15: #{concatnet_forward.1} parent=1 // pred_check_branch
      %39 = sbr.rel (0) target = $region17
    $region16: #{concatnet_forward.1} parent=1 // pred_region
      %41 = dma.done [#allocation3], 87040
    $region17: #{concatnet_forward.1} parent=1 // pred_fallthru
      _
    // Predicated region
    $region18: #{concatnet_forward.1} parent=1 // pred_check
      _
    $region19: #{concatnet_forward.1} parent=1 // pred_check_branch
      %43 = sbr.rel (0) target = $region21
    $region20: #{concatnet_forward.1} parent=1 // pred_region
      %45 = dma.done [#allocation5], 5120
    $region21: #{concatnet_forward.1} parent=1 // pred_fallthru
      _
    %v46 = vld [vmem:[%s0] sm:$0xff]
    %v47 = vld [vmem:[%s0 + $0x8] sm:$0xff]
    %v48 = vld [vmem:[%s0 + $0x10] sm:$0xff]
    %v49 = vld [vmem:[%s0 + $0x18] sm:$0xff]
    %v50 = vld [vmem:[%s0 + $0x20] sm:$0xff]
    %v51 = vld [vmem:[%s0 + $0x28] sm:$0xff]
    %v52 = vld [vmem:[%s0 + $0x30] sm:$0xff]
    %v53 = vld [vmem:[%s0 + $0x38] sm:$0xff]
    %v54 = vld [vmem:[%s0 + $0x40] sm:$0xf]
    %v55 = vld [vmem:[#allocation2] sm:$0xff]
    %v56 = vld [vmem:[#allocation2 + $0x8] sm:$0xff]
    %v57 = vld [vmem:[#allocation2 + $0x10] sm:$0xf]
    %v58 = vld [vmem:[#allocation2 + $0x14] sm:$0xff]
    %v59 = vld [vmem:[#allocation2 + $0x1c] sm:$0xff]
    %v60 = vld [vmem:[#allocation2 + $0x24] sm:$0xf]
    %v61 = vld [vmem:[#allocation2 + $0x28] sm:$0xff]
    %v62 = vld [vmem:[#allocation2 + $0x30] sm:$0xff]
    %v63 = vld [vmem:[#allocation2 + $0x38] sm:$0xf]
    %v64 = vld [vmem:[#allocation2 + $0x3c] sm:$0xff]
    %v65 = vld [vmem:[#allocation2 + $0x44] sm:$0xff]
    %v66 = vld [vmem:[#allocation2 + $0x4c] sm:$0xf]
    %v67 = vld [vmem:[#allocation2 + $0x50] sm:$0xff]
    %v68 = vld [vmem:[#allocation2 + $0x58] sm:$0xff]
    %v69 = vld [vmem:[#allocation2 + $0x60] sm:$0xf]
    %v70 = vld [vmem:[#allocation2 + $0x64] sm:$0xff]
    %v71 = vld [vmem:[#allocation2 + $0x6c] sm:$0xff]
    %v72 = vld [vmem:[#allocation2 + $0x74] sm:$0xf]
    %v73 = vld [vmem:[#allocation2 + $0x78] sm:$0xff]
    %v74 = vld [vmem:[#allocation2 + $0x80] sm:$0xff]
    %v75 = vld [vmem:[#allocation2 + $0x88] sm:$0xf]
    %v76 = vld [vmem:[#allocation2 + $0x8c] sm:$0xff]
    %v77 = vld [vmem:[#allocation2 + $0x94] sm:$0xff]
    %v78 = vld [vmem:[#allocation2 + $0x9c] sm:$0xf]
    %v79 = vld [vmem:[#allocation2 + $0xa0] sm:$0xff]
    %v80 = vld [vmem:[#allocation2 + $0xa8] sm:$0xff]
    %v81 = vld [vmem:[#allocation2 + $0xb0] sm:$0xf]
    %v82 = vld [vmem:[#allocation2 + $0xb4] sm:$0xff]
    %v83 = vld [vmem:[#allocation2 + $0xbc] sm:$0xff]
    %v84 = vld [vmem:[#allocation2 + $0xc4] sm:$0xf]
    %v85 = vld [vmem:[#allocation2 + $0xc8] sm:$0xff]
    %v86 = vld [vmem:[#allocation2 + $0xd0] sm:$0xff]
    %v87 = vld [vmem:[#allocation2 + $0xd8] sm:$0xf]
    %v88 = vld [vmem:[#allocation2 + $0xdc] sm:$0xff]
    %v89 = vld [vmem:[#allocation2 + $0xe4] sm:$0xff]
    %v90 = vld [vmem:[#allocation2 + $0xec] sm:$0xf]
    %v91 = vld [vmem:[#allocation2 + $0xf0] sm:$0xff]
    %v92 = vld [vmem:[#allocation2 + $0xf8] sm:$0xff]
    %v93 = vld [vmem:[#allocation2 + $0x100] sm:$0xf]
    %v94 = vld [vmem:[#allocation2 + $0x104] sm:$0xff]
    %v95 = vld [vmem:[#allocation2 + $0x10c] sm:$0xff]
    %v96 = vld [vmem:[#allocation2 + $0x114] sm:$0xf]
    %v97 = vld [vmem:[#allocation2 + $0x118] sm:$0xff]
    %v98 = vld [vmem:[#allocation2 + $0x120] sm:$0xff]
    %v99 = vld [vmem:[#allocation2 + $0x128] sm:$0xf]
    %v100 = vld [vmem:[#allocation2 + $0x12c] sm:$0xff]
    %v101 = vld [vmem:[#allocation2 + $0x134] sm:$0xff]
    %v102 = vld [vmem:[#allocation2 + $0x13c] sm:$0xf]
    %v103 = vld [vmem:[#allocation2 + $0x140] sm:$0xff]
    %v104 = vld [vmem:[#allocation2 + $0x148] sm:$0xff]
    %v105 = vld [vmem:[#allocation2 + $0x150] sm:$0xf]
    %v106 = vld [vmem:[#allocation2 + $0x154] sm:$0xff]
    %v107 = vld [vmem:[#allocation2 + $0x15c] sm:$0xff]
    %v108 = vld [vmem:[#allocation2 + $0x164] sm:$0xf]
    %v109 = vld [vmem:[#allocation2 + $0x168] sm:$0xff]
    %v110 = vld [vmem:[#allocation2 + $0x170] sm:$0xff]
    %v111 = vld [vmem:[#allocation2 + $0x178] sm:$0xf]
    %v112 = vld [vmem:[#allocation2 + $0x17c] sm:$0xff]
    %v113 = vld [vmem:[#allocation2 + $0x184] sm:$0xff]
    %v114 = vld [vmem:[#allocation2 + $0x18c] sm:$0xf]
    %v115 = vld [vmem:[#allocation2 + $0x190] sm:$0xff]
    %v116 = vld [vmem:[#allocation2 + $0x198] sm:$0xff]
    %v117 = vld [vmem:[#allocation2 + $0x1a0] sm:$0xf]
    %v118 = vld [vmem:[#allocation2 + $0x1a4] sm:$0xff]
    %v119 = vld [vmem:[#allocation2 + $0x1ac] sm:$0xff]
    %v120 = vld [vmem:[#allocation2 + $0x1b4] sm:$0xf]
    %v121 = vld [vmem:[#allocation2 + $0x1b8] sm:$0xff]
    %v122 = vld [vmem:[#allocation2 + $0x1c0] sm:$0xff]
    %v123 = vld [vmem:[#allocation2 + $0x1c8] sm:$0xf]
    %v124 = vld [vmem:[#allocation2 + $0x1cc] sm:$0xff]
    %v125 = vld [vmem:[#allocation2 + $0x1d4] sm:$0xff]
    %v126 = vld [vmem:[#allocation2 + $0x1dc] sm:$0xf]
    %v127 = vld [vmem:[#allocation2 + $0x1e0] sm:$0xff]
    %v128 = vld [vmem:[#allocation2 + $0x1e8] sm:$0xff]
    %v129 = vld [vmem:[#allocation2 + $0x1f0] sm:$0xf]
    %v130 = vld [vmem:[#allocation2 + $0x1f4] sm:$0xff]
    %v131 = vld [vmem:[#allocation2 + $0x1fc] sm:$0xff]
    %v132 = vld [vmem:[#allocation2 + $0x204] sm:$0xf]
    %v133 = vld [vmem:[#allocation2 + $0x208] sm:$0xff]
    %v134 = vld [vmem:[#allocation2 + $0x210] sm:$0xff]
    %v135 = vld [vmem:[#allocation2 + $0x218] sm:$0xf]
    %v136 = vld [vmem:[#allocation2 + $0x21c] sm:$0xff]
    %v137 = vld [vmem:[#allocation2 + $0x224] sm:$0xff]
    %v138 = vld [vmem:[#allocation2 + $0x22c] sm:$0xf]
    %v139 = vld [vmem:[#allocation2 + $0x230] sm:$0xff]
    %v140 = vld [vmem:[#allocation2 + $0x238] sm:$0xff]
    %v141 = vld [vmem:[#allocation2 + $0x240] sm:$0xf]
    %v142 = vld [vmem:[#allocation2 + $0x244] sm:$0xff]
    %v143 = vld [vmem:[#allocation2 + $0x24c] sm:$0xff]
    %v144 = vld [vmem:[#allocation2 + $0x254] sm:$0xf]
    %v145 = vld [vmem:[#allocation2 + $0x258] sm:$0xff]
    %v146 = vld [vmem:[#allocation2 + $0x260] sm:$0xff]
    %v147 = vld [vmem:[#allocation2 + $0x268] sm:$0xf]
    %v148 = vld [vmem:[#allocation2 + $0x26c] sm:$0xff]
    %v149 = vld [vmem:[#allocation2 + $0x274] sm:$0xff]
    %v150 = vld [vmem:[#allocation2 + $0x27c] sm:$0xf]
    %v151 = vld [vmem:[#allocation2 + $0x280] sm:$0xff]
    %v152 = vld [vmem:[#allocation2 + $0x288] sm:$0xff]
    %v153 = vld [vmem:[#allocation2 + $0x290] sm:$0xf]
    %v154 = vld [vmem:[#allocation2 + $0x294] sm:$0xff]
    %v155 = vld [vmem:[#allocation2 + $0x29c] sm:$0xff]
    %v156 = vld [vmem:[#allocation2 + $0x2a4] sm:$0xf]
    %v157 = vld [vmem:[#allocation2 + $0x2a8] sm:$0xff]
    %v158 = vld [vmem:[#allocation2 + $0x2b0] sm:$0xff]
    %v159 = vld [vmem:[#allocation2 + $0x2b8] sm:$0xf]
    %v160 = vld [vmem:[#allocation2 + $0x2bc] sm:$0xff]
    %v161 = vld [vmem:[#allocation2 + $0x2c4] sm:$0xff]
    %v162 = vld [vmem:[#allocation2 + $0x2cc] sm:$0xf]
    %v163 = vld [vmem:[#allocation2 + $0x2d0] sm:$0xff]
    %v164 = vld [vmem:[#allocation2 + $0x2d8] sm:$0xff]
    %v165 = vld [vmem:[#allocation2 + $0x2e0] sm:$0xf]
    %v166 = vld [vmem:[#allocation2 + $0x2e4] sm:$0xff]
    %v167 = vld [vmem:[#allocation2 + $0x2ec] sm:$0xff]
    %v168 = vld [vmem:[#allocation2 + $0x2f4] sm:$0xf]
    %v169 = vld [vmem:[#allocation2 + $0x2f8] sm:$0xff]
    %v170 = vld [vmem:[#allocation2 + $0x300] sm:$0xff]
    %v171 = vld [vmem:[#allocation2 + $0x308] sm:$0xf]
    %v172 = vld [vmem:[#allocation2 + $0x30c] sm:$0xff]
    %v173 = vld [vmem:[#allocation2 + $0x314] sm:$0xff]
    %v174 = vld [vmem:[#allocation2 + $0x31c] sm:$0xf]
    %v175 = vld [vmem:[#allocation2 + $0x320] sm:$0xff]
    %v176 = vld [vmem:[#allocation2 + $0x328] sm:$0xff]
    %v177 = vld [vmem:[#allocation2 + $0x330] sm:$0xf]
    %v178 = vld [vmem:[#allocation2 + $0x334] sm:$0xff]
    %v179 = vld [vmem:[#allocation2 + $0x33c] sm:$0xff]
    %v180 = vld [vmem:[#allocation2 + $0x344] sm:$0xf]
    %v181 = vld [vmem:[#allocation2 + $0x348] sm:$0xff]
    %v182 = vld [vmem:[#allocation2 + $0x350] sm:$0xff]
    %v183 = vld [vmem:[#allocation2 + $0x358] sm:$0xf]
    %v184 = vld [vmem:[#allocation2 + $0x35c] sm:$0xff]
    %v185 = vld [vmem:[#allocation2 + $0x364] sm:$0xff]
    %v186 = vld [vmem:[#allocation2 + $0x36c] sm:$0xf]
    %v187 = vld [vmem:[#allocation2 + $0x370] sm:$0xff]
    %v188 = vld [vmem:[#allocation2 + $0x378] sm:$0xff]
    %v189 = vld [vmem:[#allocation2 + $0x380] sm:$0xf]
    %v190 = vld [vmem:[#allocation2 + $0x384] sm:$0xff]
    %v191 = vld [vmem:[#allocation2 + $0x38c] sm:$0xff]
    %v192 = vld [vmem:[#allocation2 + $0x394] sm:$0xf]
    %v193 = vld [vmem:[#allocation2 + $0x398] sm:$0xff]
    %v194 = vld [vmem:[#allocation2 + $0x3a0] sm:$0xff]
    %v195 = vld [vmem:[#allocation2 + $0x3a8] sm:$0xf]
    %v196 = vld [vmem:[#allocation2 + $0x3ac] sm:$0xff]
    %v197 = vld [vmem:[#allocation2 + $0x3b4] sm:$0xff]
    %v198 = vld [vmem:[#allocation2 + $0x3bc] sm:$0xf]
    %v199 = vld [vmem:[#allocation2 + $0x3c0] sm:$0xff]
    %v200 = vld [vmem:[#allocation2 + $0x3c8] sm:$0xff]
    %v201 = vld [vmem:[#allocation2 + $0x3d0] sm:$0xf]
    %v202 = vld [vmem:[#allocation2 + $0x3d4] sm:$0xff]
    %v203 = vld [vmem:[#allocation2 + $0x3dc] sm:$0xff]
    %v204 = vld [vmem:[#allocation2 + $0x3e4] sm:$0xf]
    %v205 = vld [vmem:[#allocation2 + $0x3e8] sm:$0xff]
    %v206 = vld [vmem:[#allocation2 + $0x3f0] sm:$0xff]
    %v207 = vld [vmem:[#allocation2 + $0x3f8] sm:$0xf]
    %v208 = vld [vmem:[#allocation2 + $0x3fc] sm:$0xff]
    %v209 = vld [vmem:[#allocation2 + $0x404] sm:$0xff]
    %v210 = vld [vmem:[#allocation2 + $0x40c] sm:$0xf]
    %v211 = vld [vmem:[#allocation2 + $0x410] sm:$0xff]
    %v212 = vld [vmem:[#allocation2 + $0x418] sm:$0xff]
    %v213 = vld [vmem:[#allocation2 + $0x420] sm:$0xf]
    %v214 = vld [vmem:[#allocation2 + $0x424] sm:$0xff]
    %v215 = vld [vmem:[#allocation2 + $0x42c] sm:$0xff]
    %v216 = vld [vmem:[#allocation2 + $0x434] sm:$0xf]
    %v217 = vld [vmem:[#allocation2 + $0x438] sm:$0xff]
    %v218 = vld [vmem:[#allocation2 + $0x440] sm:$0xff]
    %v219 = vld [vmem:[#allocation2 + $0x448] sm:$0xf]
    %v220 = vld [vmem:[#allocation2 + $0x44c] sm:$0xff]
    %v221 = vld [vmem:[#allocation2 + $0x454] sm:$0xff]
    %v222 = vld [vmem:[#allocation2 + $0x45c] sm:$0xf]
    %v223 = vld [vmem:[#allocation2 + $0x460] sm:$0xff]
    %v224 = vld [vmem:[#allocation2 + $0x468] sm:$0xff]
    %v225 = vld [vmem:[#allocation2 + $0x470] sm:$0xf]
    %v226 = vld [vmem:[#allocation2 + $0x474] sm:$0xff]
    %v227 = vld [vmem:[#allocation2 + $0x47c] sm:$0xff]
    %v228 = vld [vmem:[#allocation2 + $0x484] sm:$0xf]
    %v229 = vld [vmem:[#allocation2 + $0x488] sm:$0xff]
    %v230 = vld [vmem:[#allocation2 + $0x490] sm:$0xff]
    %v231 = vld [vmem:[#allocation2 + $0x498] sm:$0xf]
    %v232 = vld [vmem:[#allocation2 + $0x49c] sm:$0xff]
    %v233 = vld [vmem:[#allocation2 + $0x4a4] sm:$0xff]
    %v234 = vld [vmem:[#allocation2 + $0x4ac] sm:$0xf]
    %v235 = vld [vmem:[#allocation2 + $0x4b0] sm:$0xff]
    %v236 = vld [vmem:[#allocation2 + $0x4b8] sm:$0xff]
    %v237 = vld [vmem:[#allocation2 + $0x4c0] sm:$0xf]
    %v238 = vld [vmem:[#allocation2 + $0x4c4] sm:$0xff]
    %v239 = vld [vmem:[#allocation2 + $0x4cc] sm:$0xff]
    %v240 = vld [vmem:[#allocation2 + $0x4d4] sm:$0xf]
    %v241 = vld [vmem:[#allocation2 + $0x4d8] sm:$0xff]
    %v242 = vld [vmem:[#allocation2 + $0x4e0] sm:$0xff]
    %v243 = vld [vmem:[#allocation2 + $0x4e8] sm:$0xf]
    %v244 = vld [vmem:[#allocation2 + $0x4ec] sm:$0xff]
    %v245 = vld [vmem:[#allocation2 + $0x4f4] sm:$0xff]
    %v246 = vld [vmem:[#allocation2 + $0x4fc] sm:$0xf]
    %v247 = vld [vmem:[#allocation2 + $0x500] sm:$0xff]
    %v248 = vld [vmem:[#allocation2 + $0x508] sm:$0xff]
    %v249 = vld [vmem:[#allocation2 + $0x510] sm:$0xf]
    %v250 = vld [vmem:[#allocation2 + $0x514] sm:$0xff]
    %v251 = vld [vmem:[#allocation2 + $0x51c] sm:$0xff]
    %v252 = vld [vmem:[#allocation2 + $0x524] sm:$0xf]
    %v253 = vld [vmem:[#allocation2 + $0x528] sm:$0xff]
    %v254 = vld [vmem:[#allocation2 + $0x530] sm:$0xff]
    %v255 = vld [vmem:[#allocation2 + $0x538] sm:$0xf]
    %v256 = vld [vmem:[#allocation2 + $0x53c] sm:$0xff]
    %v257 = vld [vmem:[#allocation2 + $0x544] sm:$0xff]
    %v258 = vld [vmem:[#allocation2 + $0x54c] sm:$0xf]
    %v259 = vld [vmem:[#allocation2 + $0x550] sm:$0xff]
    %v260 = vld [vmem:[#allocation2 + $0x558] sm:$0xff]
    %v261 = vld [vmem:[#allocation2 + $0x560] sm:$0xf]
    %v262 = vld [vmem:[#allocation2 + $0x564] sm:$0xff]
    %v263 = vld [vmem:[#allocation2 + $0x56c] sm:$0xff]
    %v264 = vld [vmem:[#allocation2 + $0x574] sm:$0xf]
    %v265 = vld [vmem:[#allocation2 + $0x578] sm:$0xff]
    %v266 = vld [vmem:[#allocation2 + $0x580] sm:$0xff]
    %v267 = vld [vmem:[#allocation2 + $0x588] sm:$0xf]
    %v268 = vld [vmem:[#allocation2 + $0x58c] sm:$0xff]
    %v269 = vld [vmem:[#allocation2 + $0x594] sm:$0xff]
    %v270 = vld [vmem:[#allocation2 + $0x59c] sm:$0xf]
    %v271 = vld [vmem:[#allocation2 + $0x5a0] sm:$0xff]
    %v272 = vld [vmem:[#allocation2 + $0x5a8] sm:$0xff]
    %v273 = vld [vmem:[#allocation2 + $0x5b0] sm:$0xf]
    %v274 = vld [vmem:[#allocation2 + $0x5b4] sm:$0xff]
    %v275 = vld [vmem:[#allocation2 + $0x5bc] sm:$0xff]
    %v276 = vld [vmem:[#allocation2 + $0x5c4] sm:$0xf]
    %v277 = vld [vmem:[#allocation2 + $0x5c8] sm:$0xff]
    %v278 = vld [vmem:[#allocation2 + $0x5d0] sm:$0xff]
    %v279 = vld [vmem:[#allocation2 + $0x5d8] sm:$0xf]
    %v280 = vld [vmem:[#allocation2 + $0x5dc] sm:$0xff]
    %v281 = vld [vmem:[#allocation2 + $0x5e4] sm:$0xff]
    %v282 = vld [vmem:[#allocation2 + $0x5ec] sm:$0xf]
    %v283 = vld [vmem:[#allocation2 + $0x5f0] sm:$0xff]
    %v284 = vld [vmem:[#allocation2 + $0x5f8] sm:$0xff]
    %v285 = vld [vmem:[#allocation2 + $0x600] sm:$0xf]
    %v286 = vld [vmem:[#allocation2 + $0x604] sm:$0xff]
    %v287 = vld [vmem:[#allocation2 + $0x60c] sm:$0xff]
    %v288 = vld [vmem:[#allocation2 + $0x614] sm:$0xf]
    %v289 = vld [vmem:[#allocation2 + $0x618] sm:$0xff]
    %v290 = vld [vmem:[#allocation2 + $0x620] sm:$0xff]
    %v291 = vld [vmem:[#allocation2 + $0x628] sm:$0xf]
    %v292 = vld [vmem:[#allocation2 + $0x62c] sm:$0xff]
    %v293 = vld [vmem:[#allocation2 + $0x634] sm:$0xff]
    %v294 = vld [vmem:[#allocation2 + $0x63c] sm:$0xf]
    %v295 = vld [vmem:[#allocation2 + $0x640] sm:$0xff]
    %v296 = vld [vmem:[#allocation2 + $0x648] sm:$0xff]
    %v297 = vld [vmem:[#allocation2 + $0x650] sm:$0xf]
    %v298 = vld [vmem:[#allocation2 + $0x654] sm:$0xff]
    %v299 = vld [vmem:[#allocation2 + $0x65c] sm:$0xff]
    %v300 = vld [vmem:[#allocation2 + $0x664] sm:$0xf]
    %v301 = vld [vmem:[#allocation2 + $0x668] sm:$0xff]
    %v302 = vld [vmem:[#allocation2 + $0x670] sm:$0xff]
    %v303 = vld [vmem:[#allocation2 + $0x678] sm:$0xf]
    %v304 = vld [vmem:[#allocation2 + $0x67c] sm:$0xff]
    %v305 = vld [vmem:[#allocation2 + $0x684] sm:$0xff]
    %v306 = vld [vmem:[#allocation2 + $0x68c] sm:$0xf]
    %v307 = vld [vmem:[#allocation2 + $0x690] sm:$0xff]
    %v308 = vld [vmem:[#allocation2 + $0x698] sm:$0xff]
    %v309 = vld [vmem:[#allocation2 + $0x6a0] sm:$0xf]
    %v310 = vld [vmem:[#allocation2 + $0x6a4] sm:$0xff]
    %v311 = vld [vmem:[#allocation2 + $0x6ac] sm:$0xff]
    %v312 = vld [vmem:[#allocation2 + $0x6b4] sm:$0xf]
    %v313 = vld [vmem:[#allocation2 + $0x6b8] sm:$0xff]
    %v314 = vld [vmem:[#allocation2 + $0x6c0] sm:$0xff]
    %v315 = vld [vmem:[#allocation2 + $0x6c8] sm:$0xf]
    %v316 = vld [vmem:[#allocation2 + $0x6cc] sm:$0xff]
    %v317 = vld [vmem:[#allocation2 + $0x6d4] sm:$0xff]
    %v318 = vld [vmem:[#allocation2 + $0x6dc] sm:$0xf]
    %v319 = vld [vmem:[#allocation2 + $0x6e0] sm:$0xff]
    %v320 = vld [vmem:[#allocation2 + $0x6e8] sm:$0xff]
    %v321 = vld [vmem:[#allocation2 + $0x6f0] sm:$0xf]
    %v322 = vld [vmem:[#allocation2 + $0x6f4] sm:$0xff]
    %v323 = vld [vmem:[#allocation2 + $0x6fc] sm:$0xff]
    %v324 = vld [vmem:[#allocation2 + $0x704] sm:$0xf]
    %v325 = vld [vmem:[#allocation2 + $0x708] sm:$0xff]
    %v326 = vld [vmem:[#allocation2 + $0x710] sm:$0xff]
    %v327 = vld [vmem:[#allocation2 + $0x718] sm:$0xf]
    %v328 = vld [vmem:[#allocation2 + $0x71c] sm:$0xff]
    %v329 = vld [vmem:[#allocation2 + $0x724] sm:$0xff]
    %v330 = vld [vmem:[#allocation2 + $0x72c] sm:$0xf]
    %v331 = vld [vmem:[#allocation2 + $0x730] sm:$0xff]
    %v332 = vld [vmem:[#allocation2 + $0x738] sm:$0xff]
    %v333 = vld [vmem:[#allocation2 + $0x740] sm:$0xf]
    %v334 = vld [vmem:[#allocation2 + $0x744] sm:$0xff]
    %v335 = vld [vmem:[#allocation2 + $0x74c] sm:$0xff]
    %v336 = vld [vmem:[#allocation2 + $0x754] sm:$0xf]
    %v337 = vld [vmem:[#allocation2 + $0x758] sm:$0xff]
    %v338 = vld [vmem:[#allocation2 + $0x760] sm:$0xff]
    %v339 = vld [vmem:[#allocation2 + $0x768] sm:$0xf]
    %v340 = vld [vmem:[#allocation2 + $0x76c] sm:$0xff]
    %v341 = vld [vmem:[#allocation2 + $0x774] sm:$0xff]
    %v342 = vld [vmem:[#allocation2 + $0x77c] sm:$0xf]
    %v343 = vld [vmem:[#allocation2 + $0x780] sm:$0xff]
    %v344 = vld [vmem:[#allocation2 + $0x788] sm:$0xff]
    %v345 = vld [vmem:[#allocation2 + $0x790] sm:$0xf]
    %v346 = vld [vmem:[#allocation2 + $0x794] sm:$0xff]
    %v347 = vld [vmem:[#allocation2 + $0x79c] sm:$0xff]
    %v348 = vld [vmem:[#allocation2 + $0x7a4] sm:$0xf]
    %v349 = vld [vmem:[#allocation2 + $0x7a8] sm:$0xff]
    %v350 = vld [vmem:[#allocation2 + $0x7b0] sm:$0xff]
    %v351 = vld [vmem:[#allocation2 + $0x7b8] sm:$0xf]
    %v352 = vld [vmem:[#allocation2 + $0x7bc] sm:$0xff]
    %v353 = vld [vmem:[#allocation2 + $0x7c4] sm:$0xff]
    %v354 = vld [vmem:[#allocation2 + $0x7cc] sm:$0xf]
    %v355 = vld [vmem:[#allocation2 + $0x7d0] sm:$0xff]
    %v356 = vld [vmem:[#allocation2 + $0x7d8] sm:$0xff]
    %v357 = vld [vmem:[#allocation2 + $0x7e0] sm:$0xf]
    %v358 = vld [vmem:[#allocation2 + $0x7e4] sm:$0xff]
    %v359 = vld [vmem:[#allocation2 + $0x7ec] sm:$0xff]
    %v360 = vld [vmem:[#allocation2 + $0x7f4] sm:$0xf]
    %v361 = vld [vmem:[#allocation2 + $0x7f8] sm:$0xff]
    %v362 = vld [vmem:[#allocation2 + $0x800] sm:$0xff]
    %v363 = vld [vmem:[#allocation2 + $0x808] sm:$0xf]
    %v364 = vld [vmem:[#allocation2 + $0x80c] sm:$0xff]
    %v365 = vld [vmem:[#allocation2 + $0x814] sm:$0xff]
    %v366 = vld [vmem:[#allocation2 + $0x81c] sm:$0xf]
    %v367 = vld [vmem:[#allocation2 + $0x820] sm:$0xff]
    %v368 = vld [vmem:[#allocation2 + $0x828] sm:$0xff]
    %v369 = vld [vmem:[#allocation2 + $0x830] sm:$0xf]
    %v370 = vld [vmem:[#allocation2 + $0x834] sm:$0xff]
    %v371 = vld [vmem:[#allocation2 + $0x83c] sm:$0xff]
    %v372 = vld [vmem:[#allocation2 + $0x844] sm:$0xf]
    %v373 = vld [vmem:[#allocation2 + $0x848] sm:$0xff]
    %v374 = vld [vmem:[#allocation2 + $0x850] sm:$0xff]
    %v375 = vld [vmem:[#allocation2 + $0x858] sm:$0xf]
    %v376 = vld [vmem:[#allocation2 + $0x85c] sm:$0xff]
    %v377 = vld [vmem:[#allocation2 + $0x864] sm:$0xff]
    %v378 = vld [vmem:[#allocation2 + $0x86c] sm:$0xf]
    %v379 = vld [vmem:[#allocation2 + $0x870] sm:$0xff]
    %v380 = vld [vmem:[#allocation2 + $0x878] sm:$0xff]
    %v381 = vld [vmem:[#allocation2 + $0x880] sm:$0xf]
    %v382 = vld [vmem:[#allocation2 + $0x884] sm:$0xff]
    %v383 = vld [vmem:[#allocation2 + $0x88c] sm:$0xff]
    %v384 = vld [vmem:[#allocation2 + $0x894] sm:$0xf]
    %v385 = vld [vmem:[#allocation2 + $0x898] sm:$0xff]
    %v386 = vld [vmem:[#allocation2 + $0x8a0] sm:$0xff]
    %v387 = vld [vmem:[#allocation2 + $0x8a8] sm:$0xf]
    %v388 = vld [vmem:[#allocation2 + $0x8ac] sm:$0xff]
    %v389 = vld [vmem:[#allocation2 + $0x8b4] sm:$0xff]
    %v390 = vld [vmem:[#allocation2 + $0x8bc] sm:$0xf]
    %v391 = vld [vmem:[#allocation2 + $0x8c0] sm:$0xff]
    %v392 = vld [vmem:[#allocation2 + $0x8c8] sm:$0xff]
    %v393 = vld [vmem:[#allocation2 + $0x8d0] sm:$0xf]
    %v394 = vld [vmem:[#allocation2 + $0x8d4] sm:$0xff]
    %v395 = vld [vmem:[#allocation2 + $0x8dc] sm:$0xff]
    %v396 = vld [vmem:[#allocation2 + $0x8e4] sm:$0xf]
    %v397 = vld [vmem:[#allocation2 + $0x8e8] sm:$0xff]
    %v398 = vld [vmem:[#allocation2 + $0x8f0] sm:$0xff]
    %v399 = vld [vmem:[#allocation2 + $0x8f8] sm:$0xf]
    %v400 = vld [vmem:[#allocation2 + $0x8fc] sm:$0xff]
    %v401 = vld [vmem:[#allocation2 + $0x904] sm:$0xff]
    %v402 = vld [vmem:[#allocation2 + $0x90c] sm:$0xf]
    %v403 = vld [vmem:[#allocation2 + $0x910] sm:$0xff]
    %v404 = vld [vmem:[#allocation2 + $0x918] sm:$0xff]
    %v405 = vld [vmem:[#allocation2 + $0x920] sm:$0xf]
    %v406 = vld [vmem:[#allocation2 + $0x924] sm:$0xff]
    %v407 = vld [vmem:[#allocation2 + $0x92c] sm:$0xff]
    %v408 = vld [vmem:[#allocation2 + $0x934] sm:$0xf]
    %v409 = vld [vmem:[#allocation2 + $0x938] sm:$0xff]
    %v410 = vld [vmem:[#allocation2 + $0x940] sm:$0xff]
    %v411 = vld [vmem:[#allocation2 + $0x948] sm:$0xf]
    %v412 = vld [vmem:[#allocation2 + $0x94c] sm:$0xff]
    %v413 = vld [vmem:[#allocation2 + $0x954] sm:$0xff]
    %v414 = vld [vmem:[#allocation2 + $0x95c] sm:$0xf]
    %v415 = vld [vmem:[#allocation2 + $0x960] sm:$0xff]
    %v416 = vld [vmem:[#allocation2 + $0x968] sm:$0xff]
    %v417 = vld [vmem:[#allocation2 + $0x970] sm:$0xf]
    %v418 = vld [vmem:[#allocation2 + $0x974] sm:$0xff]
    %v419 = vld [vmem:[#allocation2 + $0x97c] sm:$0xff]
    %v420 = vld [vmem:[#allocation2 + $0x984] sm:$0xf]
    %v421 = vld [vmem:[#allocation2 + $0x988] sm:$0xff]
    %v422 = vld [vmem:[#allocation2 + $0x990] sm:$0xff]
    %v423 = vld [vmem:[#allocation2 + $0x998] sm:$0xf]
    %v424 = vld [vmem:[#allocation2 + $0x99c] sm:$0xff]
    %v425 = vld [vmem:[#allocation2 + $0x9a4] sm:$0xff]
    %v426 = vld [vmem:[#allocation2 + $0x9ac] sm:$0xf]
    %v427 = vld [vmem:[#allocation2 + $0x9b0] sm:$0xff]
    %v428 = vld [vmem:[#allocation2 + $0x9b8] sm:$0xff]
    %v429 = vld [vmem:[#allocation2 + $0x9c0] sm:$0xf]
    %v430 = vld [vmem:[#allocation2 + $0x9c4] sm:$0xff]
    %v431 = vld [vmem:[#allocation2 + $0x9cc] sm:$0xff]
    %v432 = vld [vmem:[#allocation2 + $0x9d4] sm:$0xf]
    %v433 = vld [vmem:[#allocation2 + $0x9d8] sm:$0xff]
    %v434 = vld [vmem:[#allocation2 + $0x9e0] sm:$0xff]
    %v435 = vld [vmem:[#allocation2 + $0x9e8] sm:$0xf]
    %v436 = vld [vmem:[#allocation2 + $0x9ec] sm:$0xff]
    %v437 = vld [vmem:[#allocation2 + $0x9f4] sm:$0xff]
    %v438 = vld [vmem:[#allocation2 + $0x9fc] sm:$0xf]
    %v439 = vld [vmem:[#allocation2 + $0xa00] sm:$0xff]
    %v440 = vld [vmem:[#allocation2 + $0xa08] sm:$0xff]
    %v441 = vld [vmem:[#allocation2 + $0xa10] sm:$0xf]
    %v442 = vld [vmem:[#allocation2 + $0xa14] sm:$0xff]
    %v443 = vld [vmem:[#allocation2 + $0xa1c] sm:$0xff]
    %v444 = vld [vmem:[#allocation2 + $0xa24] sm:$0xf]
    %v445 = vld [vmem:[#allocation2 + $0xa28] sm:$0xff]
    %v446 = vld [vmem:[#allocation2 + $0xa30] sm:$0xff]
    %v447 = vld [vmem:[#allocation2 + $0xa38] sm:$0xf]
    %v448 = vld [vmem:[#allocation2 + $0xa3c] sm:$0xff]
    %v449 = vld [vmem:[#allocation2 + $0xa44] sm:$0xff]
    %v450 = vld [vmem:[#allocation2 + $0xa4c] sm:$0xf]
    %v451 = vld [vmem:[#allocation2 + $0xa50] sm:$0xff]
    %v452 = vld [vmem:[#allocation2 + $0xa58] sm:$0xff]
    %v453 = vld [vmem:[#allocation2 + $0xa60] sm:$0xf]
    %v454 = vld [vmem:[#allocation2 + $0xa64] sm:$0xff]
    %v455 = vld [vmem:[#allocation2 + $0xa6c] sm:$0xff]
    %v456 = vld [vmem:[#allocation2 + $0xa74] sm:$0xf]
    %v457 = vld [vmem:[#allocation2 + $0xa78] sm:$0xff]
    %v458 = vld [vmem:[#allocation2 + $0xa80] sm:$0xff]
    %v459 = vld [vmem:[#allocation2 + $0xa88] sm:$0xf]
    %v460 = vld [vmem:[#allocation2 + $0xa8c] sm:$0xff]
    %v461 = vld [vmem:[#allocation2 + $0xa94] sm:$0xff]
    %v462 = vld [vmem:[#allocation2 + $0xa9c] sm:$0xf]
    %v463 = vld [vmem:[#allocation2 + $0xaa0] sm:$0xff]
    %v464 = vld [vmem:[#allocation2 + $0xaa8] sm:$0xff]
    %v465 = vld [vmem:[#allocation2 + $0xab0] sm:$0xf]
    %v466 = vld [vmem:[#allocation2 + $0xab4] sm:$0xff]
    %v467 = vld [vmem:[#allocation2 + $0xabc] sm:$0xff]
    %v468 = vld [vmem:[#allocation2 + $0xac4] sm:$0xf]
    %v469 = vld [vmem:[#allocation2 + $0xac8] sm:$0xff]
    %v470 = vld [vmem:[#allocation2 + $0xad0] sm:$0xff]
    %v471 = vld [vmem:[#allocation2 + $0xad8] sm:$0xf]
    %v472 = vld [vmem:[#allocation2 + $0xadc] sm:$0xff]
    %v473 = vld [vmem:[#allocation2 + $0xae4] sm:$0xff]
    %v474 = vld [vmem:[#allocation2 + $0xaec] sm:$0xf]
    %v475 = vld [vmem:[#allocation2 + $0xaf0] sm:$0xff]
    %v476 = vld [vmem:[#allocation2 + $0xaf8] sm:$0xff]
    %v477 = vld [vmem:[#allocation2 + $0xb00] sm:$0xf]
    %v478 = vld [vmem:[#allocation2 + $0xb04] sm:$0xff]
    %v479 = vld [vmem:[#allocation2 + $0xb0c] sm:$0xff]
    %v480 = vld [vmem:[#allocation2 + $0xb14] sm:$0xf]
    %v481 = vld [vmem:[#allocation2 + $0xb18] sm:$0xff]
    %v482 = vld [vmem:[#allocation2 + $0xb20] sm:$0xff]
    %v483 = vld [vmem:[#allocation2 + $0xb28] sm:$0xf]
    %v484 = vld [vmem:[#allocation2 + $0xb2c] sm:$0xff]
    %v485 = vld [vmem:[#allocation2 + $0xb34] sm:$0xff]
    %v486 = vld [vmem:[#allocation2 + $0xb3c] sm:$0xf]
    %v487 = vld [vmem:[#allocation2 + $0xb40] sm:$0xff]
    %v488 = vld [vmem:[#allocation2 + $0xb48] sm:$0xff]
    %v489 = vld [vmem:[#allocation2 + $0xb50] sm:$0xf]
    %v490 = vld [vmem:[#allocation2 + $0xb54] sm:$0xff]
    %v491 = vld [vmem:[#allocation2 + $0xb5c] sm:$0xff]
    %v492 = vld [vmem:[#allocation2 + $0xb64] sm:$0xf]
    %v493 = vld [vmem:[#allocation2 + $0xb68] sm:$0xff]
    %v494 = vld [vmem:[#allocation2 + $0xb70] sm:$0xff]
    %v495 = vld [vmem:[#allocation2 + $0xb78] sm:$0xf]
    %v496 = vld [vmem:[#allocation2 + $0xb7c] sm:$0xff]
    %v497 = vld [vmem:[#allocation2 + $0xb84] sm:$0xff]
    %v498 = vld [vmem:[#allocation2 + $0xb8c] sm:$0xf]
    %v499 = vld [vmem:[#allocation2 + $0xb90] sm:$0xff]
    %v500 = vld [vmem:[#allocation2 + $0xb98] sm:$0xff]
    %v501 = vld [vmem:[#allocation2 + $0xba0] sm:$0xf]
    %v502 = vld [vmem:[#allocation2 + $0xba4] sm:$0xff]
    %v503 = vld [vmem:[#allocation2 + $0xbac] sm:$0xff]
    %v504 = vld [vmem:[#allocation2 + $0xbb4] sm:$0xf]
    %v505 = vld [vmem:[#allocation2 + $0xbb8] sm:$0xff]
    %v506 = vld [vmem:[#allocation2 + $0xbc0] sm:$0xff]
    %v507 = vld [vmem:[#allocation2 + $0xbc8] sm:$0xf]
    %v508 = vld [vmem:[#allocation2 + $0xbcc] sm:$0xff]
    %v509 = vld [vmem:[#allocation2 + $0xbd4] sm:$0xff]
    %v510 = vld [vmem:[#allocation2 + $0xbdc] sm:$0xf]
    %v511 = vld [vmem:[#allocation2 + $0xbe0] sm:$0xff]
    %v512 = vld [vmem:[#allocation2 + $0xbe8] sm:$0xff]
    %v513 = vld [vmem:[#allocation2 + $0xbf0] sm:$0xf]
    %v514 = vld [vmem:[#allocation2 + $0xbf4] sm:$0xff]
    %v515 = vld [vmem:[#allocation2 + $0xbfc] sm:$0xff]
    %v516 = vld [vmem:[#allocation2 + $0xc04] sm:$0xf]
    %v517 = vld [vmem:[#allocation2 + $0xc08] sm:$0xff]
    %v518 = vld [vmem:[#allocation2 + $0xc10] sm:$0xff]
    %v519 = vld [vmem:[#allocation2 + $0xc18] sm:$0xf]
    %v520 = vld [vmem:[#allocation2 + $0xc1c] sm:$0xff]
    %v521 = vld [vmem:[#allocation2 + $0xc24] sm:$0xff]
    %v522 = vld [vmem:[#allocation2 + $0xc2c] sm:$0xf]
    %v523 = vld [vmem:[#allocation2 + $0xc30] sm:$0xff]
    %v524 = vld [vmem:[#allocation2 + $0xc38] sm:$0xff]
    %v525 = vld [vmem:[#allocation2 + $0xc40] sm:$0xf]
    %v526 = vld [vmem:[#allocation2 + $0xc44] sm:$0xff]
    %v527 = vld [vmem:[#allocation2 + $0xc4c] sm:$0xff]
    %v528 = vld [vmem:[#allocation2 + $0xc54] sm:$0xf]
    %v529 = vld [vmem:[#allocation2 + $0xc58] sm:$0xff]
    %v530 = vld [vmem:[#allocation2 + $0xc60] sm:$0xff]
    %v531 = vld [vmem:[#allocation2 + $0xc68] sm:$0xf]
    %v532 = vld [vmem:[#allocation2 + $0xc6c] sm:$0xff]
    %v533 = vld [vmem:[#allocation2 + $0xc74] sm:$0xff]
    %v534 = vld [vmem:[#allocation2 + $0xc7c] sm:$0xf]
    %v535 = vld [vmem:[#allocation2 + $0xc80] sm:$0xff]
    %v536 = vld [vmem:[#allocation2 + $0xc88] sm:$0xff]
    %v537 = vld [vmem:[#allocation2 + $0xc90] sm:$0xf]
    %v538 = vld [vmem:[#allocation2 + $0xc94] sm:$0xff]
    %v539 = vld [vmem:[#allocation2 + $0xc9c] sm:$0xff]
    %v540 = vld [vmem:[#allocation2 + $0xca4] sm:$0xf]
    %v541 = vld [vmem:[#allocation2 + $0xca8] sm:$0xff]
    %v542 = vld [vmem:[#allocation2 + $0xcb0] sm:$0xff]
    %v543 = vld [vmem:[#allocation2 + $0xcb8] sm:$0xf]
    %v544 = vld [vmem:[#allocation2 + $0xcbc] sm:$0xff]
    %v545 = vld [vmem:[#allocation2 + $0xcc4] sm:$0xff]
    %v546 = vld [vmem:[#allocation2 + $0xccc] sm:$0xf]
    %v547 = vld [vmem:[#allocation2 + $0xcd0] sm:$0xff]
    %v548 = vld [vmem:[#allocation2 + $0xcd8] sm:$0xff]
    %v549 = vld [vmem:[#allocation2 + $0xce0] sm:$0xf]
    %v550 = vld [vmem:[#allocation2 + $0xce4] sm:$0xff]
    %v551 = vld [vmem:[#allocation2 + $0xcec] sm:$0xff]
    %v552 = vld [vmem:[#allocation2 + $0xcf4] sm:$0xf]
    %v553 = vld [vmem:[#allocation2 + $0xcf8] sm:$0xff]
    %v554 = vld [vmem:[#allocation2 + $0xd00] sm:$0xff]
    %v555 = vld [vmem:[#allocation2 + $0xd08] sm:$0xf]
    %v556 = vld [vmem:[#allocation2 + $0xd0c] sm:$0xff]
    %v557 = vld [vmem:[#allocation2 + $0xd14] sm:$0xff]
    %v558 = vld [vmem:[#allocation2 + $0xd1c] sm:$0xf]
    %v559 = vld [vmem:[#allocation2 + $0xd20] sm:$0xff]
    %v560 = vld [vmem:[#allocation2 + $0xd28] sm:$0xff]
    %v561 = vld [vmem:[#allocation2 + $0xd30] sm:$0xf]
    %v562 = vld [vmem:[#allocation2 + $0xd34] sm:$0xff]
    %v563 = vld [vmem:[#allocation2 + $0xd3c] sm:$0xff]
    %v564 = vld [vmem:[#allocation2 + $0xd44] sm:$0xf]
    %v565 = vld [vmem:[#allocation2 + $0xd48] sm:$0xff]
    %v566 = vld [vmem:[#allocation2 + $0xd50] sm:$0xff]
    %v567 = vld [vmem:[#allocation2 + $0xd58] sm:$0xf]
    %v568 = vld [vmem:[#allocation2 + $0xd5c] sm:$0xff]
    %v569 = vld [vmem:[#allocation2 + $0xd64] sm:$0xff]
    %v570 = vld [vmem:[#allocation2 + $0xd6c] sm:$0xf]
    %v571 = vld [vmem:[#allocation2 + $0xd70] sm:$0xff]
    %v572 = vld [vmem:[#allocation2 + $0xd78] sm:$0xff]
    %v573 = vld [vmem:[#allocation2 + $0xd80] sm:$0xf]
    %v574 = vld [vmem:[#allocation2 + $0xd84] sm:$0xff]
    %v575 = vld [vmem:[#allocation2 + $0xd8c] sm:$0xff]
    %v576 = vld [vmem:[#allocation2 + $0xd94] sm:$0xf]
    %v577 = vld [vmem:[#allocation2 + $0xd98] sm:$0xff]
    %v578 = vld [vmem:[#allocation2 + $0xda0] sm:$0xff]
    %v579 = vld [vmem:[#allocation2 + $0xda8] sm:$0xf]
    %v580 = vld [vmem:[#allocation2 + $0xdac] sm:$0xff]
    %v581 = vld [vmem:[#allocation2 + $0xdb4] sm:$0xff]
    %v582 = vld [vmem:[#allocation2 + $0xdbc] sm:$0xf]
    %v583 = vld [vmem:[#allocation2 + $0xdc0] sm:$0xff]
    %v584 = vld [vmem:[#allocation2 + $0xdc8] sm:$0xff]
    %v585 = vld [vmem:[#allocation2 + $0xdd0] sm:$0xf]
    %v586 = vld [vmem:[#allocation2 + $0xdd4] sm:$0xff]
    %v587 = vld [vmem:[#allocation2 + $0xddc] sm:$0xff]
    %v588 = vld [vmem:[#allocation2 + $0xde4] sm:$0xf]
    %v589 = vld [vmem:[#allocation2 + $0xde8] sm:$0xff]
    %v590 = vld [vmem:[#allocation2 + $0xdf0] sm:$0xff]
    %v591 = vld [vmem:[#allocation2 + $0xdf8] sm:$0xf]
    %v592 = vld [vmem:[#allocation2 + $0xdfc] sm:$0xff]
    %v593 = vld [vmem:[#allocation2 + $0xe04] sm:$0xff]
    %v594 = vld [vmem:[#allocation2 + $0xe0c] sm:$0xf]
    %v595 = vld [vmem:[#allocation2 + $0xe10] sm:$0xff]
    %v596 = vld [vmem:[#allocation2 + $0xe18] sm:$0xff]
    %v597 = vld [vmem:[#allocation2 + $0xe20] sm:$0xf]
    %v598 = vld [vmem:[#allocation2 + $0xe24] sm:$0xff]
    %v599 = vld [vmem:[#allocation2 + $0xe2c] sm:$0xff]
    %v600 = vld [vmem:[#allocation2 + $0xe34] sm:$0xf]
    %v601 = vld [vmem:[#allocation2 + $0xe38] sm:$0xff]
    %v602 = vld [vmem:[#allocation2 + $0xe40] sm:$0xff]
    %v603 = vld [vmem:[#allocation2 + $0xe48] sm:$0xf]
    %v604 = vld [vmem:[#allocation2 + $0xe4c] sm:$0xff]
    %v605 = vld [vmem:[#allocation2 + $0xe54] sm:$0xff]
    %v606 = vld [vmem:[#allocation2 + $0xe5c] sm:$0xf]
    %v607 = vld [vmem:[#allocation2 + $0xe60] sm:$0xff]
    %v608 = vld [vmem:[#allocation2 + $0xe68] sm:$0xff]
    %v609 = vld [vmem:[#allocation2 + $0xe70] sm:$0xf]
    %v610 = vld [vmem:[#allocation2 + $0xe74] sm:$0xff]
    %v611 = vld [vmem:[#allocation2 + $0xe7c] sm:$0xff]
    %v612 = vld [vmem:[#allocation2 + $0xe84] sm:$0xf]
    %v613 = vld [vmem:[#allocation2 + $0xe88] sm:$0xff]
    %v614 = vld [vmem:[#allocation2 + $0xe90] sm:$0xff]
    %v615 = vld [vmem:[#allocation2 + $0xe98] sm:$0xf]
    %v616 = vld [vmem:[#allocation2 + $0xe9c] sm:$0xff]
    %v617 = vld [vmem:[#allocation2 + $0xea4] sm:$0xff]
    %v618 = vld [vmem:[#allocation2 + $0xeac] sm:$0xf]
    %v619 = vld [vmem:[#allocation2 + $0xeb0] sm:$0xff]
    %v620 = vld [vmem:[#allocation2 + $0xeb8] sm:$0xff]
    %v621 = vld [vmem:[#allocation2 + $0xec0] sm:$0xf]
    %v622 = vld [vmem:[#allocation2 + $0xec4] sm:$0xff]
    %v623 = vld [vmem:[#allocation2 + $0xecc] sm:$0xff]
    %v624 = vld [vmem:[#allocation2 + $0xed4] sm:$0xf]
    %v625 = vld [vmem:[#allocation2 + $0xed8] sm:$0xff]
    %v626 = vld [vmem:[#allocation2 + $0xee0] sm:$0xff]
    %v627 = vld [vmem:[#allocation2 + $0xee8] sm:$0xf]
    %v628 = vld [vmem:[#allocation2 + $0xeec] sm:$0xff]
    %v629 = vld [vmem:[#allocation2 + $0xef4] sm:$0xff]
    %v630 = vld [vmem:[#allocation2 + $0xefc] sm:$0xf]
    %v631 = vld [vmem:[#allocation2 + $0xf00] sm:$0xff]
    %v632 = vld [vmem:[#allocation2 + $0xf08] sm:$0xff]
    %v633 = vld [vmem:[#allocation2 + $0xf10] sm:$0xf]
    %v634 = vld [vmem:[#allocation2 + $0xf14] sm:$0xff]
    %v635 = vld [vmem:[#allocation2 + $0xf1c] sm:$0xff]
    %v636 = vld [vmem:[#allocation2 + $0xf24] sm:$0xf]
    %v637 = vld [vmem:[#allocation2 + $0xf28] sm:$0xff]
    %v638 = vld [vmem:[#allocation2 + $0xf30] sm:$0xff]
    %v639 = vld [vmem:[#allocation2 + $0xf38] sm:$0xf]
    %v640 = vld [vmem:[#allocation2 + $0xf3c] sm:$0xff]
    %v641 = vld [vmem:[#allocation2 + $0xf44] sm:$0xff]
    %v642 = vld [vmem:[#allocation2 + $0xf4c] sm:$0xf]
    %v643 = vld [vmem:[#allocation2 + $0xf50] sm:$0xff]
    %v644 = vld [vmem:[#allocation2 + $0xf58] sm:$0xff]
    %v645 = vld [vmem:[#allocation2 + $0xf60] sm:$0xf]
    %v646 = vld [vmem:[#allocation2 + $0xf64] sm:$0xff]
    %v647 = vld [vmem:[#allocation2 + $0xf6c] sm:$0xff]
    %v648 = vld [vmem:[#allocation2 + $0xf74] sm:$0xf]
    %v649 = vld [vmem:[#allocation2 + $0xf78] sm:$0xff]
    %v650 = vld [vmem:[#allocation2 + $0xf80] sm:$0xff]
    %v651 = vld [vmem:[#allocation2 + $0xf88] sm:$0xf]
    %v652 = vld [vmem:[#allocation2 + $0xf8c] sm:$0xff]
    %v653 = vld [vmem:[#allocation2 + $0xf94] sm:$0xff]
    %v654 = vld [vmem:[#allocation2 + $0xf9c] sm:$0xf]
    %v655 = vld [vmem:[#allocation2 + $0xfa0] sm:$0xff]
    %v656 = vld [vmem:[#allocation2 + $0xfa8] sm:$0xff]
    %v657 = vld [vmem:[#allocation2 + $0xfb0] sm:$0xf]
    %v658 = vld [vmem:[#allocation2 + $0xfb4] sm:$0xff]
    %v659 = vld [vmem:[#allocation2 + $0xfbc] sm:$0xff]
    %v660 = vld [vmem:[#allocation2 + $0xfc4] sm:$0xf]
    %v661 = vld [vmem:[#allocation2 + $0xfc8] sm:$0xff]
    %v662 = vld [vmem:[#allocation2 + $0xfd0] sm:$0xff]
    %v663 = vld [vmem:[#allocation2 + $0xfd8] sm:$0xf]
    %v664 = vld [vmem:[#allocation2 + $0xfdc] sm:$0xff]
    %v665 = vld [vmem:[#allocation2 + $0xfe4] sm:$0xff]
    %v666 = vld [vmem:[#allocation2 + $0xfec] sm:$0xf]
    %v667 = vld [vmem:[#allocation2 + $0xff0] sm:$0xff]
    %v668 = vld [vmem:[#allocation2 + $0xff8] sm:$0xff]
    %v669 = vld [vmem:[#allocation2 + $0x1000] sm:$0xf]
    %v670 = vld [vmem:[#allocation2 + $0x1004] sm:$0xff]
    %v671 = vld [vmem:[#allocation2 + $0x100c] sm:$0xff]
    %v672 = vld [vmem:[#allocation2 + $0x1014] sm:$0xf]
    %v673 = vld [vmem:[#allocation2 + $0x1018] sm:$0xff]
    %v674 = vld [vmem:[#allocation2 + $0x1020] sm:$0xff]
    %v675 = vld [vmem:[#allocation2 + $0x1028] sm:$0xf]
    %v676 = vld [vmem:[#allocation2 + $0x102c] sm:$0xff]
    %v677 = vld [vmem:[#allocation2 + $0x1034] sm:$0xff]
    %v678 = vld [vmem:[#allocation2 + $0x103c] sm:$0xf]
    %v679 = vld [vmem:[#allocation2 + $0x1040] sm:$0xff]
    %v680 = vld [vmem:[#allocation2 + $0x1048] sm:$0xff]
    %v681 = vld [vmem:[#allocation2 + $0x1050] sm:$0xf]
    %v682 = vld [vmem:[#allocation2 + $0x1054] sm:$0xff]
    %v683 = vld [vmem:[#allocation2 + $0x105c] sm:$0xff]
    %v684 = vld [vmem:[#allocation2 + $0x1064] sm:$0xf]
    %v685 = vld [vmem:[#allocation2 + $0x1068] sm:$0xff]
    %v686 = vld [vmem:[#allocation2 + $0x1070] sm:$0xff]
    %v687 = vld [vmem:[#allocation2 + $0x1078] sm:$0xf]
    %v688 = vld [vmem:[#allocation2 + $0x107c] sm:$0xff]
    %v689 = vld [vmem:[#allocation2 + $0x1084] sm:$0xff]
    %v690 = vld [vmem:[#allocation2 + $0x108c] sm:$0xf]
    %v691 = vld [vmem:[#allocation2 + $0x1090] sm:$0xff]
    %v692 = vld [vmem:[#allocation2 + $0x1098] sm:$0xff]
    %v693 = vld [vmem:[#allocation2 + $0x10a0] sm:$0xf]
    %v694 = vld [vmem:[#allocation2 + $0x10a4] sm:$0xff]
    %v695 = vld [vmem:[#allocation2 + $0x10ac] sm:$0xff]
    %v696 = vld [vmem:[#allocation2 + $0x10b4] sm:$0xf]
    %v697 = vld [vmem:[#allocation2 + $0x10b8] sm:$0xff]
    %v698 = vld [vmem:[#allocation2 + $0x10c0] sm:$0xff]
    %v699 = vld [vmem:[#allocation2 + $0x10c8] sm:$0xf]
    %v700 = vld [vmem:[#allocation2 + $0x10cc] sm:$0xff]
    %v701 = vld [vmem:[#allocation2 + $0x10d4] sm:$0xff]
    %v702 = vld [vmem:[#allocation2 + $0x10dc] sm:$0xf]
    %v703 = vld [vmem:[#allocation2 + $0x10e0] sm:$0xff]
    %v704 = vld [vmem:[#allocation2 + $0x10e8] sm:$0xff]
    %v705 = vld [vmem:[#allocation2 + $0x10f0] sm:$0xf]
    %v706 = vld [vmem:[#allocation2 + $0x10f4] sm:$0xff]
    %v707 = vld [vmem:[#allocation2 + $0x10fc] sm:$0xff]
    %v708 = vld [vmem:[#allocation2 + $0x1104] sm:$0xf]
    %v709 = vld [vmem:[#allocation2 + $0x1108] sm:$0xff]
    %v710 = vld [vmem:[#allocation2 + $0x1110] sm:$0xff]
    %v711 = vld [vmem:[#allocation2 + $0x1118] sm:$0xf]
    %v712 = vld [vmem:[#allocation2 + $0x111c] sm:$0xff]
    %v713 = vld [vmem:[#allocation2 + $0x1124] sm:$0xff]
    %v714 = vld [vmem:[#allocation2 + $0x112c] sm:$0xf]
    %v715 = vld [vmem:[#allocation2 + $0x1130] sm:$0xff]
    %v716 = vld [vmem:[#allocation2 + $0x1138] sm:$0xff]
    %v717 = vld [vmem:[#allocation2 + $0x1140] sm:$0xf]
    %v718 = vld [vmem:[#allocation2 + $0x1144] sm:$0xff]
    %v719 = vld [vmem:[#allocation2 + $0x114c] sm:$0xff]
    %v720 = vld [vmem:[#allocation2 + $0x1154] sm:$0xf]
    %v721 = vld [vmem:[#allocation2 + $0x1158] sm:$0xff]
    %v722 = vld [vmem:[#allocation2 + $0x1160] sm:$0xff]
    %v723 = vld [vmem:[#allocation2 + $0x1168] sm:$0xf]
    %v724 = vld [vmem:[#allocation2 + $0x116c] sm:$0xff]
    %v725 = vld [vmem:[#allocation2 + $0x1174] sm:$0xff]
    %v726 = vld [vmem:[#allocation2 + $0x117c] sm:$0xf]
    %v727 = vld [vmem:[#allocation2 + $0x1180] sm:$0xff]
    %v728 = vld [vmem:[#allocation2 + $0x1188] sm:$0xff]
    %v729 = vld [vmem:[#allocation2 + $0x1190] sm:$0xf]
    %v730 = vld [vmem:[#allocation2 + $0x1194] sm:$0xff]
    %v731 = vld [vmem:[#allocation2 + $0x119c] sm:$0xff]
    %v732 = vld [vmem:[#allocation2 + $0x11a4] sm:$0xf]
    %v733 = vld [vmem:[#allocation2 + $0x11a8] sm:$0xff]
    %v734 = vld [vmem:[#allocation2 + $0x11b0] sm:$0xff]
    %v735 = vld [vmem:[#allocation2 + $0x11b8] sm:$0xf]
    %v736 = vld [vmem:[#allocation2 + $0x11bc] sm:$0xff]
    %v737 = vld [vmem:[#allocation2 + $0x11c4] sm:$0xff]
    %v738 = vld [vmem:[#allocation2 + $0x11cc] sm:$0xf]
    %v739 = vld [vmem:[#allocation2 + $0x11d0] sm:$0xff]
    %v740 = vld [vmem:[#allocation2 + $0x11d8] sm:$0xff]
    %v741 = vld [vmem:[#allocation2 + $0x11e0] sm:$0xf]
    %v742 = vld [vmem:[#allocation2 + $0x11e4] sm:$0xff]
    %v743 = vld [vmem:[#allocation2 + $0x11ec] sm:$0xff]
    %v744 = vld [vmem:[#allocation2 + $0x11f4] sm:$0xf]
    %v745 = vld [vmem:[#allocation2 + $0x11f8] sm:$0xff]
    %v746 = vld [vmem:[#allocation2 + $0x1200] sm:$0xff]
    %v747 = vld [vmem:[#allocation2 + $0x1208] sm:$0xf]
    %v748 = vld [vmem:[#allocation2 + $0x120c] sm:$0xff]
    %v749 = vld [vmem:[#allocation2 + $0x1214] sm:$0xff]
    %v750 = vld [vmem:[#allocation2 + $0x121c] sm:$0xf]
    %v751 = vld [vmem:[#allocation2 + $0x1220] sm:$0xff]
    %v752 = vld [vmem:[#allocation2 + $0x1228] sm:$0xff]
    %v753 = vld [vmem:[#allocation2 + $0x1230] sm:$0xf]
    %v754 = vld [vmem:[#allocation2 + $0x1234] sm:$0xff]
    %v755 = vld [vmem:[#allocation2 + $0x123c] sm:$0xff]
    %v756 = vld [vmem:[#allocation2 + $0x1244] sm:$0xf]
    %v757 = vld [vmem:[#allocation2 + $0x1248] sm:$0xff]
    %v758 = vld [vmem:[#allocation2 + $0x1250] sm:$0xff]
    %v759 = vld [vmem:[#allocation2 + $0x1258] sm:$0xf]
    %v760 = vld [vmem:[#allocation2 + $0x125c] sm:$0xff]
    %v761 = vld [vmem:[#allocation2 + $0x1264] sm:$0xff]
    %v762 = vld [vmem:[#allocation2 + $0x126c] sm:$0xf]
    %v763 = vld [vmem:[#allocation2 + $0x1270] sm:$0xff]
    %v764 = vld [vmem:[#allocation2 + $0x1278] sm:$0xff]
    %v765 = vld [vmem:[#allocation2 + $0x1280] sm:$0xf]
    %v766 = vld [vmem:[#allocation2 + $0x1284] sm:$0xff]
    %v767 = vld [vmem:[#allocation2 + $0x128c] sm:$0xff]
    %v768 = vld [vmem:[#allocation2 + $0x1294] sm:$0xf]
    %v769 = vld [vmem:[#allocation2 + $0x1298] sm:$0xff]
    %v770 = vld [vmem:[#allocation2 + $0x12a0] sm:$0xff]
    %v771 = vld [vmem:[#allocation2 + $0x12a8] sm:$0xf]
    %v772 = vld [vmem:[#allocation2 + $0x12ac] sm:$0xff]
    %v773 = vld [vmem:[#allocation2 + $0x12b4] sm:$0xff]
    %v774 = vld [vmem:[#allocation2 + $0x12bc] sm:$0xf]
    %v775 = vld [vmem:[#allocation2 + $0x12c0] sm:$0xff]
    %v776 = vld [vmem:[#allocation2 + $0x12c8] sm:$0xff]
    %v777 = vld [vmem:[#allocation2 + $0x12d0] sm:$0xf]
    %v778 = vld [vmem:[#allocation2 + $0x12d4] sm:$0xff]
    %v779 = vld [vmem:[#allocation2 + $0x12dc] sm:$0xff]
    %v780 = vld [vmem:[#allocation2 + $0x12e4] sm:$0xf]
    %v781 = vld [vmem:[#allocation2 + $0x12e8] sm:$0xff]
    %v782 = vld [vmem:[#allocation2 + $0x12f0] sm:$0xff]
    %v783 = vld [vmem:[#allocation2 + $0x12f8] sm:$0xf]
    %v784 = vld [vmem:[#allocation2 + $0x12fc] sm:$0xff]
    %v785 = vld [vmem:[#allocation2 + $0x1304] sm:$0xff]
    %v786 = vld [vmem:[#allocation2 + $0x130c] sm:$0xf]
    %v787 = vld [vmem:[#allocation2 + $0x1310] sm:$0xff]
    %v788 = vld [vmem:[#allocation2 + $0x1318] sm:$0xff]
    %v789 = vld [vmem:[#allocation2 + $0x1320] sm:$0xf]
    %v790 = vld [vmem:[#allocation2 + $0x1324] sm:$0xff]
    %v791 = vld [vmem:[#allocation2 + $0x132c] sm:$0xff]
    %v792 = vld [vmem:[#allocation2 + $0x1334] sm:$0xf]
    %v793 = vld [vmem:[#allocation2 + $0x1338] sm:$0xff]
    %v794 = vld [vmem:[#allocation2 + $0x1340] sm:$0xff]
    %v795 = vld [vmem:[#allocation2 + $0x1348] sm:$0xf]
    %v796 = vld [vmem:[#allocation2 + $0x134c] sm:$0xff]
    %v797 = vld [vmem:[#allocation2 + $0x1354] sm:$0xff]
    %v798 = vld [vmem:[#allocation2 + $0x135c] sm:$0xf]
    %v799 = vld [vmem:[#allocation2 + $0x1360] sm:$0xff]
    %v800 = vld [vmem:[#allocation2 + $0x1368] sm:$0xff]
    %v801 = vld [vmem:[#allocation2 + $0x1370] sm:$0xf]
    %v802 = vld [vmem:[#allocation2 + $0x1374] sm:$0xff]
    %v803 = vld [vmem:[#allocation2 + $0x137c] sm:$0xff]
    %v804 = vld [vmem:[#allocation2 + $0x1384] sm:$0xf]
    %v805 = vld [vmem:[#allocation2 + $0x1388] sm:$0xff]
    %v806 = vld [vmem:[#allocation2 + $0x1390] sm:$0xff]
    %v807 = vld [vmem:[#allocation2 + $0x1398] sm:$0xf]
    %v808 = vld [vmem:[#allocation2 + $0x139c] sm:$0xff]
    %v809 = vld [vmem:[#allocation2 + $0x13a4] sm:$0xff]
    %v810 = vld [vmem:[#allocation2 + $0x13ac] sm:$0xf]
    %v811 = vld [vmem:[#allocation2 + $0x13b0] sm:$0xff]
    %v812 = vld [vmem:[#allocation2 + $0x13b8] sm:$0xff]
    %v813 = vld [vmem:[#allocation2 + $0x13c0] sm:$0xf]
    %v814 = vld [vmem:[#allocation2 + $0x13c4] sm:$0xff]
    %v815 = vld [vmem:[#allocation2 + $0x13cc] sm:$0xff]
    %v816 = vld [vmem:[#allocation2 + $0x13d4] sm:$0xf]
    %v817 = vld [vmem:[#allocation2 + $0x13d8] sm:$0xff]
    %v818 = vld [vmem:[#allocation2 + $0x13e0] sm:$0xff]
    %v819 = vld [vmem:[#allocation2 + $0x13e8] sm:$0xf]
    %v820 = vld [vmem:[#allocation2 + $0x13ec] sm:$0xff]
    %v821 = vld [vmem:[#allocation2 + $0x13f4] sm:$0xff]
    %v822 = vld [vmem:[#allocation2 + $0x13fc] sm:$0xf]
    %v823 = vld [vmem:[#allocation2 + $0x1400] sm:$0xff]
    %v824 = vld [vmem:[#allocation2 + $0x1408] sm:$0xff]
    %v825 = vld [vmem:[#allocation2 + $0x1410] sm:$0xf]
    %v826 = vld [vmem:[#allocation2 + $0x1414] sm:$0xff]
    %v827 = vld [vmem:[#allocation2 + $0x141c] sm:$0xff]
    %v828 = vld [vmem:[#allocation2 + $0x1424] sm:$0xf]
    %v829 = vld [vmem:[#allocation2 + $0x1428] sm:$0xff]
    %v830 = vld [vmem:[#allocation2 + $0x1430] sm:$0xff]
    %v831 = vld [vmem:[#allocation2 + $0x1438] sm:$0xf]
    %v832 = vld [vmem:[#allocation2 + $0x143c] sm:$0xff]
    %v833 = vld [vmem:[#allocation2 + $0x1444] sm:$0xff]
    %v834 = vld [vmem:[#allocation2 + $0x144c] sm:$0xf]
    %v835 = vld [vmem:[#allocation2 + $0x1450] sm:$0xff]
    %v836 = vld [vmem:[#allocation2 + $0x1458] sm:$0xff]
    %v837 = vld [vmem:[#allocation2 + $0x1460] sm:$0xf]
    %v838 = vld [vmem:[#allocation2 + $0x1464] sm:$0xff]
    %v839 = vld [vmem:[#allocation2 + $0x146c] sm:$0xff]
    %v840 = vld [vmem:[#allocation2 + $0x1474] sm:$0xf]
    %v841 = vld [vmem:[#allocation2 + $0x1478] sm:$0xff]
    %v842 = vld [vmem:[#allocation2 + $0x1480] sm:$0xff]
    %v843 = vld [vmem:[#allocation2 + $0x1488] sm:$0xf]
    %v844 = vld [vmem:[#allocation2 + $0x148c] sm:$0xff]
    %v845 = vld [vmem:[#allocation2 + $0x1494] sm:$0xff]
    %v846 = vld [vmem:[#allocation2 + $0x149c] sm:$0xf]
    %v847 = vld [vmem:[#allocation2 + $0x14a0] sm:$0xff]
    %v848 = vld [vmem:[#allocation2 + $0x14a8] sm:$0xff]
    %v849 = vld [vmem:[#allocation2 + $0x14b0] sm:$0xf]
    %v850 = vld [vmem:[#allocation2 + $0x14b4] sm:$0xff]
    %v851 = vld [vmem:[#allocation2 + $0x14bc] sm:$0xff]
    %v852 = vld [vmem:[#allocation2 + $0x14c4] sm:$0xf]
    %v853 = vld [vmem:[#allocation2 + $0x14c8] sm:$0xff]
    %v854 = vld [vmem:[#allocation2 + $0x14d0] sm:$0xff]
    %v855 = vld [vmem:[#allocation2 + $0x14d8] sm:$0xf]
    %v856 = vld [vmem:[#allocation2 + $0x14dc] sm:$0xff]
    %v857 = vld [vmem:[#allocation2 + $0x14e4] sm:$0xff]
    %v858 = vld [vmem:[#allocation2 + $0x14ec] sm:$0xf]
    %v859 = vld [vmem:[#allocation2 + $0x14f0] sm:$0xff]
    %v860 = vld [vmem:[#allocation2 + $0x14f8] sm:$0xff]
    %v861 = vld [vmem:[#allocation2 + $0x1500] sm:$0xf]
    %v862 = vld [vmem:[#allocation2 + $0x1504] sm:$0xff]
    %v863 = vld [vmem:[#allocation2 + $0x150c] sm:$0xff]
    %v864 = vld [vmem:[#allocation2 + $0x1514] sm:$0xf]
    %v865 = vld [vmem:[#allocation2 + $0x1518] sm:$0xff]
    %v866 = vld [vmem:[#allocation2 + $0x1520] sm:$0xff]
    %v867 = vld [vmem:[#allocation2 + $0x1528] sm:$0xf]
    %v868 = vld [vmem:[#allocation2 + $0x152c] sm:$0xff]
    %v869 = vld [vmem:[#allocation2 + $0x1534] sm:$0xff]
    %v870 = vld [vmem:[#allocation2 + $0x153c] sm:$0xf]
    %v880 = vunpack.c.l.b16 %v46
    %v881 = vunpack.c.h.b16 %v46
    %v882 = vunpack.c.l.b16 %v47
    %v883 = vunpack.c.h.b16 %v47
    %v884 = vunpack.c.l.b16 %v48
    %v885 = vunpack.c.h.b16 %v48
    %v886 = vunpack.c.l.b16 %v49
    %v887 = vunpack.c.h.b16 %v49
    %v888 = vunpack.c.l.b16 %v50
    %v889 = vunpack.c.h.b16 %v50
    %v890 = vunpack.c.l.b16 %v51
    %v891 = vunpack.c.h.b16 %v51
    %v892 = vunpack.c.l.b16 %v52
    %v893 = vunpack.c.h.b16 %v52
    %v894 = vunpack.c.l.b16 %v53
    %v895 = vunpack.c.h.b16 %v53
    %v896 = vunpack.c.l.b16 %v54
    %v897 = vpack.c.b16 %v880, %v880
    %v898 = vpack.c.b16 %v881, %v881
    %v899 = vpack.c.b16 %v882, %v882
    %v900 = vpack.c.b16 %v883, %v883
    %v901 = vpack.c.b16 %v884, %v884
    %v902 = vpack.c.b16 %v885, %v885
    %v903 = vpack.c.b16 %v886, %v886
    %v904 = vpack.c.b16 %v887, %v887
    %v905 = vpack.c.b16 %v888, %v888
    %v906 = vpack.c.b16 %v889, %v889
    %v907 = vpack.c.b16 %v890, %v890
    %v908 = vpack.c.b16 %v891, %v891
    %v909 = vpack.c.b16 %v892, %v892
    %v910 = vpack.c.b16 %v893, %v893
    %v911 = vpack.c.b16 %v894, %v894
    %v912 = vpack.c.b16 %v895, %v895
    %v913 = vpack.c.b16 %v896, %v896
    %v1747 = vunpack.c.l.b16 %v55
    %v1748 = vunpack.c.h.b16 %v55
    %v1749 = vunpack.c.l.b16 %v56
    %v1750 = vunpack.c.h.b16 %v56
    %v1751 = vunpack.c.l.b16 %v57
    %v1752 = vunpack.c.l.b16 %v58
    %v1753 = vunpack.c.h.b16 %v58
    %v1754 = vunpack.c.l.b16 %v59
    %v1755 = vunpack.c.h.b16 %v59
    %v1756 = vunpack.c.l.b16 %v60
    %v1757 = vunpack.c.l.b16 %v61
    %v1758 = vunpack.c.h.b16 %v61
    %v1759 = vunpack.c.l.b16 %v62
    %v1760 = vunpack.c.h.b16 %v62
    %v1761 = vunpack.c.l.b16 %v63
    %v1762 = vunpack.c.l.b16 %v64
    %v1763 = vunpack.c.h.b16 %v64
    %v1764 = vunpack.c.l.b16 %v65
    %v1765 = vunpack.c.h.b16 %v65
    %v1766 = vunpack.c.l.b16 %v66
    %v1767 = vunpack.c.l.b16 %v67
    %v1768 = vunpack.c.h.b16 %v67
    %v1769 = vunpack.c.l.b16 %v68
    %v1770 = vunpack.c.h.b16 %v68
    %v1771 = vunpack.c.l.b16 %v69
    %v1772 = vunpack.c.l.b16 %v70
    %v1773 = vunpack.c.h.b16 %v70
    %v1774 = vunpack.c.l.b16 %v71
    %v1775 = vunpack.c.h.b16 %v71
    %v1776 = vunpack.c.l.b16 %v72
    %v1777 = vunpack.c.l.b16 %v73
    %v1778 = vunpack.c.h.b16 %v73
    %v1779 = vunpack.c.l.b16 %v74
    %v1780 = vunpack.c.h.b16 %v74
    %v1781 = vunpack.c.l.b16 %v75
    %v1782 = vunpack.c.l.b16 %v76
    %v1783 = vunpack.c.h.b16 %v76
    %v1784 = vunpack.c.l.b16 %v77
    %v1785 = vunpack.c.h.b16 %v77
    %v1786 = vunpack.c.l.b16 %v78
    %v1787 = vunpack.c.l.b16 %v79
    %v1788 = vunpack.c.h.b16 %v79
    %v1789 = vunpack.c.l.b16 %v80
    %v1790 = vunpack.c.h.b16 %v80
    %v1791 = vunpack.c.l.b16 %v81
    %v1792 = vunpack.c.l.b16 %v82
    %v1793 = vunpack.c.h.b16 %v82
    %v1794 = vunpack.c.l.b16 %v83
    %v1795 = vunpack.c.h.b16 %v83
    %v1796 = vunpack.c.l.b16 %v84
    %v1797 = vunpack.c.l.b16 %v85
    %v1798 = vunpack.c.h.b16 %v85
    %v1799 = vunpack.c.l.b16 %v86
    %v1800 = vunpack.c.h.b16 %v86
    %v1801 = vunpack.c.l.b16 %v87
    %v1802 = vunpack.c.l.b16 %v88
    %v1803 = vunpack.c.h.b16 %v88
    %v1804 = vunpack.c.l.b16 %v89
    %v1805 = vunpack.c.h.b16 %v89
    %v1806 = vunpack.c.l.b16 %v90
    %v1807 = vunpack.c.l.b16 %v91
    %v1808 = vunpack.c.h.b16 %v91
    %v1809 = vunpack.c.l.b16 %v92
    %v1810 = vunpack.c.h.b16 %v92
    %v1811 = vunpack.c.l.b16 %v93
    %v1812 = vunpack.c.l.b16 %v94
    %v1813 = vunpack.c.h.b16 %v94
    %v1814 = vunpack.c.l.b16 %v95
    %v1815 = vunpack.c.h.b16 %v95
    %v1816 = vunpack.c.l.b16 %v96
    %v1817 = vunpack.c.l.b16 %v97
    %v1818 = vunpack.c.h.b16 %v97
    %v1819 = vunpack.c.l.b16 %v98
    %v1820 = vunpack.c.h.b16 %v98
    %v1821 = vunpack.c.l.b16 %v99
    %v1822 = vunpack.c.l.b16 %v100
    %v1823 = vunpack.c.h.b16 %v100
    %v1824 = vunpack.c.l.b16 %v101
    %v1825 = vunpack.c.h.b16 %v101
    %v1826 = vunpack.c.l.b16 %v102
    %v1827 = vunpack.c.l.b16 %v103
    %v1828 = vunpack.c.h.b16 %v103
    %v1829 = vunpack.c.l.b16 %v104
    %v1830 = vunpack.c.h.b16 %v104
    %v1831 = vunpack.c.l.b16 %v105
    %v1832 = vunpack.c.l.b16 %v106
    %v1833 = vunpack.c.h.b16 %v106
    %v1834 = vunpack.c.l.b16 %v107
    %v1835 = vunpack.c.h.b16 %v107
    %v1836 = vunpack.c.l.b16 %v108
    %v1837 = vunpack.c.l.b16 %v109
    %v1838 = vunpack.c.h.b16 %v109
    %v1839 = vunpack.c.l.b16 %v110
    %v1840 = vunpack.c.h.b16 %v110
    %v1841 = vunpack.c.l.b16 %v111
    %v1842 = vunpack.c.l.b16 %v112
    %v1843 = vunpack.c.h.b16 %v112
    %v1844 = vunpack.c.l.b16 %v113
    %v1845 = vunpack.c.h.b16 %v113
    %v1846 = vunpack.c.l.b16 %v114
    %v1847 = vunpack.c.l.b16 %v115
    %v1848 = vunpack.c.h.b16 %v115
    %v1849 = vunpack.c.l.b16 %v116
    %v1850 = vunpack.c.h.b16 %v116
    %v1851 = vunpack.c.l.b16 %v117
    %v1852 = vunpack.c.l.b16 %v118
    %v1853 = vunpack.c.h.b16 %v118
    %v1854 = vunpack.c.l.b16 %v119
    %v1855 = vunpack.c.h.b16 %v119
    %v1856 = vunpack.c.l.b16 %v120
    %v1857 = vunpack.c.l.b16 %v121
    %v1858 = vunpack.c.h.b16 %v121
    %v1859 = vunpack.c.l.b16 %v122
    %v1860 = vunpack.c.h.b16 %v122
    %v1861 = vunpack.c.l.b16 %v123
    %v1862 = vunpack.c.l.b16 %v124
    %v1863 = vunpack.c.h.b16 %v124
    %v1864 = vunpack.c.l.b16 %v125
    %v1865 = vunpack.c.h.b16 %v125
    %v1866 = vunpack.c.l.b16 %v126
    %v1867 = vunpack.c.l.b16 %v127
    %v1868 = vunpack.c.h.b16 %v127
    %v1869 = vunpack.c.l.b16 %v128
    %v1870 = vunpack.c.h.b16 %v128
    %v1871 = vunpack.c.l.b16 %v129
    %v1872 = vunpack.c.l.b16 %v130
    %v1873 = vunpack.c.h.b16 %v130
    %v1874 = vunpack.c.l.b16 %v131
    %v1875 = vunpack.c.h.b16 %v131
    %v1876 = vunpack.c.l.b16 %v132
    %v1877 = vunpack.c.l.b16 %v133
    %v1878 = vunpack.c.h.b16 %v133
    %v1879 = vunpack.c.l.b16 %v134
    %v1880 = vunpack.c.h.b16 %v134
    %v1881 = vunpack.c.l.b16 %v135
    %v1882 = vunpack.c.l.b16 %v136
    %v1883 = vunpack.c.h.b16 %v136
    %v1884 = vunpack.c.l.b16 %v137
    %v1885 = vunpack.c.h.b16 %v137
    %v1886 = vunpack.c.l.b16 %v138
    %v1887 = vunpack.c.l.b16 %v139
    %v1888 = vunpack.c.h.b16 %v139
    %v1889 = vunpack.c.l.b16 %v140
    %v1890 = vunpack.c.h.b16 %v140
    %v1891 = vunpack.c.l.b16 %v141
    %v1892 = vunpack.c.l.b16 %v142
    %v1893 = vunpack.c.h.b16 %v142
    %v1894 = vunpack.c.l.b16 %v143
    %v1895 = vunpack.c.h.b16 %v143
    %v1896 = vunpack.c.l.b16 %v144
    %v1897 = vunpack.c.l.b16 %v145
    %v1898 = vunpack.c.h.b16 %v145
    %v1899 = vunpack.c.l.b16 %v146
    %v1900 = vunpack.c.h.b16 %v146
    %v1901 = vunpack.c.l.b16 %v147
    %v1902 = vunpack.c.l.b16 %v148
    %v1903 = vunpack.c.h.b16 %v148
    %v1904 = vunpack.c.l.b16 %v149
    %v1905 = vunpack.c.h.b16 %v149
    %v1906 = vunpack.c.l.b16 %v150
    %v1907 = vunpack.c.l.b16 %v151
    %v1908 = vunpack.c.h.b16 %v151
    %v1909 = vunpack.c.l.b16 %v152
    %v1910 = vunpack.c.h.b16 %v152
    %v1911 = vunpack.c.l.b16 %v153
    %v1912 = vunpack.c.l.b16 %v154
    %v1913 = vunpack.c.h.b16 %v154
    %v1914 = vunpack.c.l.b16 %v155
    %v1915 = vunpack.c.h.b16 %v155
    %v1916 = vunpack.c.l.b16 %v156
    %v1917 = vunpack.c.l.b16 %v157
    %v1918 = vunpack.c.h.b16 %v157
    %v1919 = vunpack.c.l.b16 %v158
    %v1920 = vunpack.c.h.b16 %v158
    %v1921 = vunpack.c.l.b16 %v159
    %v1922 = vunpack.c.l.b16 %v160
    %v1923 = vunpack.c.h.b16 %v160
    %v1924 = vunpack.c.l.b16 %v161
    %v1925 = vunpack.c.h.b16 %v161
    %v1926 = vunpack.c.l.b16 %v162
    %v1927 = vunpack.c.l.b16 %v163
    %v1928 = vunpack.c.h.b16 %v163
    %v1929 = vunpack.c.l.b16 %v164
    %v1930 = vunpack.c.h.b16 %v164
    %v1931 = vunpack.c.l.b16 %v165
    %v1932 = vunpack.c.l.b16 %v166
    %v1933 = vunpack.c.h.b16 %v166
    %v1934 = vunpack.c.l.b16 %v167
    %v1935 = vunpack.c.h.b16 %v167
    %v1936 = vunpack.c.l.b16 %v168
    %v1937 = vunpack.c.l.b16 %v169
    %v1938 = vunpack.c.h.b16 %v169
    %v1939 = vunpack.c.l.b16 %v170
    %v1940 = vunpack.c.h.b16 %v170
    %v1941 = vunpack.c.l.b16 %v171
    %v1942 = vunpack.c.l.b16 %v172
    %v1943 = vunpack.c.h.b16 %v172
    %v1944 = vunpack.c.l.b16 %v173
    %v1945 = vunpack.c.h.b16 %v173
    %v1946 = vunpack.c.l.b16 %v174
    %v1947 = vunpack.c.l.b16 %v175
    %v1948 = vunpack.c.h.b16 %v175
    %v1949 = vunpack.c.l.b16 %v176
    %v1950 = vunpack.c.h.b16 %v176
    %v1951 = vunpack.c.l.b16 %v177
    %v1952 = vunpack.c.l.b16 %v178
    %v1953 = vunpack.c.h.b16 %v178
    %v1954 = vunpack.c.l.b16 %v179
    %v1955 = vunpack.c.h.b16 %v179
    %v1956 = vunpack.c.l.b16 %v180
    %v1957 = vunpack.c.l.b16 %v181
    %v1958 = vunpack.c.h.b16 %v181
    %v1959 = vunpack.c.l.b16 %v182
    %v1960 = vunpack.c.h.b16 %v182
    %v1961 = vunpack.c.l.b16 %v183
    %v1962 = vunpack.c.l.b16 %v184
    %v1963 = vunpack.c.h.b16 %v184
    %v1964 = vunpack.c.l.b16 %v185
    %v1965 = vunpack.c.h.b16 %v185
    %v1966 = vunpack.c.l.b16 %v186
    %v1967 = vunpack.c.l.b16 %v187
    %v1968 = vunpack.c.h.b16 %v187
    %v1969 = vunpack.c.l.b16 %v188
    %v1970 = vunpack.c.h.b16 %v188
    %v1971 = vunpack.c.l.b16 %v189
    %v1972 = vunpack.c.l.b16 %v190
    %v1973 = vunpack.c.h.b16 %v190
    %v1974 = vunpack.c.l.b16 %v191
    %v1975 = vunpack.c.h.b16 %v191
    %v1976 = vunpack.c.l.b16 %v192
    %v1977 = vunpack.c.l.b16 %v193
    %v1978 = vunpack.c.h.b16 %v193
    %v1979 = vunpack.c.l.b16 %v194
    %v1980 = vunpack.c.h.b16 %v194
    %v1981 = vunpack.c.l.b16 %v195
    %v1982 = vunpack.c.l.b16 %v196
    %v1983 = vunpack.c.h.b16 %v196
    %v1984 = vunpack.c.l.b16 %v197
    %v1985 = vunpack.c.h.b16 %v197
    %v1986 = vunpack.c.l.b16 %v198
    %v1987 = vunpack.c.l.b16 %v199
    %v1988 = vunpack.c.h.b16 %v199
    %v1989 = vunpack.c.l.b16 %v200
    %v1990 = vunpack.c.h.b16 %v200
    %v1991 = vunpack.c.l.b16 %v201
    %v1992 = vunpack.c.l.b16 %v202
    %v1993 = vunpack.c.h.b16 %v202
    %v1994 = vunpack.c.l.b16 %v203
    %v1995 = vunpack.c.h.b16 %v203
    %v1996 = vunpack.c.l.b16 %v204
    %v1997 = vunpack.c.l.b16 %v205
    %v1998 = vunpack.c.h.b16 %v205
    %v1999 = vunpack.c.l.b16 %v206
    %v2000 = vunpack.c.h.b16 %v206
    %v2001 = vunpack.c.l.b16 %v207
    %v2002 = vunpack.c.l.b16 %v208
    %v2003 = vunpack.c.h.b16 %v208
    %v2004 = vunpack.c.l.b16 %v209
    %v2005 = vunpack.c.h.b16 %v209
    %v2006 = vunpack.c.l.b16 %v210
    %v2007 = vunpack.c.l.b16 %v211
    %v2008 = vunpack.c.h.b16 %v211
    %v2009 = vunpack.c.l.b16 %v212
    %v2010 = vunpack.c.h.b16 %v212
    %v2011 = vunpack.c.l.b16 %v213
    %v2012 = vunpack.c.l.b16 %v214
    %v2013 = vunpack.c.h.b16 %v214
    %v2014 = vunpack.c.l.b16 %v215
    %v2015 = vunpack.c.h.b16 %v215
    %v2016 = vunpack.c.l.b16 %v216
    %v2017 = vunpack.c.l.b16 %v217
    %v2018 = vunpack.c.h.b16 %v217
    %v2019 = vunpack.c.l.b16 %v218
    %v2020 = vunpack.c.h.b16 %v218
    %v2021 = vunpack.c.l.b16 %v219
    %v2022 = vunpack.c.l.b16 %v220
    %v2023 = vunpack.c.h.b16 %v220
    %v2024 = vunpack.c.l.b16 %v221
    %v2025 = vunpack.c.h.b16 %v221
    %v2026 = vunpack.c.l.b16 %v222
    %v2027 = vunpack.c.l.b16 %v223
    %v2028 = vunpack.c.h.b16 %v223
    %v2029 = vunpack.c.l.b16 %v224
    %v2030 = vunpack.c.h.b16 %v224
    %v2031 = vunpack.c.l.b16 %v225
    %v2032 = vunpack.c.l.b16 %v226
    %v2033 = vunpack.c.h.b16 %v226
    %v2034 = vunpack.c.l.b16 %v227
    %v2035 = vunpack.c.h.b16 %v227
    %v2036 = vunpack.c.l.b16 %v228
    %v2037 = vunpack.c.l.b16 %v229
    %v2038 = vunpack.c.h.b16 %v229
    %v2039 = vunpack.c.l.b16 %v230
    %v2040 = vunpack.c.h.b16 %v230
    %v2041 = vunpack.c.l.b16 %v231
    %v2042 = vunpack.c.l.b16 %v232
    %v2043 = vunpack.c.h.b16 %v232
    %v2044 = vunpack.c.l.b16 %v233
    %v2045 = vunpack.c.h.b16 %v233
    %v2046 = vunpack.c.l.b16 %v234
    %v2047 = vunpack.c.l.b16 %v235
    %v2048 = vunpack.c.h.b16 %v235
    %v2049 = vunpack.c.l.b16 %v236
    %v2050 = vunpack.c.h.b16 %v236
    %v2051 = vunpack.c.l.b16 %v237
    %v2052 = vunpack.c.l.b16 %v238
    %v2053 = vunpack.c.h.b16 %v238
    %v2054 = vunpack.c.l.b16 %v239
    %v2055 = vunpack.c.h.b16 %v239
    %v2056 = vunpack.c.l.b16 %v240
    %v2057 = vunpack.c.l.b16 %v241
    %v2058 = vunpack.c.h.b16 %v241
    %v2059 = vunpack.c.l.b16 %v242
    %v2060 = vunpack.c.h.b16 %v242
    %v2061 = vunpack.c.l.b16 %v243
    %v2062 = vunpack.c.l.b16 %v244
    %v2063 = vunpack.c.h.b16 %v244
    %v2064 = vunpack.c.l.b16 %v245
    %v2065 = vunpack.c.h.b16 %v245
    %v2066 = vunpack.c.l.b16 %v246
    %v2067 = vunpack.c.l.b16 %v247
    %v2068 = vunpack.c.h.b16 %v247
    %v2069 = vunpack.c.l.b16 %v248
    %v2070 = vunpack.c.h.b16 %v248
    %v2071 = vunpack.c.l.b16 %v249
    %v2072 = vunpack.c.l.b16 %v250
    %v2073 = vunpack.c.h.b16 %v250
    %v2074 = vunpack.c.l.b16 %v251
    %v2075 = vunpack.c.h.b16 %v251
    %v2076 = vunpack.c.l.b16 %v252
    %v2077 = vunpack.c.l.b16 %v253
    %v2078 = vunpack.c.h.b16 %v253
    %v2079 = vunpack.c.l.b16 %v254
    %v2080 = vunpack.c.h.b16 %v254
    %v2081 = vunpack.c.l.b16 %v255
    %v2082 = vunpack.c.l.b16 %v256
    %v2083 = vunpack.c.h.b16 %v256
    %v2084 = vunpack.c.l.b16 %v257
    %v2085 = vunpack.c.h.b16 %v257
    %v2086 = vunpack.c.l.b16 %v258
    %v2087 = vunpack.c.l.b16 %v259
    %v2088 = vunpack.c.h.b16 %v259
    %v2089 = vunpack.c.l.b16 %v260
    %v2090 = vunpack.c.h.b16 %v260
    %v2091 = vunpack.c.l.b16 %v261
    %v2092 = vunpack.c.l.b16 %v262
    %v2093 = vunpack.c.h.b16 %v262
    %v2094 = vunpack.c.l.b16 %v263
    %v2095 = vunpack.c.h.b16 %v263
    %v2096 = vunpack.c.l.b16 %v264
    %v2097 = vunpack.c.l.b16 %v265
    %v2098 = vunpack.c.h.b16 %v265
    %v2099 = vunpack.c.l.b16 %v266
    %v2100 = vunpack.c.h.b16 %v266
    %v2101 = vunpack.c.l.b16 %v267
    %v2102 = vunpack.c.l.b16 %v268
    %v2103 = vunpack.c.h.b16 %v268
    %v2104 = vunpack.c.l.b16 %v269
    %v2105 = vunpack.c.h.b16 %v269
    %v2106 = vunpack.c.l.b16 %v270
    %v2107 = vunpack.c.l.b16 %v271
    %v2108 = vunpack.c.h.b16 %v271
    %v2109 = vunpack.c.l.b16 %v272
    %v2110 = vunpack.c.h.b16 %v272
    %v2111 = vunpack.c.l.b16 %v273
    %v2112 = vunpack.c.l.b16 %v274
    %v2113 = vunpack.c.h.b16 %v274
    %v2114 = vunpack.c.l.b16 %v275
    %v2115 = vunpack.c.h.b16 %v275
    %v2116 = vunpack.c.l.b16 %v276
    %v2117 = vunpack.c.l.b16 %v277
    %v2118 = vunpack.c.h.b16 %v277
    %v2119 = vunpack.c.l.b16 %v278
    %v2120 = vunpack.c.h.b16 %v278
    %v2121 = vunpack.c.l.b16 %v279
    %v2122 = vunpack.c.l.b16 %v280
    %v2123 = vunpack.c.h.b16 %v280
    %v2124 = vunpack.c.l.b16 %v281
    %v2125 = vunpack.c.h.b16 %v281
    %v2126 = vunpack.c.l.b16 %v282
    %v2127 = vunpack.c.l.b16 %v283
    %v2128 = vunpack.c.h.b16 %v283
    %v2129 = vunpack.c.l.b16 %v284
    %v2130 = vunpack.c.h.b16 %v284
    %v2131 = vunpack.c.l.b16 %v285
    %v2132 = vunpack.c.l.b16 %v286
    %v2133 = vunpack.c.h.b16 %v286
    %v2134 = vunpack.c.l.b16 %v287
    %v2135 = vunpack.c.h.b16 %v287
    %v2136 = vunpack.c.l.b16 %v288
    %v2137 = vunpack.c.l.b16 %v289
    %v2138 = vunpack.c.h.b16 %v289
    %v2139 = vunpack.c.l.b16 %v290
    %v2140 = vunpack.c.h.b16 %v290
    %v2141 = vunpack.c.l.b16 %v291
    %v2142 = vunpack.c.l.b16 %v292
    %v2143 = vunpack.c.h.b16 %v292
    %v2144 = vunpack.c.l.b16 %v293
    %v2145 = vunpack.c.h.b16 %v293
    %v2146 = vunpack.c.l.b16 %v294
    %v2147 = vunpack.c.l.b16 %v295
    %v2148 = vunpack.c.h.b16 %v295
    %v2149 = vunpack.c.l.b16 %v296
    %v2150 = vunpack.c.h.b16 %v296
    %v2151 = vunpack.c.l.b16 %v297
    %v2152 = vunpack.c.l.b16 %v298
    %v2153 = vunpack.c.h.b16 %v298
    %v2154 = vunpack.c.l.b16 %v299
    %v2155 = vunpack.c.h.b16 %v299
    %v2156 = vunpack.c.l.b16 %v300
    %v2157 = vunpack.c.l.b16 %v301
    %v2158 = vunpack.c.h.b16 %v301
    %v2159 = vunpack.c.l.b16 %v302
    %v2160 = vunpack.c.h.b16 %v302
    %v2161 = vunpack.c.l.b16 %v303
    %v2162 = vunpack.c.l.b16 %v304
    %v2163 = vunpack.c.h.b16 %v304
    %v2164 = vunpack.c.l.b16 %v305
    %v2165 = vunpack.c.h.b16 %v305
    %v2166 = vunpack.c.l.b16 %v306
    %v2167 = vunpack.c.l.b16 %v307
    %v2168 = vunpack.c.h.b16 %v307
    %v2169 = vunpack.c.l.b16 %v308
    %v2170 = vunpack.c.h.b16 %v308
    %v2171 = vunpack.c.l.b16 %v309
    %v2172 = vunpack.c.l.b16 %v310
    %v2173 = vunpack.c.h.b16 %v310
    %v2174 = vunpack.c.l.b16 %v311
    %v2175 = vunpack.c.h.b16 %v311
    %v2176 = vunpack.c.l.b16 %v312
    %v2177 = vunpack.c.l.b16 %v313
    %v2178 = vunpack.c.h.b16 %v313
    %v2179 = vunpack.c.l.b16 %v314
    %v2180 = vunpack.c.h.b16 %v314
    %v2181 = vunpack.c.l.b16 %v315
    %v2182 = vunpack.c.l.b16 %v316
    %v2183 = vunpack.c.h.b16 %v316
    %v2184 = vunpack.c.l.b16 %v317
    %v2185 = vunpack.c.h.b16 %v317
    %v2186 = vunpack.c.l.b16 %v318
    %v2187 = vunpack.c.l.b16 %v319
    %v2188 = vunpack.c.h.b16 %v319
    %v2189 = vunpack.c.l.b16 %v320
    %v2190 = vunpack.c.h.b16 %v320
    %v2191 = vunpack.c.l.b16 %v321
    %v2192 = vunpack.c.l.b16 %v322
    %v2193 = vunpack.c.h.b16 %v322
    %v2194 = vunpack.c.l.b16 %v323
    %v2195 = vunpack.c.h.b16 %v323
    %v2196 = vunpack.c.l.b16 %v324
    %v2197 = vunpack.c.l.b16 %v325
    %v2198 = vunpack.c.h.b16 %v325
    %v2199 = vunpack.c.l.b16 %v326
    %v2200 = vunpack.c.h.b16 %v326
    %v2201 = vunpack.c.l.b16 %v327
    %v2202 = vunpack.c.l.b16 %v328
    %v2203 = vunpack.c.h.b16 %v328
    %v2204 = vunpack.c.l.b16 %v329
    %v2205 = vunpack.c.h.b16 %v329
    %v2206 = vunpack.c.l.b16 %v330
    %v2207 = vunpack.c.l.b16 %v331
    %v2208 = vunpack.c.h.b16 %v331
    %v2209 = vunpack.c.l.b16 %v332
    %v2210 = vunpack.c.h.b16 %v332
    %v2211 = vunpack.c.l.b16 %v333
    %v2212 = vunpack.c.l.b16 %v334
    %v2213 = vunpack.c.h.b16 %v334
    %v2214 = vunpack.c.l.b16 %v335
    %v2215 = vunpack.c.h.b16 %v335
    %v2216 = vunpack.c.l.b16 %v336
    %v2217 = vunpack.c.l.b16 %v337
    %v2218 = vunpack.c.h.b16 %v337
    %v2219 = vunpack.c.l.b16 %v338
    %v2220 = vunpack.c.h.b16 %v338
    %v2221 = vunpack.c.l.b16 %v339
    %v2222 = vunpack.c.l.b16 %v340
    %v2223 = vunpack.c.h.b16 %v340
    %v2224 = vunpack.c.l.b16 %v341
    %v2225 = vunpack.c.h.b16 %v341
    %v2226 = vunpack.c.l.b16 %v342
    %v2227 = vunpack.c.l.b16 %v343
    %v2228 = vunpack.c.h.b16 %v343
    %v2229 = vunpack.c.l.b16 %v344
    %v2230 = vunpack.c.h.b16 %v344
    %v2231 = vunpack.c.l.b16 %v345
    %v2232 = vunpack.c.l.b16 %v346
    %v2233 = vunpack.c.h.b16 %v346
    %v2234 = vunpack.c.l.b16 %v347
    %v2235 = vunpack.c.h.b16 %v347
    %v2236 = vunpack.c.l.b16 %v348
    %v2237 = vunpack.c.l.b16 %v349
    %v2238 = vunpack.c.h.b16 %v349
    %v2239 = vunpack.c.l.b16 %v350
    %v2240 = vunpack.c.h.b16 %v350
    %v2241 = vunpack.c.l.b16 %v351
    %v2242 = vunpack.c.l.b16 %v352
    %v2243 = vunpack.c.h.b16 %v352
    %v2244 = vunpack.c.l.b16 %v353
    %v2245 = vunpack.c.h.b16 %v353
    %v2246 = vunpack.c.l.b16 %v354
    %v2247 = vunpack.c.l.b16 %v355
    %v2248 = vunpack.c.h.b16 %v355
    %v2249 = vunpack.c.l.b16 %v356
    %v2250 = vunpack.c.h.b16 %v356
    %v2251 = vunpack.c.l.b16 %v357
    %v2252 = vunpack.c.l.b16 %v358
    %v2253 = vunpack.c.h.b16 %v358
    %v2254 = vunpack.c.l.b16 %v359
    %v2255 = vunpack.c.h.b16 %v359
    %v2256 = vunpack.c.l.b16 %v360
    %v2257 = vunpack.c.l.b16 %v361
    %v2258 = vunpack.c.h.b16 %v361
    %v2259 = vunpack.c.l.b16 %v362
    %v2260 = vunpack.c.h.b16 %v362
    %v2261 = vunpack.c.l.b16 %v363
    %v2262 = vunpack.c.l.b16 %v364
    %v2263 = vunpack.c.h.b16 %v364
    %v2264 = vunpack.c.l.b16 %v365
    %v2265 = vunpack.c.h.b16 %v365
    %v2266 = vunpack.c.l.b16 %v366
    %v2267 = vunpack.c.l.b16 %v367
    %v2268 = vunpack.c.h.b16 %v367
    %v2269 = vunpack.c.l.b16 %v368
    %v2270 = vunpack.c.h.b16 %v368
    %v2271 = vunpack.c.l.b16 %v369
    %v2272 = vunpack.c.l.b16 %v370
    %v2273 = vunpack.c.h.b16 %v370
    %v2274 = vunpack.c.l.b16 %v371
    %v2275 = vunpack.c.h.b16 %v371
    %v2276 = vunpack.c.l.b16 %v372
    %v2277 = vunpack.c.l.b16 %v373
    %v2278 = vunpack.c.h.b16 %v373
    %v2279 = vunpack.c.l.b16 %v374
    %v2280 = vunpack.c.h.b16 %v374
    %v2281 = vunpack.c.l.b16 %v375
    %v2282 = vunpack.c.l.b16 %v376
    %v2283 = vunpack.c.h.b16 %v376
    %v2284 = vunpack.c.l.b16 %v377
    %v2285 = vunpack.c.h.b16 %v377
    %v2286 = vunpack.c.l.b16 %v378
    %v2287 = vunpack.c.l.b16 %v379
    %v2288 = vunpack.c.h.b16 %v379
    %v2289 = vunpack.c.l.b16 %v380
    %v2290 = vunpack.c.h.b16 %v380
    %v2291 = vunpack.c.l.b16 %v381
    %v2292 = vunpack.c.l.b16 %v382
    %v2293 = vunpack.c.h.b16 %v382
    %v2294 = vunpack.c.l.b16 %v383
    %v2295 = vunpack.c.h.b16 %v383
    %v2296 = vunpack.c.l.b16 %v384
    %v2297 = vunpack.c.l.b16 %v385
    %v2298 = vunpack.c.h.b16 %v385
    %v2299 = vunpack.c.l.b16 %v386
    %v2300 = vunpack.c.h.b16 %v386
    %v2301 = vunpack.c.l.b16 %v387
    %v2302 = vunpack.c.l.b16 %v388
    %v2303 = vunpack.c.h.b16 %v388
    %v2304 = vunpack.c.l.b16 %v389
    %v2305 = vunpack.c.h.b16 %v389
    %v2306 = vunpack.c.l.b16 %v390
    %v2307 = vunpack.c.l.b16 %v391
    %v2308 = vunpack.c.h.b16 %v391
    %v2309 = vunpack.c.l.b16 %v392
    %v2310 = vunpack.c.h.b16 %v392
    %v2311 = vunpack.c.l.b16 %v393
    %v2312 = vunpack.c.l.b16 %v394
    %v2313 = vunpack.c.h.b16 %v394
    %v2314 = vunpack.c.l.b16 %v395
    %v2315 = vunpack.c.h.b16 %v395
    %v2316 = vunpack.c.l.b16 %v396
    %v2317 = vunpack.c.l.b16 %v397
    %v2318 = vunpack.c.h.b16 %v397
    %v2319 = vunpack.c.l.b16 %v398
    %v2320 = vunpack.c.h.b16 %v398
    %v2321 = vunpack.c.l.b16 %v399
    %v2322 = vunpack.c.l.b16 %v400
    %v2323 = vunpack.c.h.b16 %v400
    %v2324 = vunpack.c.l.b16 %v401
    %v2325 = vunpack.c.h.b16 %v401
    %v2326 = vunpack.c.l.b16 %v402
    %v2327 = vunpack.c.l.b16 %v403
    %v2328 = vunpack.c.h.b16 %v403
    %v2329 = vunpack.c.l.b16 %v404
    %v2330 = vunpack.c.h.b16 %v404
    %v2331 = vunpack.c.l.b16 %v405
    %v2332 = vunpack.c.l.b16 %v406
    %v2333 = vunpack.c.h.b16 %v406
    %v2334 = vunpack.c.l.b16 %v407
    %v2335 = vunpack.c.h.b16 %v407
    %v2336 = vunpack.c.l.b16 %v408
    %v2337 = vunpack.c.l.b16 %v409
    %v2338 = vunpack.c.h.b16 %v409
    %v2339 = vunpack.c.l.b16 %v410
    %v2340 = vunpack.c.h.b16 %v410
    %v2341 = vunpack.c.l.b16 %v411
    %v2342 = vunpack.c.l.b16 %v412
    %v2343 = vunpack.c.h.b16 %v412
    %v2344 = vunpack.c.l.b16 %v413
    %v2345 = vunpack.c.h.b16 %v413
    %v2346 = vunpack.c.l.b16 %v414
    %v2347 = vunpack.c.l.b16 %v415
    %v2348 = vunpack.c.h.b16 %v415
    %v2349 = vunpack.c.l.b16 %v416
    %v2350 = vunpack.c.h.b16 %v416
    %v2351 = vunpack.c.l.b16 %v417
    %v2352 = vunpack.c.l.b16 %v418
    %v2353 = vunpack.c.h.b16 %v418
    %v2354 = vunpack.c.l.b16 %v419
    %v2355 = vunpack.c.h.b16 %v419
    %v2356 = vunpack.c.l.b16 %v420
    %v2357 = vunpack.c.l.b16 %v421
    %v2358 = vunpack.c.h.b16 %v421
    %v2359 = vunpack.c.l.b16 %v422
    %v2360 = vunpack.c.h.b16 %v422
    %v2361 = vunpack.c.l.b16 %v423
    %v2362 = vunpack.c.l.b16 %v424
    %v2363 = vunpack.c.h.b16 %v424
    %v2364 = vunpack.c.l.b16 %v425
    %v2365 = vunpack.c.h.b16 %v425
    %v2366 = vunpack.c.l.b16 %v426
    %v2367 = vunpack.c.l.b16 %v427
    %v2368 = vunpack.c.h.b16 %v427
    %v2369 = vunpack.c.l.b16 %v428
    %v2370 = vunpack.c.h.b16 %v428
    %v2371 = vunpack.c.l.b16 %v429
    %v2372 = vunpack.c.l.b16 %v430
    %v2373 = vunpack.c.h.b16 %v430
    %v2374 = vunpack.c.l.b16 %v431
    %v2375 = vunpack.c.h.b16 %v431
    %v2376 = vunpack.c.l.b16 %v432
    %v2377 = vunpack.c.l.b16 %v433
    %v2378 = vunpack.c.h.b16 %v433
    %v2379 = vunpack.c.l.b16 %v434
    %v2380 = vunpack.c.h.b16 %v434
    %v2381 = vunpack.c.l.b16 %v435
    %v2382 = vunpack.c.l.b16 %v436
    %v2383 = vunpack.c.h.b16 %v436
    %v2384 = vunpack.c.l.b16 %v437
    %v2385 = vunpack.c.h.b16 %v437
    %v2386 = vunpack.c.l.b16 %v438
    %v2387 = vunpack.c.l.b16 %v439
    %v2388 = vunpack.c.h.b16 %v439
    %v2389 = vunpack.c.l.b16 %v440
    %v2390 = vunpack.c.h.b16 %v440
    %v2391 = vunpack.c.l.b16 %v441
    %v2392 = vunpack.c.l.b16 %v442
    %v2393 = vunpack.c.h.b16 %v442
    %v2394 = vunpack.c.l.b16 %v443
    %v2395 = vunpack.c.h.b16 %v443
    %v2396 = vunpack.c.l.b16 %v444
    %v2397 = vunpack.c.l.b16 %v445
    %v2398 = vunpack.c.h.b16 %v445
    %v2399 = vunpack.c.l.b16 %v446
    %v2400 = vunpack.c.h.b16 %v446
    %v2401 = vunpack.c.l.b16 %v447
    %v2402 = vunpack.c.l.b16 %v448
    %v2403 = vunpack.c.h.b16 %v448
    %v2404 = vunpack.c.l.b16 %v449
    %v2405 = vunpack.c.h.b16 %v449
    %v2406 = vunpack.c.l.b16 %v450
    %v2407 = vunpack.c.l.b16 %v451
    %v2408 = vunpack.c.h.b16 %v451
    %v2409 = vunpack.c.l.b16 %v452
    %v2410 = vunpack.c.h.b16 %v452
    %v2411 = vunpack.c.l.b16 %v453
    %v2412 = vunpack.c.l.b16 %v454
    %v2413 = vunpack.c.h.b16 %v454
    %v2414 = vunpack.c.l.b16 %v455
    %v2415 = vunpack.c.h.b16 %v455
    %v2416 = vunpack.c.l.b16 %v456
    %v2417 = vunpack.c.l.b16 %v457
    %v2418 = vunpack.c.h.b16 %v457
    %v2419 = vunpack.c.l.b16 %v458
    %v2420 = vunpack.c.h.b16 %v458
    %v2421 = vunpack.c.l.b16 %v459
    %v2422 = vunpack.c.l.b16 %v460
    %v2423 = vunpack.c.h.b16 %v460
    %v2424 = vunpack.c.l.b16 %v461
    %v2425 = vunpack.c.h.b16 %v461
    %v2426 = vunpack.c.l.b16 %v462
    %v2427 = vunpack.c.l.b16 %v463
    %v2428 = vunpack.c.h.b16 %v463
    %v2429 = vunpack.c.l.b16 %v464
    %v2430 = vunpack.c.h.b16 %v464
    %v2431 = vunpack.c.l.b16 %v465
    %v2432 = vunpack.c.l.b16 %v466
    %v2433 = vunpack.c.h.b16 %v466
    %v2434 = vunpack.c.l.b16 %v467
    %v2435 = vunpack.c.h.b16 %v467
    %v2436 = vunpack.c.l.b16 %v468
    %v2437 = vunpack.c.l.b16 %v469
    %v2438 = vunpack.c.h.b16 %v469
    %v2439 = vunpack.c.l.b16 %v470
    %v2440 = vunpack.c.h.b16 %v470
    %v2441 = vunpack.c.l.b16 %v471
    %v2442 = vunpack.c.l.b16 %v472
    %v2443 = vunpack.c.h.b16 %v472
    %v2444 = vunpack.c.l.b16 %v473
    %v2445 = vunpack.c.h.b16 %v473
    %v2446 = vunpack.c.l.b16 %v474
    %v2447 = vunpack.c.l.b16 %v475
    %v2448 = vunpack.c.h.b16 %v475
    %v2449 = vunpack.c.l.b16 %v476
    %v2450 = vunpack.c.h.b16 %v476
    %v2451 = vunpack.c.l.b16 %v477
    %v2452 = vunpack.c.l.b16 %v478
    %v2453 = vunpack.c.h.b16 %v478
    %v2454 = vunpack.c.l.b16 %v479
    %v2455 = vunpack.c.h.b16 %v479
    %v2456 = vunpack.c.l.b16 %v480
    %v2457 = vunpack.c.l.b16 %v481
    %v2458 = vunpack.c.h.b16 %v481
    %v2459 = vunpack.c.l.b16 %v482
    %v2460 = vunpack.c.h.b16 %v482
    %v2461 = vunpack.c.l.b16 %v483
    %v2462 = vunpack.c.l.b16 %v484
    %v2463 = vunpack.c.h.b16 %v484
    %v2464 = vunpack.c.l.b16 %v485
    %v2465 = vunpack.c.h.b16 %v485
    %v2466 = vunpack.c.l.b16 %v486
    %v2467 = vunpack.c.l.b16 %v487
    %v2468 = vunpack.c.h.b16 %v487
    %v2469 = vunpack.c.l.b16 %v488
    %v2470 = vunpack.c.h.b16 %v488
    %v2471 = vunpack.c.l.b16 %v489
    %v2472 = vunpack.c.l.b16 %v490
    %v2473 = vunpack.c.h.b16 %v490
    %v2474 = vunpack.c.l.b16 %v491
    %v2475 = vunpack.c.h.b16 %v491
    %v2476 = vunpack.c.l.b16 %v492
    %v2477 = vunpack.c.l.b16 %v493
    %v2478 = vunpack.c.h.b16 %v493
    %v2479 = vunpack.c.l.b16 %v494
    %v2480 = vunpack.c.h.b16 %v494
    %v2481 = vunpack.c.l.b16 %v495
    %v2482 = vunpack.c.l.b16 %v496
    %v2483 = vunpack.c.h.b16 %v496
    %v2484 = vunpack.c.l.b16 %v497
    %v2485 = vunpack.c.h.b16 %v497
    %v2486 = vunpack.c.l.b16 %v498
    %v2487 = vunpack.c.l.b16 %v499
    %v2488 = vunpack.c.h.b16 %v499
    %v2489 = vunpack.c.l.b16 %v500
    %v2490 = vunpack.c.h.b16 %v500
    %v2491 = vunpack.c.l.b16 %v501
    %v2492 = vunpack.c.l.b16 %v502
    %v2493 = vunpack.c.h.b16 %v502
    %v2494 = vunpack.c.l.b16 %v503
    %v2495 = vunpack.c.h.b16 %v503
    %v2496 = vunpack.c.l.b16 %v504
    %v2497 = vunpack.c.l.b16 %v505
    %v2498 = vunpack.c.h.b16 %v505
    %v2499 = vunpack.c.l.b16 %v506
    %v2500 = vunpack.c.h.b16 %v506
    %v2501 = vunpack.c.l.b16 %v507
    %v2502 = vunpack.c.l.b16 %v508
    %v2503 = vunpack.c.h.b16 %v508
    %v2504 = vunpack.c.l.b16 %v509
    %v2505 = vunpack.c.h.b16 %v509
    %v2506 = vunpack.c.l.b16 %v510
    %v2507 = vunpack.c.l.b16 %v511
    %v2508 = vunpack.c.h.b16 %v511
    %v2509 = vunpack.c.l.b16 %v512
    %v2510 = vunpack.c.h.b16 %v512
    %v2511 = vunpack.c.l.b16 %v513
    %v2512 = vunpack.c.l.b16 %v514
    %v2513 = vunpack.c.h.b16 %v514
    %v2514 = vunpack.c.l.b16 %v515
    %v2515 = vunpack.c.h.b16 %v515
    %v2516 = vunpack.c.l.b16 %v516
    %v2517 = vunpack.c.l.b16 %v517
    %v2518 = vunpack.c.h.b16 %v517
    %v2519 = vunpack.c.l.b16 %v518
    %v2520 = vunpack.c.h.b16 %v518
    %v2521 = vunpack.c.l.b16 %v519
    %v2522 = vunpack.c.l.b16 %v520
    %v2523 = vunpack.c.h.b16 %v520
    %v2524 = vunpack.c.l.b16 %v521
    %v2525 = vunpack.c.h.b16 %v521
    %v2526 = vunpack.c.l.b16 %v522
    %v2527 = vunpack.c.l.b16 %v523
    %v2528 = vunpack.c.h.b16 %v523
    %v2529 = vunpack.c.l.b16 %v524
    %v2530 = vunpack.c.h.b16 %v524
    %v2531 = vunpack.c.l.b16 %v525
    %v2532 = vunpack.c.l.b16 %v526
    %v2533 = vunpack.c.h.b16 %v526
    %v2534 = vunpack.c.l.b16 %v527
    %v2535 = vunpack.c.h.b16 %v527
    %v2536 = vunpack.c.l.b16 %v528
    %v2537 = vunpack.c.l.b16 %v529
    %v2538 = vunpack.c.h.b16 %v529
    %v2539 = vunpack.c.l.b16 %v530
    %v2540 = vunpack.c.h.b16 %v530
    %v2541 = vunpack.c.l.b16 %v531
    %v2542 = vunpack.c.l.b16 %v532
    %v2543 = vunpack.c.h.b16 %v532
    %v2544 = vunpack.c.l.b16 %v533
    %v2545 = vunpack.c.h.b16 %v533
    %v2546 = vunpack.c.l.b16 %v534
    %v2547 = vunpack.c.l.b16 %v535
    %v2548 = vunpack.c.h.b16 %v535
    %v2549 = vunpack.c.l.b16 %v536
    %v2550 = vunpack.c.h.b16 %v536
    %v2551 = vunpack.c.l.b16 %v537
    %v2552 = vunpack.c.l.b16 %v538
    %v2553 = vunpack.c.h.b16 %v538
    %v2554 = vunpack.c.l.b16 %v539
    %v2555 = vunpack.c.h.b16 %v539
    %v2556 = vunpack.c.l.b16 %v540
    %v2557 = vunpack.c.l.b16 %v541
    %v2558 = vunpack.c.h.b16 %v541
    %v2559 = vunpack.c.l.b16 %v542
    %v2560 = vunpack.c.h.b16 %v542
    %v2561 = vunpack.c.l.b16 %v543
    %v2562 = vunpack.c.l.b16 %v544
    %v2563 = vunpack.c.h.b16 %v544
    %v2564 = vunpack.c.l.b16 %v545
    %v2565 = vunpack.c.h.b16 %v545
    %v2566 = vunpack.c.l.b16 %v546
    %v2567 = vunpack.c.l.b16 %v547
    %v2568 = vunpack.c.h.b16 %v547
    %v2569 = vunpack.c.l.b16 %v548
    %v2570 = vunpack.c.h.b16 %v548
    %v2571 = vunpack.c.l.b16 %v549
    %v2572 = vunpack.c.l.b16 %v550
    %v2573 = vunpack.c.h.b16 %v550
    %v2574 = vunpack.c.l.b16 %v551
    %v2575 = vunpack.c.h.b16 %v551
    %v2576 = vunpack.c.l.b16 %v552
    %v2577 = vunpack.c.l.b16 %v553
    %v2578 = vunpack.c.h.b16 %v553
    %v2579 = vunpack.c.l.b16 %v554
    %v2580 = vunpack.c.h.b16 %v554
    %v2581 = vunpack.c.l.b16 %v555
    %v2582 = vunpack.c.l.b16 %v556
    %v2583 = vunpack.c.h.b16 %v556
    %v2584 = vunpack.c.l.b16 %v557
    %v2585 = vunpack.c.h.b16 %v557
    %v2586 = vunpack.c.l.b16 %v558
    %v2587 = vunpack.c.l.b16 %v559
    %v2588 = vunpack.c.h.b16 %v559
    %v2589 = vunpack.c.l.b16 %v560
    %v2590 = vunpack.c.h.b16 %v560
    %v2591 = vunpack.c.l.b16 %v561
    %v2592 = vunpack.c.l.b16 %v562
    %v2593 = vunpack.c.h.b16 %v562
    %v2594 = vunpack.c.l.b16 %v563
    %v2595 = vunpack.c.h.b16 %v563
    %v2596 = vunpack.c.l.b16 %v564
    %v2597 = vunpack.c.l.b16 %v565
    %v2598 = vunpack.c.h.b16 %v565
    %v2599 = vunpack.c.l.b16 %v566
    %v2600 = vunpack.c.h.b16 %v566
    %v2601 = vunpack.c.l.b16 %v567
    %v2602 = vunpack.c.l.b16 %v568
    %v2603 = vunpack.c.h.b16 %v568
    %v2604 = vunpack.c.l.b16 %v569
    %v2605 = vunpack.c.h.b16 %v569
    %v2606 = vunpack.c.l.b16 %v570
    %v2607 = vunpack.c.l.b16 %v571
    %v2608 = vunpack.c.h.b16 %v571
    %v2609 = vunpack.c.l.b16 %v572
    %v2610 = vunpack.c.h.b16 %v572
    %v2611 = vunpack.c.l.b16 %v573
    %v2612 = vunpack.c.l.b16 %v574
    %v2613 = vunpack.c.h.b16 %v574
    %v2614 = vunpack.c.l.b16 %v575
    %v2615 = vunpack.c.h.b16 %v575
    %v2616 = vunpack.c.l.b16 %v576
    %v2617 = vunpack.c.l.b16 %v577
    %v2618 = vunpack.c.h.b16 %v577
    %v2619 = vunpack.c.l.b16 %v578
    %v2620 = vunpack.c.h.b16 %v578
    %v2621 = vunpack.c.l.b16 %v579
    %v2622 = vunpack.c.l.b16 %v580
    %v2623 = vunpack.c.h.b16 %v580
    %v2624 = vunpack.c.l.b16 %v581
    %v2625 = vunpack.c.h.b16 %v581
    %v2626 = vunpack.c.l.b16 %v582
    %v2627 = vunpack.c.l.b16 %v583
    %v2628 = vunpack.c.h.b16 %v583
    %v2629 = vunpack.c.l.b16 %v584
    %v2630 = vunpack.c.h.b16 %v584
    %v2631 = vunpack.c.l.b16 %v585
    %v2632 = vunpack.c.l.b16 %v586
    %v2633 = vunpack.c.h.b16 %v586
    %v2634 = vunpack.c.l.b16 %v587
    %v2635 = vunpack.c.h.b16 %v587
    %v2636 = vunpack.c.l.b16 %v588
    %v2637 = vunpack.c.l.b16 %v589
    %v2638 = vunpack.c.h.b16 %v589
    %v2639 = vunpack.c.l.b16 %v590
    %v2640 = vunpack.c.h.b16 %v590
    %v2641 = vunpack.c.l.b16 %v591
    %v2642 = vunpack.c.l.b16 %v592
    %v2643 = vunpack.c.h.b16 %v592
    %v2644 = vunpack.c.l.b16 %v593
    %v2645 = vunpack.c.h.b16 %v593
    %v2646 = vunpack.c.l.b16 %v594
    %v2647 = vunpack.c.l.b16 %v595
    %v2648 = vunpack.c.h.b16 %v595
    %v2649 = vunpack.c.l.b16 %v596
    %v2650 = vunpack.c.h.b16 %v596
    %v2651 = vunpack.c.l.b16 %v597
    %v2652 = vunpack.c.l.b16 %v598
    %v2653 = vunpack.c.h.b16 %v598
    %v2654 = vunpack.c.l.b16 %v599
    %v2655 = vunpack.c.h.b16 %v599
    %v2656 = vunpack.c.l.b16 %v600
    %v2657 = vunpack.c.l.b16 %v601
    %v2658 = vunpack.c.h.b16 %v601
    %v2659 = vunpack.c.l.b16 %v602
    %v2660 = vunpack.c.h.b16 %v602
    %v2661 = vunpack.c.l.b16 %v603
    %v2662 = vunpack.c.l.b16 %v604
    %v2663 = vunpack.c.h.b16 %v604
    %v2664 = vunpack.c.l.b16 %v605
    %v2665 = vunpack.c.h.b16 %v605
    %v2666 = vunpack.c.l.b16 %v606
    %v2667 = vunpack.c.l.b16 %v607
    %v2668 = vunpack.c.h.b16 %v607
    %v2669 = vunpack.c.l.b16 %v608
    %v2670 = vunpack.c.h.b16 %v608
    %v2671 = vunpack.c.l.b16 %v609
    %v2672 = vunpack.c.l.b16 %v610
    %v2673 = vunpack.c.h.b16 %v610
    %v2674 = vunpack.c.l.b16 %v611
    %v2675 = vunpack.c.h.b16 %v611
    %v2676 = vunpack.c.l.b16 %v612
    %v2677 = vunpack.c.l.b16 %v613
    %v2678 = vunpack.c.h.b16 %v613
    %v2679 = vunpack.c.l.b16 %v614
    %v2680 = vunpack.c.h.b16 %v614
    %v2681 = vunpack.c.l.b16 %v615
    %v2682 = vunpack.c.l.b16 %v616
    %v2683 = vunpack.c.h.b16 %v616
    %v2684 = vunpack.c.l.b16 %v617
    %v2685 = vunpack.c.h.b16 %v617
    %v2686 = vunpack.c.l.b16 %v618
    %v2687 = vunpack.c.l.b16 %v619
    %v2688 = vunpack.c.h.b16 %v619
    %v2689 = vunpack.c.l.b16 %v620
    %v2690 = vunpack.c.h.b16 %v620
    %v2691 = vunpack.c.l.b16 %v621
    %v2692 = vunpack.c.l.b16 %v622
    %v2693 = vunpack.c.h.b16 %v622
    %v2694 = vunpack.c.l.b16 %v623
    %v2695 = vunpack.c.h.b16 %v623
    %v2696 = vunpack.c.l.b16 %v624
    %v2697 = vunpack.c.l.b16 %v625
    %v2698 = vunpack.c.h.b16 %v625
    %v2699 = vunpack.c.l.b16 %v626
    %v2700 = vunpack.c.h.b16 %v626
    %v2701 = vunpack.c.l.b16 %v627
    %v2702 = vunpack.c.l.b16 %v628
    %v2703 = vunpack.c.h.b16 %v628
    %v2704 = vunpack.c.l.b16 %v629
    %v2705 = vunpack.c.h.b16 %v629
    %v2706 = vunpack.c.l.b16 %v630
    %v2707 = vunpack.c.l.b16 %v631
    %v2708 = vunpack.c.h.b16 %v631
    %v2709 = vunpack.c.l.b16 %v632
    %v2710 = vunpack.c.h.b16 %v632
    %v2711 = vunpack.c.l.b16 %v633
    %v2712 = vunpack.c.l.b16 %v634
    %v2713 = vunpack.c.h.b16 %v634
    %v2714 = vunpack.c.l.b16 %v635
    %v2715 = vunpack.c.h.b16 %v635
    %v2716 = vunpack.c.l.b16 %v636
    %v2717 = vunpack.c.l.b16 %v637
    %v2718 = vunpack.c.h.b16 %v637
    %v2719 = vunpack.c.l.b16 %v638
    %v2720 = vunpack.c.h.b16 %v638
    %v2721 = vunpack.c.l.b16 %v639
    %v2722 = vunpack.c.l.b16 %v640
    %v2723 = vunpack.c.h.b16 %v640
    %v2724 = vunpack.c.l.b16 %v641
    %v2725 = vunpack.c.h.b16 %v641
    %v2726 = vunpack.c.l.b16 %v642
    %v2727 = vunpack.c.l.b16 %v643
    %v2728 = vunpack.c.h.b16 %v643
    %v2729 = vunpack.c.l.b16 %v644
    %v2730 = vunpack.c.h.b16 %v644
    %v2731 = vunpack.c.l.b16 %v645
    %v2732 = vunpack.c.l.b16 %v646
    %v2733 = vunpack.c.h.b16 %v646
    %v2734 = vunpack.c.l.b16 %v647
    %v2735 = vunpack.c.h.b16 %v647
    %v2736 = vunpack.c.l.b16 %v648
    %v2737 = vunpack.c.l.b16 %v649
    %v2738 = vunpack.c.h.b16 %v649
    %v2739 = vunpack.c.l.b16 %v650
    %v2740 = vunpack.c.h.b16 %v650
    %v2741 = vunpack.c.l.b16 %v651
    %v2742 = vunpack.c.l.b16 %v652
    %v2743 = vunpack.c.h.b16 %v652
    %v2744 = vunpack.c.l.b16 %v653
    %v2745 = vunpack.c.h.b16 %v653
    %v2746 = vunpack.c.l.b16 %v654
    %v2747 = vunpack.c.l.b16 %v655
    %v2748 = vunpack.c.h.b16 %v655
    %v2749 = vunpack.c.l.b16 %v656
    %v2750 = vunpack.c.h.b16 %v656
    %v2751 = vunpack.c.l.b16 %v657
    %v2752 = vunpack.c.l.b16 %v658
    %v2753 = vunpack.c.h.b16 %v658
    %v2754 = vunpack.c.l.b16 %v659
    %v2755 = vunpack.c.h.b16 %v659
    %v2756 = vunpack.c.l.b16 %v660
    %v2757 = vunpack.c.l.b16 %v661
    %v2758 = vunpack.c.h.b16 %v661
    %v2759 = vunpack.c.l.b16 %v662
    %v2760 = vunpack.c.h.b16 %v662
    %v2761 = vunpack.c.l.b16 %v663
    %v2762 = vunpack.c.l.b16 %v664
    %v2763 = vunpack.c.h.b16 %v664
    %v2764 = vunpack.c.l.b16 %v665
    %v2765 = vunpack.c.h.b16 %v665
    %v2766 = vunpack.c.l.b16 %v666
    %v2767 = vunpack.c.l.b16 %v667
    %v2768 = vunpack.c.h.b16 %v667
    %v2769 = vunpack.c.l.b16 %v668
    %v2770 = vunpack.c.h.b16 %v668
    %v2771 = vunpack.c.l.b16 %v669
    %v2772 = vunpack.c.l.b16 %v670
    %v2773 = vunpack.c.h.b16 %v670
    %v2774 = vunpack.c.l.b16 %v671
    %v2775 = vunpack.c.h.b16 %v671
    %v2776 = vunpack.c.l.b16 %v672
    %v2777 = vunpack.c.l.b16 %v673
    %v2778 = vunpack.c.h.b16 %v673
    %v2779 = vunpack.c.l.b16 %v674
    %v2780 = vunpack.c.h.b16 %v674
    %v2781 = vunpack.c.l.b16 %v675
    %v2782 = vunpack.c.l.b16 %v676
    %v2783 = vunpack.c.h.b16 %v676
    %v2784 = vunpack.c.l.b16 %v677
    %v2785 = vunpack.c.h.b16 %v677
    %v2786 = vunpack.c.l.b16 %v678
    %v2787 = vunpack.c.l.b16 %v679
    %v2788 = vunpack.c.h.b16 %v679
    %v2789 = vunpack.c.l.b16 %v680
    %v2790 = vunpack.c.h.b16 %v680
    %v2791 = vunpack.c.l.b16 %v681
    %v2792 = vunpack.c.l.b16 %v682
    %v2793 = vunpack.c.h.b16 %v682
    %v2794 = vunpack.c.l.b16 %v683
    %v2795 = vunpack.c.h.b16 %v683
    %v2796 = vunpack.c.l.b16 %v684
    %v2797 = vunpack.c.l.b16 %v685
    %v2798 = vunpack.c.h.b16 %v685
    %v2799 = vunpack.c.l.b16 %v686
    %v2800 = vunpack.c.h.b16 %v686
    %v2801 = vunpack.c.l.b16 %v687
    %v2802 = vunpack.c.l.b16 %v688
    %v2803 = vunpack.c.h.b16 %v688
    %v2804 = vunpack.c.l.b16 %v689
    %v2805 = vunpack.c.h.b16 %v689
    %v2806 = vunpack.c.l.b16 %v690
    %v2807 = vunpack.c.l.b16 %v691
    %v2808 = vunpack.c.h.b16 %v691
    %v2809 = vunpack.c.l.b16 %v692
    %v2810 = vunpack.c.h.b16 %v692
    %v2811 = vunpack.c.l.b16 %v693
    %v2812 = vunpack.c.l.b16 %v694
    %v2813 = vunpack.c.h.b16 %v694
    %v2814 = vunpack.c.l.b16 %v695
    %v2815 = vunpack.c.h.b16 %v695
    %v2816 = vunpack.c.l.b16 %v696
    %v2817 = vunpack.c.l.b16 %v697
    %v2818 = vunpack.c.h.b16 %v697
    %v2819 = vunpack.c.l.b16 %v698
    %v2820 = vunpack.c.h.b16 %v698
    %v2821 = vunpack.c.l.b16 %v699
    %v2822 = vunpack.c.l.b16 %v700
    %v2823 = vunpack.c.h.b16 %v700
    %v2824 = vunpack.c.l.b16 %v701
    %v2825 = vunpack.c.h.b16 %v701
    %v2826 = vunpack.c.l.b16 %v702
    %v2827 = vunpack.c.l.b16 %v703
    %v2828 = vunpack.c.h.b16 %v703
    %v2829 = vunpack.c.l.b16 %v704
    %v2830 = vunpack.c.h.b16 %v704
    %v2831 = vunpack.c.l.b16 %v705
    %v2832 = vunpack.c.l.b16 %v706
    %v2833 = vunpack.c.h.b16 %v706
    %v2834 = vunpack.c.l.b16 %v707
    %v2835 = vunpack.c.h.b16 %v707
    %v2836 = vunpack.c.l.b16 %v708
    %v2837 = vunpack.c.l.b16 %v709
    %v2838 = vunpack.c.h.b16 %v709
    %v2839 = vunpack.c.l.b16 %v710
    %v2840 = vunpack.c.h.b16 %v710
    %v2841 = vunpack.c.l.b16 %v711
    %v2842 = vunpack.c.l.b16 %v712
    %v2843 = vunpack.c.h.b16 %v712
    %v2844 = vunpack.c.l.b16 %v713
    %v2845 = vunpack.c.h.b16 %v713
    %v2846 = vunpack.c.l.b16 %v714
    %v2847 = vunpack.c.l.b16 %v715
    %v2848 = vunpack.c.h.b16 %v715
    %v2849 = vunpack.c.l.b16 %v716
    %v2850 = vunpack.c.h.b16 %v716
    %v2851 = vunpack.c.l.b16 %v717
    %v2852 = vunpack.c.l.b16 %v718
    %v2853 = vunpack.c.h.b16 %v718
    %v2854 = vunpack.c.l.b16 %v719
    %v2855 = vunpack.c.h.b16 %v719
    %v2856 = vunpack.c.l.b16 %v720
    %v2857 = vunpack.c.l.b16 %v721
    %v2858 = vunpack.c.h.b16 %v721
    %v2859 = vunpack.c.l.b16 %v722
    %v2860 = vunpack.c.h.b16 %v722
    %v2861 = vunpack.c.l.b16 %v723
    %v2862 = vunpack.c.l.b16 %v724
    %v2863 = vunpack.c.h.b16 %v724
    %v2864 = vunpack.c.l.b16 %v725
    %v2865 = vunpack.c.h.b16 %v725
    %v2866 = vunpack.c.l.b16 %v726
    %v2867 = vunpack.c.l.b16 %v727
    %v2868 = vunpack.c.h.b16 %v727
    %v2869 = vunpack.c.l.b16 %v728
    %v2870 = vunpack.c.h.b16 %v728
    %v2871 = vunpack.c.l.b16 %v729
    %v2872 = vunpack.c.l.b16 %v730
    %v2873 = vunpack.c.h.b16 %v730
    %v2874 = vunpack.c.l.b16 %v731
    %v2875 = vunpack.c.h.b16 %v731
    %v2876 = vunpack.c.l.b16 %v732
    %v2877 = vunpack.c.l.b16 %v733
    %v2878 = vunpack.c.h.b16 %v733
    %v2879 = vunpack.c.l.b16 %v734
    %v2880 = vunpack.c.h.b16 %v734
    %v2881 = vunpack.c.l.b16 %v735
    %v2882 = vunpack.c.l.b16 %v736
    %v2883 = vunpack.c.h.b16 %v736
    %v2884 = vunpack.c.l.b16 %v737
    %v2885 = vunpack.c.h.b16 %v737
    %v2886 = vunpack.c.l.b16 %v738
    %v2887 = vunpack.c.l.b16 %v739
    %v2888 = vunpack.c.h.b16 %v739
    %v2889 = vunpack.c.l.b16 %v740
    %v2890 = vunpack.c.h.b16 %v740
    %v2891 = vunpack.c.l.b16 %v741
    %v2892 = vunpack.c.l.b16 %v742
    %v2893 = vunpack.c.h.b16 %v742
    %v2894 = vunpack.c.l.b16 %v743
    %v2895 = vunpack.c.h.b16 %v743
    %v2896 = vunpack.c.l.b16 %v744
    %v2897 = vunpack.c.l.b16 %v745
    %v2898 = vunpack.c.h.b16 %v745
    %v2899 = vunpack.c.l.b16 %v746
    %v2900 = vunpack.c.h.b16 %v746
    %v2901 = vunpack.c.l.b16 %v747
    %v2902 = vunpack.c.l.b16 %v748
    %v2903 = vunpack.c.h.b16 %v748
    %v2904 = vunpack.c.l.b16 %v749
    %v2905 = vunpack.c.h.b16 %v749
    %v2906 = vunpack.c.l.b16 %v750
    %v2907 = vunpack.c.l.b16 %v751
    %v2908 = vunpack.c.h.b16 %v751
    %v2909 = vunpack.c.l.b16 %v752
    %v2910 = vunpack.c.h.b16 %v752
    %v2911 = vunpack.c.l.b16 %v753
    %v2912 = vunpack.c.l.b16 %v754
    %v2913 = vunpack.c.h.b16 %v754
    %v2914 = vunpack.c.l.b16 %v755
    %v2915 = vunpack.c.h.b16 %v755
    %v2916 = vunpack.c.l.b16 %v756
    %v2917 = vunpack.c.l.b16 %v757
    %v2918 = vunpack.c.h.b16 %v757
    %v2919 = vunpack.c.l.b16 %v758
    %v2920 = vunpack.c.h.b16 %v758
    %v2921 = vunpack.c.l.b16 %v759
    %v2922 = vunpack.c.l.b16 %v760
    %v2923 = vunpack.c.h.b16 %v760
    %v2924 = vunpack.c.l.b16 %v761
    %v2925 = vunpack.c.h.b16 %v761
    %v2926 = vunpack.c.l.b16 %v762
    %v2927 = vunpack.c.l.b16 %v763
    %v2928 = vunpack.c.h.b16 %v763
    %v2929 = vunpack.c.l.b16 %v764
    %v2930 = vunpack.c.h.b16 %v764
    %v2931 = vunpack.c.l.b16 %v765
    %v2932 = vunpack.c.l.b16 %v766
    %v2933 = vunpack.c.h.b16 %v766
    %v2934 = vunpack.c.l.b16 %v767
    %v2935 = vunpack.c.h.b16 %v767
    %v2936 = vunpack.c.l.b16 %v768
    %v2937 = vunpack.c.l.b16 %v769
    %v2938 = vunpack.c.h.b16 %v769
    %v2939 = vunpack.c.l.b16 %v770
    %v2940 = vunpack.c.h.b16 %v770
    %v2941 = vunpack.c.l.b16 %v771
    %v2942 = vunpack.c.l.b16 %v772
    %v2943 = vunpack.c.h.b16 %v772
    %v2944 = vunpack.c.l.b16 %v773
    %v2945 = vunpack.c.h.b16 %v773
    %v2946 = vunpack.c.l.b16 %v774
    %v2947 = vunpack.c.l.b16 %v775
    %v2948 = vunpack.c.h.b16 %v775
    %v2949 = vunpack.c.l.b16 %v776
    %v2950 = vunpack.c.h.b16 %v776
    %v2951 = vunpack.c.l.b16 %v777
    %v2952 = vunpack.c.l.b16 %v778
    %v2953 = vunpack.c.h.b16 %v778
    %v2954 = vunpack.c.l.b16 %v779
    %v2955 = vunpack.c.h.b16 %v779
    %v2956 = vunpack.c.l.b16 %v780
    %v2957 = vunpack.c.l.b16 %v781
    %v2958 = vunpack.c.h.b16 %v781
    %v2959 = vunpack.c.l.b16 %v782
    %v2960 = vunpack.c.h.b16 %v782
    %v2961 = vunpack.c.l.b16 %v783
    %v2962 = vunpack.c.l.b16 %v784
    %v2963 = vunpack.c.h.b16 %v784
    %v2964 = vunpack.c.l.b16 %v785
    %v2965 = vunpack.c.h.b16 %v785
    %v2966 = vunpack.c.l.b16 %v786
    %v2967 = vunpack.c.l.b16 %v787
    %v2968 = vunpack.c.h.b16 %v787
    %v2969 = vunpack.c.l.b16 %v788
    %v2970 = vunpack.c.h.b16 %v788
    %v2971 = vunpack.c.l.b16 %v789
    %v2972 = vunpack.c.l.b16 %v790
    %v2973 = vunpack.c.h.b16 %v790
    %v2974 = vunpack.c.l.b16 %v791
    %v2975 = vunpack.c.h.b16 %v791
    %v2976 = vunpack.c.l.b16 %v792
    %v2977 = vunpack.c.l.b16 %v793
    %v2978 = vunpack.c.h.b16 %v793
    %v2979 = vunpack.c.l.b16 %v794
    %v2980 = vunpack.c.h.b16 %v794
    %v2981 = vunpack.c.l.b16 %v795
    %v2982 = vunpack.c.l.b16 %v796
    %v2983 = vunpack.c.h.b16 %v796
    %v2984 = vunpack.c.l.b16 %v797
    %v2985 = vunpack.c.h.b16 %v797
    %v2986 = vunpack.c.l.b16 %v798
    %v2987 = vunpack.c.l.b16 %v799
    %v2988 = vunpack.c.h.b16 %v799
    %v2989 = vunpack.c.l.b16 %v800
    %v2990 = vunpack.c.h.b16 %v800
    %v2991 = vunpack.c.l.b16 %v801
    %v2992 = vunpack.c.l.b16 %v802
    %v2993 = vunpack.c.h.b16 %v802
    %v2994 = vunpack.c.l.b16 %v803
    %v2995 = vunpack.c.h.b16 %v803
    %v2996 = vunpack.c.l.b16 %v804
    %v2997 = vunpack.c.l.b16 %v805
    %v2998 = vunpack.c.h.b16 %v805
    %v2999 = vunpack.c.l.b16 %v806
    %v3000 = vunpack.c.h.b16 %v806
    %v3001 = vunpack.c.l.b16 %v807
    %v3002 = vunpack.c.l.b16 %v808
    %v3003 = vunpack.c.h.b16 %v808
    %v3004 = vunpack.c.l.b16 %v809
    %v3005 = vunpack.c.h.b16 %v809
    %v3006 = vunpack.c.l.b16 %v810
    %v3007 = vunpack.c.l.b16 %v811
    %v3008 = vunpack.c.h.b16 %v811
    %v3009 = vunpack.c.l.b16 %v812
    %v3010 = vunpack.c.h.b16 %v812
    %v3011 = vunpack.c.l.b16 %v813
    %v3012 = vunpack.c.l.b16 %v814
    %v3013 = vunpack.c.h.b16 %v814
    %v3014 = vunpack.c.l.b16 %v815
    %v3015 = vunpack.c.h.b16 %v815
    %v3016 = vunpack.c.l.b16 %v816
    %v3017 = vunpack.c.l.b16 %v817
    %v3018 = vunpack.c.h.b16 %v817
    %v3019 = vunpack.c.l.b16 %v818
    %v3020 = vunpack.c.h.b16 %v818
    %v3021 = vunpack.c.l.b16 %v819
    %v3022 = vunpack.c.l.b16 %v820
    %v3023 = vunpack.c.h.b16 %v820
    %v3024 = vunpack.c.l.b16 %v821
    %v3025 = vunpack.c.h.b16 %v821
    %v3026 = vunpack.c.l.b16 %v822
    %v3027 = vunpack.c.l.b16 %v823
    %v3028 = vunpack.c.h.b16 %v823
    %v3029 = vunpack.c.l.b16 %v824
    %v3030 = vunpack.c.h.b16 %v824
    %v3031 = vunpack.c.l.b16 %v825
    %v3032 = vunpack.c.l.b16 %v826
    %v3033 = vunpack.c.h.b16 %v826
    %v3034 = vunpack.c.l.b16 %v827
    %v3035 = vunpack.c.h.b16 %v827
    %v3036 = vunpack.c.l.b16 %v828
    %v3037 = vunpack.c.l.b16 %v829
    %v3038 = vunpack.c.h.b16 %v829
    %v3039 = vunpack.c.l.b16 %v830
    %v3040 = vunpack.c.h.b16 %v830
    %v3041 = vunpack.c.l.b16 %v831
    %v3042 = vunpack.c.l.b16 %v832
    %v3043 = vunpack.c.h.b16 %v832
    %v3044 = vunpack.c.l.b16 %v833
    %v3045 = vunpack.c.h.b16 %v833
    %v3046 = vunpack.c.l.b16 %v834
    %v3047 = vunpack.c.l.b16 %v835
    %v3048 = vunpack.c.h.b16 %v835
    %v3049 = vunpack.c.l.b16 %v836
    %v3050 = vunpack.c.h.b16 %v836
    %v3051 = vunpack.c.l.b16 %v837
    %v3052 = vunpack.c.l.b16 %v838
    %v3053 = vunpack.c.h.b16 %v838
    %v3054 = vunpack.c.l.b16 %v839
    %v3055 = vunpack.c.h.b16 %v839
    %v3056 = vunpack.c.l.b16 %v840
    %v3057 = vunpack.c.l.b16 %v841
    %v3058 = vunpack.c.h.b16 %v841
    %v3059 = vunpack.c.l.b16 %v842
    %v3060 = vunpack.c.h.b16 %v842
    %v3061 = vunpack.c.l.b16 %v843
    %v3062 = vunpack.c.l.b16 %v844
    %v3063 = vunpack.c.h.b16 %v844
    %v3064 = vunpack.c.l.b16 %v845
    %v3065 = vunpack.c.h.b16 %v845
    %v3066 = vunpack.c.l.b16 %v846
    %v3067 = vunpack.c.l.b16 %v847
    %v3068 = vunpack.c.h.b16 %v847
    %v3069 = vunpack.c.l.b16 %v848
    %v3070 = vunpack.c.h.b16 %v848
    %v3071 = vunpack.c.l.b16 %v849
    %v3072 = vunpack.c.l.b16 %v850
    %v3073 = vunpack.c.h.b16 %v850
    %v3074 = vunpack.c.l.b16 %v851
    %v3075 = vunpack.c.h.b16 %v851
    %v3076 = vunpack.c.l.b16 %v852
    %v3077 = vunpack.c.l.b16 %v853
    %v3078 = vunpack.c.h.b16 %v853
    %v3079 = vunpack.c.l.b16 %v854
    %v3080 = vunpack.c.h.b16 %v854
    %v3081 = vunpack.c.l.b16 %v855
    %v3082 = vunpack.c.l.b16 %v856
    %v3083 = vunpack.c.h.b16 %v856
    %v3084 = vunpack.c.l.b16 %v857
    %v3085 = vunpack.c.h.b16 %v857
    %v3086 = vunpack.c.l.b16 %v858
    %v3087 = vunpack.c.l.b16 %v859
    %v3088 = vunpack.c.h.b16 %v859
    %v3089 = vunpack.c.l.b16 %v860
    %v3090 = vunpack.c.h.b16 %v860
    %v3091 = vunpack.c.l.b16 %v861
    %v3092 = vunpack.c.l.b16 %v862
    %v3093 = vunpack.c.h.b16 %v862
    %v3094 = vunpack.c.l.b16 %v863
    %v3095 = vunpack.c.h.b16 %v863
    %v3096 = vunpack.c.l.b16 %v864
    %v3097 = vunpack.c.l.b16 %v865
    %v3098 = vunpack.c.h.b16 %v865
    %v3099 = vunpack.c.l.b16 %v866
    %v3100 = vunpack.c.h.b16 %v866
    %v3101 = vunpack.c.l.b16 %v867
    %v3102 = vunpack.c.l.b16 %v868
    %v3103 = vunpack.c.h.b16 %v868
    %v3104 = vunpack.c.l.b16 %v869
    %v3105 = vunpack.c.h.b16 %v869
    %v3106 = vunpack.c.l.b16 %v870
    %v3107 = vpack.c.b16 %v1752, %v1747
    %v3108 = vpack.c.b16 %v1753, %v1748
    %v3109 = vpack.c.b16 %v1754, %v1749
    %v3110 = vpack.c.b16 %v1755, %v1750
    %v3111 = vpack.c.b16 %v1756, %v1751
    %v3112 = vpack.c.b16 %v1762, %v1757
    %v3113 = vpack.c.b16 %v1763, %v1758
    %v3114 = vpack.c.b16 %v1764, %v1759
    %v3115 = vpack.c.b16 %v1765, %v1760
    %v3116 = vpack.c.b16 %v1766, %v1761
    %v3117 = vpack.c.b16 %v1772, %v1767
    %v3118 = vpack.c.b16 %v1773, %v1768
    %v3119 = vpack.c.b16 %v1774, %v1769
    %v3120 = vpack.c.b16 %v1775, %v1770
    %v3121 = vpack.c.b16 %v1776, %v1771
    %v3122 = vpack.c.b16 %v1782, %v1777
    %v3123 = vpack.c.b16 %v1783, %v1778
    %v3124 = vpack.c.b16 %v1784, %v1779
    %v3125 = vpack.c.b16 %v1785, %v1780
    %v3126 = vpack.c.b16 %v1786, %v1781
    %v3127 = vpack.c.b16 %v1792, %v1787
    %v3128 = vpack.c.b16 %v1793, %v1788
    %v3129 = vpack.c.b16 %v1794, %v1789
    %v3130 = vpack.c.b16 %v1795, %v1790
    %v3131 = vpack.c.b16 %v1796, %v1791
    %v3132 = vpack.c.b16 %v1802, %v1797
    %v3133 = vpack.c.b16 %v1803, %v1798
    %v3134 = vpack.c.b16 %v1804, %v1799
    %v3135 = vpack.c.b16 %v1805, %v1800
    %v3136 = vpack.c.b16 %v1806, %v1801
    %v3137 = vpack.c.b16 %v1812, %v1807
    %v3138 = vpack.c.b16 %v1813, %v1808
    %v3139 = vpack.c.b16 %v1814, %v1809
    %v3140 = vpack.c.b16 %v1815, %v1810
    %v3141 = vpack.c.b16 %v1816, %v1811
    %v3142 = vpack.c.b16 %v1822, %v1817
    %v3143 = vpack.c.b16 %v1823, %v1818
    %v3144 = vpack.c.b16 %v1824, %v1819
    %v3145 = vpack.c.b16 %v1825, %v1820
    %v3146 = vpack.c.b16 %v1826, %v1821
    %v3147 = vpack.c.b16 %v1832, %v1827
    %v3148 = vpack.c.b16 %v1833, %v1828
    %v3149 = vpack.c.b16 %v1834, %v1829
    %v3150 = vpack.c.b16 %v1835, %v1830
    %v3151 = vpack.c.b16 %v1836, %v1831
    %v3152 = vpack.c.b16 %v1842, %v1837
    %v3153 = vpack.c.b16 %v1843, %v1838
    %v3154 = vpack.c.b16 %v1844, %v1839
    %v3155 = vpack.c.b16 %v1845, %v1840
    %v3156 = vpack.c.b16 %v1846, %v1841
    %v3157 = vpack.c.b16 %v1852, %v1847
    %v3158 = vpack.c.b16 %v1853, %v1848
    %v3159 = vpack.c.b16 %v1854, %v1849
    %v3160 = vpack.c.b16 %v1855, %v1850
    %v3161 = vpack.c.b16 %v1856, %v1851
    %v3162 = vpack.c.b16 %v1862, %v1857
    %v3163 = vpack.c.b16 %v1863, %v1858
    %v3164 = vpack.c.b16 %v1864, %v1859
    %v3165 = vpack.c.b16 %v1865, %v1860
    %v3166 = vpack.c.b16 %v1866, %v1861
    %v3167 = vpack.c.b16 %v1872, %v1867
    %v3168 = vpack.c.b16 %v1873, %v1868
    %v3169 = vpack.c.b16 %v1874, %v1869
    %v3170 = vpack.c.b16 %v1875, %v1870
    %v3171 = vpack.c.b16 %v1876, %v1871
    %v3172 = vpack.c.b16 %v1882, %v1877
    %v3173 = vpack.c.b16 %v1883, %v1878
    %v3174 = vpack.c.b16 %v1884, %v1879
    %v3175 = vpack.c.b16 %v1885, %v1880
    %v3176 = vpack.c.b16 %v1886, %v1881
    %v3177 = vpack.c.b16 %v1892, %v1887
    %v3178 = vpack.c.b16 %v1893, %v1888
    %v3179 = vpack.c.b16 %v1894, %v1889
    %v3180 = vpack.c.b16 %v1895, %v1890
    %v3181 = vpack.c.b16 %v1896, %v1891
    %v3182 = vpack.c.b16 %v1902, %v1897
    %v3183 = vpack.c.b16 %v1903, %v1898
    %v3184 = vpack.c.b16 %v1904, %v1899
    %v3185 = vpack.c.b16 %v1905, %v1900
    %v3186 = vpack.c.b16 %v1906, %v1901
    %v3187 = vpack.c.b16 %v1912, %v1907
    %v3188 = vpack.c.b16 %v1913, %v1908
    %v3189 = vpack.c.b16 %v1914, %v1909
    %v3190 = vpack.c.b16 %v1915, %v1910
    %v3191 = vpack.c.b16 %v1916, %v1911
    %v3192 = vpack.c.b16 %v1922, %v1917
    %v3193 = vpack.c.b16 %v1923, %v1918
    %v3194 = vpack.c.b16 %v1924, %v1919
    %v3195 = vpack.c.b16 %v1925, %v1920
    %v3196 = vpack.c.b16 %v1926, %v1921
    %v3197 = vpack.c.b16 %v1932, %v1927
    %v3198 = vpack.c.b16 %v1933, %v1928
    %v3199 = vpack.c.b16 %v1934, %v1929
    %v3200 = vpack.c.b16 %v1935, %v1930
    %v3201 = vpack.c.b16 %v1936, %v1931
    %v3202 = vpack.c.b16 %v1942, %v1937
    %v3203 = vpack.c.b16 %v1943, %v1938
    %v3204 = vpack.c.b16 %v1944, %v1939
    %v3205 = vpack.c.b16 %v1945, %v1940
    %v3206 = vpack.c.b16 %v1946, %v1941
    %v3207 = vpack.c.b16 %v1952, %v1947
    %v3208 = vpack.c.b16 %v1953, %v1948
    %v3209 = vpack.c.b16 %v1954, %v1949
    %v3210 = vpack.c.b16 %v1955, %v1950
    %v3211 = vpack.c.b16 %v1956, %v1951
    %v3212 = vpack.c.b16 %v1962, %v1957
    %v3213 = vpack.c.b16 %v1963, %v1958
    %v3214 = vpack.c.b16 %v1964, %v1959
    %v3215 = vpack.c.b16 %v1965, %v1960
    %v3216 = vpack.c.b16 %v1966, %v1961
    %v3217 = vpack.c.b16 %v1972, %v1967
    %v3218 = vpack.c.b16 %v1973, %v1968
    %v3219 = vpack.c.b16 %v1974, %v1969
    %v3220 = vpack.c.b16 %v1975, %v1970
    %v3221 = vpack.c.b16 %v1976, %v1971
    %v3222 = vpack.c.b16 %v1982, %v1977
    %v3223 = vpack.c.b16 %v1983, %v1978
    %v3224 = vpack.c.b16 %v1984, %v1979
    %v3225 = vpack.c.b16 %v1985, %v1980
    %v3226 = vpack.c.b16 %v1986, %v1981
    %v3227 = vpack.c.b16 %v1992, %v1987
    %v3228 = vpack.c.b16 %v1993, %v1988
    %v3229 = vpack.c.b16 %v1994, %v1989
    %v3230 = vpack.c.b16 %v1995, %v1990
    %v3231 = vpack.c.b16 %v1996, %v1991
    %v3232 = vpack.c.b16 %v2002, %v1997
    %v3233 = vpack.c.b16 %v2003, %v1998
    %v3234 = vpack.c.b16 %v2004, %v1999
    %v3235 = vpack.c.b16 %v2005, %v2000
    %v3236 = vpack.c.b16 %v2006, %v2001
    %v3237 = vpack.c.b16 %v2012, %v2007
    %v3238 = vpack.c.b16 %v2013, %v2008
    %v3239 = vpack.c.b16 %v2014, %v2009
    %v3240 = vpack.c.b16 %v2015, %v2010
    %v3241 = vpack.c.b16 %v2016, %v2011
    %v3242 = vpack.c.b16 %v2022, %v2017
    %v3243 = vpack.c.b16 %v2023, %v2018
    %v3244 = vpack.c.b16 %v2024, %v2019
    %v3245 = vpack.c.b16 %v2025, %v2020
    %v3246 = vpack.c.b16 %v2026, %v2021
    %v3247 = vpack.c.b16 %v2032, %v2027
    %v3248 = vpack.c.b16 %v2033, %v2028
    %v3249 = vpack.c.b16 %v2034, %v2029
    %v3250 = vpack.c.b16 %v2035, %v2030
    %v3251 = vpack.c.b16 %v2036, %v2031
    %v3252 = vpack.c.b16 %v2042, %v2037
    %v3253 = vpack.c.b16 %v2043, %v2038
    %v3254 = vpack.c.b16 %v2044, %v2039
    %v3255 = vpack.c.b16 %v2045, %v2040
    %v3256 = vpack.c.b16 %v2046, %v2041
    %v3257 = vpack.c.b16 %v2052, %v2047
    %v3258 = vpack.c.b16 %v2053, %v2048
    %v3259 = vpack.c.b16 %v2054, %v2049
    %v3260 = vpack.c.b16 %v2055, %v2050
    %v3261 = vpack.c.b16 %v2056, %v2051
    %v3262 = vpack.c.b16 %v2062, %v2057
    %v3263 = vpack.c.b16 %v2063, %v2058
    %v3264 = vpack.c.b16 %v2064, %v2059
    %v3265 = vpack.c.b16 %v2065, %v2060
    %v3266 = vpack.c.b16 %v2066, %v2061
    %v3267 = vpack.c.b16 %v2072, %v2067
    %v3268 = vpack.c.b16 %v2073, %v2068
    %v3269 = vpack.c.b16 %v2074, %v2069
    %v3270 = vpack.c.b16 %v2075, %v2070
    %v3271 = vpack.c.b16 %v2076, %v2071
    %v3272 = vpack.c.b16 %v2082, %v2077
    %v3273 = vpack.c.b16 %v2083, %v2078
    %v3274 = vpack.c.b16 %v2084, %v2079
    %v3275 = vpack.c.b16 %v2085, %v2080
    %v3276 = vpack.c.b16 %v2086, %v2081
    %v3277 = vpack.c.b16 %v2092, %v2087
    %v3278 = vpack.c.b16 %v2093, %v2088
    %v3279 = vpack.c.b16 %v2094, %v2089
    %v3280 = vpack.c.b16 %v2095, %v2090
    %v3281 = vpack.c.b16 %v2096, %v2091
    %v3282 = vpack.c.b16 %v2102, %v2097
    %v3283 = vpack.c.b16 %v2103, %v2098
    %v3284 = vpack.c.b16 %v2104, %v2099
    %v3285 = vpack.c.b16 %v2105, %v2100
    %v3286 = vpack.c.b16 %v2106, %v2101
    %v3287 = vpack.c.b16 %v2112, %v2107
    %v3288 = vpack.c.b16 %v2113, %v2108
    %v3289 = vpack.c.b16 %v2114, %v2109
    %v3290 = vpack.c.b16 %v2115, %v2110
    %v3291 = vpack.c.b16 %v2116, %v2111
    %v3292 = vpack.c.b16 %v2122, %v2117
    %v3293 = vpack.c.b16 %v2123, %v2118
    %v3294 = vpack.c.b16 %v2124, %v2119
    %v3295 = vpack.c.b16 %v2125, %v2120
    %v3296 = vpack.c.b16 %v2126, %v2121
    %v3297 = vpack.c.b16 %v2132, %v2127
    %v3298 = vpack.c.b16 %v2133, %v2128
    %v3299 = vpack.c.b16 %v2134, %v2129
    %v3300 = vpack.c.b16 %v2135, %v2130
    %v3301 = vpack.c.b16 %v2136, %v2131
    %v3302 = vpack.c.b16 %v2142, %v2137
    %v3303 = vpack.c.b16 %v2143, %v2138
    %v3304 = vpack.c.b16 %v2144, %v2139
    %v3305 = vpack.c.b16 %v2145, %v2140
    %v3306 = vpack.c.b16 %v2146, %v2141
    %v3307 = vpack.c.b16 %v2152, %v2147
    %v3308 = vpack.c.b16 %v2153, %v2148
    %v3309 = vpack.c.b16 %v2154, %v2149
    %v3310 = vpack.c.b16 %v2155, %v2150
    %v3311 = vpack.c.b16 %v2156, %v2151
    %v3312 = vpack.c.b16 %v2162, %v2157
    %v3313 = vpack.c.b16 %v2163, %v2158
    %v3314 = vpack.c.b16 %v2164, %v2159
    %v3315 = vpack.c.b16 %v2165, %v2160
    %v3316 = vpack.c.b16 %v2166, %v2161
    %v3317 = vpack.c.b16 %v2172, %v2167
    %v3318 = vpack.c.b16 %v2173, %v2168
    %v3319 = vpack.c.b16 %v2174, %v2169
    %v3320 = vpack.c.b16 %v2175, %v2170
    %v3321 = vpack.c.b16 %v2176, %v2171
    %v3322 = vpack.c.b16 %v2182, %v2177
    %v3323 = vpack.c.b16 %v2183, %v2178
    %v3324 = vpack.c.b16 %v2184, %v2179
    %v3325 = vpack.c.b16 %v2185, %v2180
    %v3326 = vpack.c.b16 %v2186, %v2181
    %v3327 = vpack.c.b16 %v2192, %v2187
    %v3328 = vpack.c.b16 %v2193, %v2188
    %v3329 = vpack.c.b16 %v2194, %v2189
    %v3330 = vpack.c.b16 %v2195, %v2190
    %v3331 = vpack.c.b16 %v2196, %v2191
    %v3332 = vpack.c.b16 %v2202, %v2197
    %v3333 = vpack.c.b16 %v2203, %v2198
    %v3334 = vpack.c.b16 %v2204, %v2199
    %v3335 = vpack.c.b16 %v2205, %v2200
    %v3336 = vpack.c.b16 %v2206, %v2201
    %v3337 = vpack.c.b16 %v2212, %v2207
    %v3338 = vpack.c.b16 %v2213, %v2208
    %v3339 = vpack.c.b16 %v2214, %v2209
    %v3340 = vpack.c.b16 %v2215, %v2210
    %v3341 = vpack.c.b16 %v2216, %v2211
    %v3342 = vpack.c.b16 %v2222, %v2217
    %v3343 = vpack.c.b16 %v2223, %v2218
    %v3344 = vpack.c.b16 %v2224, %v2219
    %v3345 = vpack.c.b16 %v2225, %v2220
    %v3346 = vpack.c.b16 %v2226, %v2221
    %v3347 = vpack.c.b16 %v2232, %v2227
    %v3348 = vpack.c.b16 %v2233, %v2228
    %v3349 = vpack.c.b16 %v2234, %v2229
    %v3350 = vpack.c.b16 %v2235, %v2230
    %v3351 = vpack.c.b16 %v2236, %v2231
    %v3352 = vpack.c.b16 %v2242, %v2237
    %v3353 = vpack.c.b16 %v2243, %v2238
    %v3354 = vpack.c.b16 %v2244, %v2239
    %v3355 = vpack.c.b16 %v2245, %v2240
    %v3356 = vpack.c.b16 %v2246, %v2241
    %v3357 = vpack.c.b16 %v2252, %v2247
    %v3358 = vpack.c.b16 %v2253, %v2248
    %v3359 = vpack.c.b16 %v2254, %v2249
    %v3360 = vpack.c.b16 %v2255, %v2250
    %v3361 = vpack.c.b16 %v2256, %v2251
    %v3362 = vpack.c.b16 %v2262, %v2257
    %v3363 = vpack.c.b16 %v2263, %v2258
    %v3364 = vpack.c.b16 %v2264, %v2259
    %v3365 = vpack.c.b16 %v2265, %v2260
    %v3366 = vpack.c.b16 %v2266, %v2261
    %v3367 = vpack.c.b16 %v2272, %v2267
    %v3368 = vpack.c.b16 %v2273, %v2268
    %v3369 = vpack.c.b16 %v2274, %v2269
    %v3370 = vpack.c.b16 %v2275, %v2270
    %v3371 = vpack.c.b16 %v2276, %v2271
    %v3372 = vpack.c.b16 %v2282, %v2277
    %v3373 = vpack.c.b16 %v2283, %v2278
    %v3374 = vpack.c.b16 %v2284, %v2279
    %v3375 = vpack.c.b16 %v2285, %v2280
    %v3376 = vpack.c.b16 %v2286, %v2281
    %v3377 = vpack.c.b16 %v2292, %v2287
    %v3378 = vpack.c.b16 %v2293, %v2288
    %v3379 = vpack.c.b16 %v2294, %v2289
    %v3380 = vpack.c.b16 %v2295, %v2290
    %v3381 = vpack.c.b16 %v2296, %v2291
    %v3382 = vpack.c.b16 %v2302, %v2297
    %v3383 = vpack.c.b16 %v2303, %v2298
    %v3384 = vpack.c.b16 %v2304, %v2299
    %v3385 = vpack.c.b16 %v2305, %v2300
    %v3386 = vpack.c.b16 %v2306, %v2301
    %v3387 = vpack.c.b16 %v2312, %v2307
    %v3388 = vpack.c.b16 %v2313, %v2308
    %v3389 = vpack.c.b16 %v2314, %v2309
    %v3390 = vpack.c.b16 %v2315, %v2310
    %v3391 = vpack.c.b16 %v2316, %v2311
    %v3392 = vpack.c.b16 %v2322, %v2317
    %v3393 = vpack.c.b16 %v2323, %v2318
    %v3394 = vpack.c.b16 %v2324, %v2319
    %v3395 = vpack.c.b16 %v2325, %v2320
    %v3396 = vpack.c.b16 %v2326, %v2321
    %v3397 = vpack.c.b16 %v2332, %v2327
    %v3398 = vpack.c.b16 %v2333, %v2328
    %v3399 = vpack.c.b16 %v2334, %v2329
    %v3400 = vpack.c.b16 %v2335, %v2330
    %v3401 = vpack.c.b16 %v2336, %v2331
    %v3402 = vpack.c.b16 %v2342, %v2337
    %v3403 = vpack.c.b16 %v2343, %v2338
    %v3404 = vpack.c.b16 %v2344, %v2339
    %v3405 = vpack.c.b16 %v2345, %v2340
    %v3406 = vpack.c.b16 %v2346, %v2341
    %v3407 = vpack.c.b16 %v2352, %v2347
    %v3408 = vpack.c.b16 %v2353, %v2348
    %v3409 = vpack.c.b16 %v2354, %v2349
    %v3410 = vpack.c.b16 %v2355, %v2350
    %v3411 = vpack.c.b16 %v2356, %v2351
    %v3412 = vpack.c.b16 %v2362, %v2357
    %v3413 = vpack.c.b16 %v2363, %v2358
    %v3414 = vpack.c.b16 %v2364, %v2359
    %v3415 = vpack.c.b16 %v2365, %v2360
    %v3416 = vpack.c.b16 %v2366, %v2361
    %v3417 = vpack.c.b16 %v2372, %v2367
    %v3418 = vpack.c.b16 %v2373, %v2368
    %v3419 = vpack.c.b16 %v2374, %v2369
    %v3420 = vpack.c.b16 %v2375, %v2370
    %v3421 = vpack.c.b16 %v2376, %v2371
    %v3422 = vpack.c.b16 %v2382, %v2377
    %v3423 = vpack.c.b16 %v2383, %v2378
    %v3424 = vpack.c.b16 %v2384, %v2379
    %v3425 = vpack.c.b16 %v2385, %v2380
    %v3426 = vpack.c.b16 %v2386, %v2381
    %v3427 = vpack.c.b16 %v2392, %v2387
    %v3428 = vpack.c.b16 %v2393, %v2388
    %v3429 = vpack.c.b16 %v2394, %v2389
    %v3430 = vpack.c.b16 %v2395, %v2390
    %v3431 = vpack.c.b16 %v2396, %v2391
    %v3432 = vpack.c.b16 %v2402, %v2397
    %v3433 = vpack.c.b16 %v2403, %v2398
    %v3434 = vpack.c.b16 %v2404, %v2399
    %v3435 = vpack.c.b16 %v2405, %v2400
    %v3436 = vpack.c.b16 %v2406, %v2401
    %v3437 = vpack.c.b16 %v2412, %v2407
    %v3438 = vpack.c.b16 %v2413, %v2408
    %v3439 = vpack.c.b16 %v2414, %v2409
    %v3440 = vpack.c.b16 %v2415, %v2410
    %v3441 = vpack.c.b16 %v2416, %v2411
    %v3442 = vpack.c.b16 %v2422, %v2417
    %v3443 = vpack.c.b16 %v2423, %v2418
    %v3444 = vpack.c.b16 %v2424, %v2419
    %v3445 = vpack.c.b16 %v2425, %v2420
    %v3446 = vpack.c.b16 %v2426, %v2421
    %v3447 = vpack.c.b16 %v2432, %v2427
    %v3448 = vpack.c.b16 %v2433, %v2428
    %v3449 = vpack.c.b16 %v2434, %v2429
    %v3450 = vpack.c.b16 %v2435, %v2430
    %v3451 = vpack.c.b16 %v2436, %v2431
    %v3452 = vpack.c.b16 %v2442, %v2437
    %v3453 = vpack.c.b16 %v2443, %v2438
    %v3454 = vpack.c.b16 %v2444, %v2439
    %v3455 = vpack.c.b16 %v2445, %v2440
    %v3456 = vpack.c.b16 %v2446, %v2441
    %v3457 = vpack.c.b16 %v2452, %v2447
    %v3458 = vpack.c.b16 %v2453, %v2448
    %v3459 = vpack.c.b16 %v2454, %v2449
    %v3460 = vpack.c.b16 %v2455, %v2450
    %v3461 = vpack.c.b16 %v2456, %v2451
    %v3462 = vpack.c.b16 %v2462, %v2457
    %v3463 = vpack.c.b16 %v2463, %v2458
    %v3464 = vpack.c.b16 %v2464, %v2459
    %v3465 = vpack.c.b16 %v2465, %v2460
    %v3466 = vpack.c.b16 %v2466, %v2461
    %v3467 = vpack.c.b16 %v2472, %v2467
    %v3468 = vpack.c.b16 %v2473, %v2468
    %v3469 = vpack.c.b16 %v2474, %v2469
    %v3470 = vpack.c.b16 %v2475, %v2470
    %v3471 = vpack.c.b16 %v2476, %v2471
    %v3472 = vpack.c.b16 %v2482, %v2477
    %v3473 = vpack.c.b16 %v2483, %v2478
    %v3474 = vpack.c.b16 %v2484, %v2479
    %v3475 = vpack.c.b16 %v2485, %v2480
    %v3476 = vpack.c.b16 %v2486, %v2481
    %v3477 = vpack.c.b16 %v2492, %v2487
    %v3478 = vpack.c.b16 %v2493, %v2488
    %v3479 = vpack.c.b16 %v2494, %v2489
    %v3480 = vpack.c.b16 %v2495, %v2490
    %v3481 = vpack.c.b16 %v2496, %v2491
    %v3482 = vpack.c.b16 %v2502, %v2497
    %v3483 = vpack.c.b16 %v2503, %v2498
    %v3484 = vpack.c.b16 %v2504, %v2499
    %v3485 = vpack.c.b16 %v2505, %v2500
    %v3486 = vpack.c.b16 %v2506, %v2501
    %v3487 = vpack.c.b16 %v2512, %v2507
    %v3488 = vpack.c.b16 %v2513, %v2508
    %v3489 = vpack.c.b16 %v2514, %v2509
    %v3490 = vpack.c.b16 %v2515, %v2510
    %v3491 = vpack.c.b16 %v2516, %v2511
    %v3492 = vpack.c.b16 %v2522, %v2517
    %v3493 = vpack.c.b16 %v2523, %v2518
    %v3494 = vpack.c.b16 %v2524, %v2519
    %v3495 = vpack.c.b16 %v2525, %v2520
    %v3496 = vpack.c.b16 %v2526, %v2521
    %v3497 = vpack.c.b16 %v2532, %v2527
    %v3498 = vpack.c.b16 %v2533, %v2528
    %v3499 = vpack.c.b16 %v2534, %v2529
    %v3500 = vpack.c.b16 %v2535, %v2530
    %v3501 = vpack.c.b16 %v2536, %v2531
    %v3502 = vpack.c.b16 %v2542, %v2537
    %v3503 = vpack.c.b16 %v2543, %v2538
    %v3504 = vpack.c.b16 %v2544, %v2539
    %v3505 = vpack.c.b16 %v2545, %v2540
    %v3506 = vpack.c.b16 %v2546, %v2541
    %v3507 = vpack.c.b16 %v2552, %v2547
    %v3508 = vpack.c.b16 %v2553, %v2548
    %v3509 = vpack.c.b16 %v2554, %v2549
    %v3510 = vpack.c.b16 %v2555, %v2550
    %v3511 = vpack.c.b16 %v2556, %v2551
    %v3512 = vpack.c.b16 %v2562, %v2557
    %v3513 = vpack.c.b16 %v2563, %v2558
    %v3514 = vpack.c.b16 %v2564, %v2559
    %v3515 = vpack.c.b16 %v2565, %v2560
    %v3516 = vpack.c.b16 %v2566, %v2561
    %v3517 = vpack.c.b16 %v2572, %v2567
    %v3518 = vpack.c.b16 %v2573, %v2568
    %v3519 = vpack.c.b16 %v2574, %v2569
    %v3520 = vpack.c.b16 %v2575, %v2570
    %v3521 = vpack.c.b16 %v2576, %v2571
    %v3522 = vpack.c.b16 %v2582, %v2577
    %v3523 = vpack.c.b16 %v2583, %v2578
    %v3524 = vpack.c.b16 %v2584, %v2579
    %v3525 = vpack.c.b16 %v2585, %v2580
    %v3526 = vpack.c.b16 %v2586, %v2581
    %v3527 = vpack.c.b16 %v2592, %v2587
    %v3528 = vpack.c.b16 %v2593, %v2588
    %v3529 = vpack.c.b16 %v2594, %v2589
    %v3530 = vpack.c.b16 %v2595, %v2590
    %v3531 = vpack.c.b16 %v2596, %v2591
    %v3532 = vpack.c.b16 %v2602, %v2597
    %v3533 = vpack.c.b16 %v2603, %v2598
    %v3534 = vpack.c.b16 %v2604, %v2599
    %v3535 = vpack.c.b16 %v2605, %v2600
    %v3536 = vpack.c.b16 %v2606, %v2601
    %v3537 = vpack.c.b16 %v2612, %v2607
    %v3538 = vpack.c.b16 %v2613, %v2608
    %v3539 = vpack.c.b16 %v2614, %v2609
    %v3540 = vpack.c.b16 %v2615, %v2610
    %v3541 = vpack.c.b16 %v2616, %v2611
    %v3542 = vpack.c.b16 %v2622, %v2617
    %v3543 = vpack.c.b16 %v2623, %v2618
    %v3544 = vpack.c.b16 %v2624, %v2619
    %v3545 = vpack.c.b16 %v2625, %v2620
    %v3546 = vpack.c.b16 %v2626, %v2621
    %v3547 = vpack.c.b16 %v2632, %v2627
    %v3548 = vpack.c.b16 %v2633, %v2628
    %v3549 = vpack.c.b16 %v2634, %v2629
    %v3550 = vpack.c.b16 %v2635, %v2630
    %v3551 = vpack.c.b16 %v2636, %v2631
    %v3552 = vpack.c.b16 %v2642, %v2637
    %v3553 = vpack.c.b16 %v2643, %v2638
    %v3554 = vpack.c.b16 %v2644, %v2639
    %v3555 = vpack.c.b16 %v2645, %v2640
    %v3556 = vpack.c.b16 %v2646, %v2641
    %v3557 = vpack.c.b16 %v2652, %v2647
    %v3558 = vpack.c.b16 %v2653, %v2648
    %v3559 = vpack.c.b16 %v2654, %v2649
    %v3560 = vpack.c.b16 %v2655, %v2650
    %v3561 = vpack.c.b16 %v2656, %v2651
    %v3562 = vpack.c.b16 %v2662, %v2657
    %v3563 = vpack.c.b16 %v2663, %v2658
    %v3564 = vpack.c.b16 %v2664, %v2659
    %v3565 = vpack.c.b16 %v2665, %v2660
    %v3566 = vpack.c.b16 %v2666, %v2661
    %v3567 = vpack.c.b16 %v2672, %v2667
    %v3568 = vpack.c.b16 %v2673, %v2668
    %v3569 = vpack.c.b16 %v2674, %v2669
    %v3570 = vpack.c.b16 %v2675, %v2670
    %v3571 = vpack.c.b16 %v2676, %v2671
    %v3572 = vpack.c.b16 %v2682, %v2677
    %v3573 = vpack.c.b16 %v2683, %v2678
    %v3574 = vpack.c.b16 %v2684, %v2679
    %v3575 = vpack.c.b16 %v2685, %v2680
    %v3576 = vpack.c.b16 %v2686, %v2681
    %v3577 = vpack.c.b16 %v2692, %v2687
    %v3578 = vpack.c.b16 %v2693, %v2688
    %v3579 = vpack.c.b16 %v2694, %v2689
    %v3580 = vpack.c.b16 %v2695, %v2690
    %v3581 = vpack.c.b16 %v2696, %v2691
    %v3582 = vpack.c.b16 %v2702, %v2697
    %v3583 = vpack.c.b16 %v2703, %v2698
    %v3584 = vpack.c.b16 %v2704, %v2699
    %v3585 = vpack.c.b16 %v2705, %v2700
    %v3586 = vpack.c.b16 %v2706, %v2701
    %v3587 = vpack.c.b16 %v2712, %v2707
    %v3588 = vpack.c.b16 %v2713, %v2708
    %v3589 = vpack.c.b16 %v2714, %v2709
    %v3590 = vpack.c.b16 %v2715, %v2710
    %v3591 = vpack.c.b16 %v2716, %v2711
    %v3592 = vpack.c.b16 %v2722, %v2717
    %v3593 = vpack.c.b16 %v2723, %v2718
    %v3594 = vpack.c.b16 %v2724, %v2719
    %v3595 = vpack.c.b16 %v2725, %v2720
    %v3596 = vpack.c.b16 %v2726, %v2721
    %v3597 = vpack.c.b16 %v2732, %v2727
    %v3598 = vpack.c.b16 %v2733, %v2728
    %v3599 = vpack.c.b16 %v2734, %v2729
    %v3600 = vpack.c.b16 %v2735, %v2730
    %v3601 = vpack.c.b16 %v2736, %v2731
    %v3602 = vpack.c.b16 %v2742, %v2737
    %v3603 = vpack.c.b16 %v2743, %v2738
    %v3604 = vpack.c.b16 %v2744, %v2739
    %v3605 = vpack.c.b16 %v2745, %v2740
    %v3606 = vpack.c.b16 %v2746, %v2741
    %v3607 = vpack.c.b16 %v2752, %v2747
    %v3608 = vpack.c.b16 %v2753, %v2748
    %v3609 = vpack.c.b16 %v2754, %v2749
    %v3610 = vpack.c.b16 %v2755, %v2750
    %v3611 = vpack.c.b16 %v2756, %v2751
    %v3612 = vpack.c.b16 %v2762, %v2757
    %v3613 = vpack.c.b16 %v2763, %v2758
    %v3614 = vpack.c.b16 %v2764, %v2759
    %v3615 = vpack.c.b16 %v2765, %v2760
    %v3616 = vpack.c.b16 %v2766, %v2761
    %v3617 = vpack.c.b16 %v2772, %v2767
    %v3618 = vpack.c.b16 %v2773, %v2768
    %v3619 = vpack.c.b16 %v2774, %v2769
    %v3620 = vpack.c.b16 %v2775, %v2770
    %v3621 = vpack.c.b16 %v2776, %v2771
    %v3622 = vpack.c.b16 %v2782, %v2777
    %v3623 = vpack.c.b16 %v2783, %v2778
    %v3624 = vpack.c.b16 %v2784, %v2779
    %v3625 = vpack.c.b16 %v2785, %v2780
    %v3626 = vpack.c.b16 %v2786, %v2781
    %v3627 = vpack.c.b16 %v2792, %v2787
    %v3628 = vpack.c.b16 %v2793, %v2788
    %v3629 = vpack.c.b16 %v2794, %v2789
    %v3630 = vpack.c.b16 %v2795, %v2790
    %v3631 = vpack.c.b16 %v2796, %v2791
    %v3632 = vpack.c.b16 %v2802, %v2797
    %v3633 = vpack.c.b16 %v2803, %v2798
    %v3634 = vpack.c.b16 %v2804, %v2799
    %v3635 = vpack.c.b16 %v2805, %v2800
    %v3636 = vpack.c.b16 %v2806, %v2801
    %v3637 = vpack.c.b16 %v2812, %v2807
    %v3638 = vpack.c.b16 %v2813, %v2808
    %v3639 = vpack.c.b16 %v2814, %v2809
    %v3640 = vpack.c.b16 %v2815, %v2810
    %v3641 = vpack.c.b16 %v2816, %v2811
    %v3642 = vpack.c.b16 %v2822, %v2817
    %v3643 = vpack.c.b16 %v2823, %v2818
    %v3644 = vpack.c.b16 %v2824, %v2819
    %v3645 = vpack.c.b16 %v2825, %v2820
    %v3646 = vpack.c.b16 %v2826, %v2821
    %v3647 = vpack.c.b16 %v2832, %v2827
    %v3648 = vpack.c.b16 %v2833, %v2828
    %v3649 = vpack.c.b16 %v2834, %v2829
    %v3650 = vpack.c.b16 %v2835, %v2830
    %v3651 = vpack.c.b16 %v2836, %v2831
    %v3652 = vpack.c.b16 %v2842, %v2837
    %v3653 = vpack.c.b16 %v2843, %v2838
    %v3654 = vpack.c.b16 %v2844, %v2839
    %v3655 = vpack.c.b16 %v2845, %v2840
    %v3656 = vpack.c.b16 %v2846, %v2841
    %v3657 = vpack.c.b16 %v2852, %v2847
    %v3658 = vpack.c.b16 %v2853, %v2848
    %v3659 = vpack.c.b16 %v2854, %v2849
    %v3660 = vpack.c.b16 %v2855, %v2850
    %v3661 = vpack.c.b16 %v2856, %v2851
    %v3662 = vpack.c.b16 %v2862, %v2857
    %v3663 = vpack.c.b16 %v2863, %v2858
    %v3664 = vpack.c.b16 %v2864, %v2859
    %v3665 = vpack.c.b16 %v2865, %v2860
    %v3666 = vpack.c.b16 %v2866, %v2861
    %v3667 = vpack.c.b16 %v2872, %v2867
    %v3668 = vpack.c.b16 %v2873, %v2868
    %v3669 = vpack.c.b16 %v2874, %v2869
    %v3670 = vpack.c.b16 %v2875, %v2870
    %v3671 = vpack.c.b16 %v2876, %v2871
    %v3672 = vpack.c.b16 %v2882, %v2877
    %v3673 = vpack.c.b16 %v2883, %v2878
    %v3674 = vpack.c.b16 %v2884, %v2879
    %v3675 = vpack.c.b16 %v2885, %v2880
    %v3676 = vpack.c.b16 %v2886, %v2881
    %v3677 = vpack.c.b16 %v2892, %v2887
    %v3678 = vpack.c.b16 %v2893, %v2888
    %v3679 = vpack.c.b16 %v2894, %v2889
    %v3680 = vpack.c.b16 %v2895, %v2890
    %v3681 = vpack.c.b16 %v2896, %v2891
    %v3682 = vpack.c.b16 %v2902, %v2897
    %v3683 = vpack.c.b16 %v2903, %v2898
    %v3684 = vpack.c.b16 %v2904, %v2899
    %v3685 = vpack.c.b16 %v2905, %v2900
    %v3686 = vpack.c.b16 %v2906, %v2901
    %v3687 = vpack.c.b16 %v2912, %v2907
    %v3688 = vpack.c.b16 %v2913, %v2908
    %v3689 = vpack.c.b16 %v2914, %v2909
    %v3690 = vpack.c.b16 %v2915, %v2910
    %v3691 = vpack.c.b16 %v2916, %v2911
    %v3692 = vpack.c.b16 %v2922, %v2917
    %v3693 = vpack.c.b16 %v2923, %v2918
    %v3694 = vpack.c.b16 %v2924, %v2919
    %v3695 = vpack.c.b16 %v2925, %v2920
    %v3696 = vpack.c.b16 %v2926, %v2921
    %v3697 = vpack.c.b16 %v2932, %v2927
    %v3698 = vpack.c.b16 %v2933, %v2928
    %v3699 = vpack.c.b16 %v2934, %v2929
    %v3700 = vpack.c.b16 %v2935, %v2930
    %v3701 = vpack.c.b16 %v2936, %v2931
    %v3702 = vpack.c.b16 %v2942, %v2937
    %v3703 = vpack.c.b16 %v2943, %v2938
    %v3704 = vpack.c.b16 %v2944, %v2939
    %v3705 = vpack.c.b16 %v2945, %v2940
    %v3706 = vpack.c.b16 %v2946, %v2941
    %v3707 = vpack.c.b16 %v2952, %v2947
    %v3708 = vpack.c.b16 %v2953, %v2948
    %v3709 = vpack.c.b16 %v2954, %v2949
    %v3710 = vpack.c.b16 %v2955, %v2950
    %v3711 = vpack.c.b16 %v2956, %v2951
    %v3712 = vpack.c.b16 %v2962, %v2957
    %v3713 = vpack.c.b16 %v2963, %v2958
    %v3714 = vpack.c.b16 %v2964, %v2959
    %v3715 = vpack.c.b16 %v2965, %v2960
    %v3716 = vpack.c.b16 %v2966, %v2961
    %v3717 = vpack.c.b16 %v2972, %v2967
    %v3718 = vpack.c.b16 %v2973, %v2968
    %v3719 = vpack.c.b16 %v2974, %v2969
    %v3720 = vpack.c.b16 %v2975, %v2970
    %v3721 = vpack.c.b16 %v2976, %v2971
    %v3722 = vpack.c.b16 %v2982, %v2977
    %v3723 = vpack.c.b16 %v2983, %v2978
    %v3724 = vpack.c.b16 %v2984, %v2979
    %v3725 = vpack.c.b16 %v2985, %v2980
    %v3726 = vpack.c.b16 %v2986, %v2981
    %v3727 = vpack.c.b16 %v2992, %v2987
    %v3728 = vpack.c.b16 %v2993, %v2988
    %v3729 = vpack.c.b16 %v2994, %v2989
    %v3730 = vpack.c.b16 %v2995, %v2990
    %v3731 = vpack.c.b16 %v2996, %v2991
    %v3732 = vpack.c.b16 %v3002, %v2997
    %v3733 = vpack.c.b16 %v3003, %v2998
    %v3734 = vpack.c.b16 %v3004, %v2999
    %v3735 = vpack.c.b16 %v3005, %v3000
    %v3736 = vpack.c.b16 %v3006, %v3001
    %v3737 = vpack.c.b16 %v3012, %v3007
    %v3738 = vpack.c.b16 %v3013, %v3008
    %v3739 = vpack.c.b16 %v3014, %v3009
    %v3740 = vpack.c.b16 %v3015, %v3010
    %v3741 = vpack.c.b16 %v3016, %v3011
    %v3742 = vpack.c.b16 %v3022, %v3017
    %v3743 = vpack.c.b16 %v3023, %v3018
    %v3744 = vpack.c.b16 %v3024, %v3019
    %v3745 = vpack.c.b16 %v3025, %v3020
    %v3746 = vpack.c.b16 %v3026, %v3021
    %v3747 = vpack.c.b16 %v3032, %v3027
    %v3748 = vpack.c.b16 %v3033, %v3028
    %v3749 = vpack.c.b16 %v3034, %v3029
    %v3750 = vpack.c.b16 %v3035, %v3030
    %v3751 = vpack.c.b16 %v3036, %v3031
    %v3752 = vpack.c.b16 %v3042, %v3037
    %v3753 = vpack.c.b16 %v3043, %v3038
    %v3754 = vpack.c.b16 %v3044, %v3039
    %v3755 = vpack.c.b16 %v3045, %v3040
    %v3756 = vpack.c.b16 %v3046, %v3041
    %v3757 = vpack.c.b16 %v3052, %v3047
    %v3758 = vpack.c.b16 %v3053, %v3048
    %v3759 = vpack.c.b16 %v3054, %v3049
    %v3760 = vpack.c.b16 %v3055, %v3050
    %v3761 = vpack.c.b16 %v3056, %v3051
    %v3762 = vpack.c.b16 %v3062, %v3057
    %v3763 = vpack.c.b16 %v3063, %v3058
    %v3764 = vpack.c.b16 %v3064, %v3059
    %v3765 = vpack.c.b16 %v3065, %v3060
    %v3766 = vpack.c.b16 %v3066, %v3061
    %v3767 = vpack.c.b16 %v3072, %v3067
    %v3768 = vpack.c.b16 %v3073, %v3068
    %v3769 = vpack.c.b16 %v3074, %v3069
    %v3770 = vpack.c.b16 %v3075, %v3070
    %v3771 = vpack.c.b16 %v3076, %v3071
    %v3772 = vpack.c.b16 %v3082, %v3077
    %v3773 = vpack.c.b16 %v3083, %v3078
    %v3774 = vpack.c.b16 %v3084, %v3079
    %v3775 = vpack.c.b16 %v3085, %v3080
    %v3776 = vpack.c.b16 %v3086, %v3081
    %v3777 = vpack.c.b16 %v3092, %v3087
    %v3778 = vpack.c.b16 %v3093, %v3088
    %v3779 = vpack.c.b16 %v3094, %v3089
    %v3780 = vpack.c.b16 %v3095, %v3090
    %v3781 = vpack.c.b16 %v3096, %v3091
    %v3782 = vpack.c.b16 %v3102, %v3097
    %v3783 = vpack.c.b16 %v3103, %v3098
    %v3784 = vpack.c.b16 %v3104, %v3099
    %v3785 = vpack.c.b16 %v3105, %v3100
    %v3786 = vpack.c.b16 %v3106, %v3101
    %4467 = vmatpush.bf16.msra.mxu0 %v3142
    %4468 = vmatpush.bf16.msra.mxu0 %v3137
    %4469 = vmatpush.bf16.msra.mxu0 %v3132
    %4470 = vmatpush.bf16.msra.mxu0 %v3127
    %4471 = vmatpush.bf16.msra.mxu0 %v3122
    %4472 = vmatpush.bf16.msra.mxu0 %v3117
    %4473 = vmatpush.bf16.msra.mxu0 %v3112
    %4474 = vmatpush.bf16.msra.mxu0 %v3107
    %4475 = vmatmul.bf16.gmra.mxu0 %v897
    %v4476 = vpop.f32.mrf.mxu0
    %v4477 = vadd.f32 0.0, %v4476
    %v4478 = vpop.f32.mrf.mxu0
    %4479 = vdwg.mxu0
    %4480 = vmatpush.bf16.msra.mxu0 %v3182
    %4481 = vmatpush.bf16.msra.mxu0 %v3177
    %4482 = vmatpush.bf16.msra.mxu0 %v3172
    %4483 = vmatpush.bf16.msra.mxu0 %v3167
    %4484 = vmatpush.bf16.msra.mxu0 %v3162
    %4485 = vmatpush.bf16.msra.mxu0 %v3157
    %4486 = vmatpush.bf16.msra.mxu0 %v3152
    %4487 = vmatpush.bf16.msra.mxu0 %v3147
    %4488 = vmatmul.bf16.gmra.mxu0 %v898
    %v4489 = vpop.f32.mrf.mxu0
    %v4490 = vadd.f32 %v4477, %v4489
    %v4491 = vpop.f32.mrf.mxu0
    %4492 = vdwg.mxu0
    %4493 = vmatpush.bf16.msra.mxu0 %v3222
    %4494 = vmatpush.bf16.msra.mxu0 %v3217
    %4495 = vmatpush.bf16.msra.mxu0 %v3212
    %4496 = vmatpush.bf16.msra.mxu0 %v3207
    %4497 = vmatpush.bf16.msra.mxu0 %v3202
    %4498 = vmatpush.bf16.msra.mxu0 %v3197
    %4499 = vmatpush.bf16.msra.mxu0 %v3192
    %4500 = vmatpush.bf16.msra.mxu0 %v3187
    %4501 = vmatmul.bf16.gmra.mxu0 %v899
    %v4502 = vpop.f32.mrf.mxu0
    %v4503 = vadd.f32 %v4490, %v4502
    %v4504 = vpop.f32.mrf.mxu0
    %4505 = vdwg.mxu0
    %4506 = vmatpush.bf16.msra.mxu0 %v3262
    %4507 = vmatpush.bf16.msra.mxu0 %v3257
    %4508 = vmatpush.bf16.msra.mxu0 %v3252
    %4509 = vmatpush.bf16.msra.mxu0 %v3247
    %4510 = vmatpush.bf16.msra.mxu0 %v3242
    %4511 = vmatpush.bf16.msra.mxu0 %v3237
    %4512 = vmatpush.bf16.msra.mxu0 %v3232
    %4513 = vmatpush.bf16.msra.mxu0 %v3227
    %4514 = vmatmul.bf16.gmra.mxu0 %v900
    %v4515 = vpop.f32.mrf.mxu0
    %v4516 = vadd.f32 %v4503, %v4515
    %v4517 = vpop.f32.mrf.mxu0
    %4518 = vdwg.mxu0
    %4519 = vmatpush.bf16.msra.mxu0 %v3302
    %4520 = vmatpush.bf16.msra.mxu0 %v3297
    %4521 = vmatpush.bf16.msra.mxu0 %v3292
    %4522 = vmatpush.bf16.msra.mxu0 %v3287
    %4523 = vmatpush.bf16.msra.mxu0 %v3282
    %4524 = vmatpush.bf16.msra.mxu0 %v3277
    %4525 = vmatpush.bf16.msra.mxu0 %v3272
    %4526 = vmatpush.bf16.msra.mxu0 %v3267
    %4527 = vmatmul.bf16.gmra.mxu0 %v901
    %v4528 = vpop.f32.mrf.mxu0
    %v4529 = vadd.f32 %v4516, %v4528
    %v4530 = vpop.f32.mrf.mxu0
    %4531 = vdwg.mxu0
    %4532 = vmatpush.bf16.msra.mxu0 %v3342
    %4533 = vmatpush.bf16.msra.mxu0 %v3337
    %4534 = vmatpush.bf16.msra.mxu0 %v3332
    %4535 = vmatpush.bf16.msra.mxu0 %v3327
    %4536 = vmatpush.bf16.msra.mxu0 %v3322
    %4537 = vmatpush.bf16.msra.mxu0 %v3317
    %4538 = vmatpush.bf16.msra.mxu0 %v3312
    %4539 = vmatpush.bf16.msra.mxu0 %v3307
    %4540 = vmatmul.bf16.gmra.mxu0 %v902
    %v4541 = vpop.f32.mrf.mxu0
    %v4542 = vadd.f32 %v4529, %v4541
    %v4543 = vpop.f32.mrf.mxu0
    %4544 = vdwg.mxu0
    %4545 = vmatpush.bf16.msra.mxu0 %v3382
    %4546 = vmatpush.bf16.msra.mxu0 %v3377
    %4547 = vmatpush.bf16.msra.mxu0 %v3372
    %4548 = vmatpush.bf16.msra.mxu0 %v3367
    %4549 = vmatpush.bf16.msra.mxu0 %v3362
    %4550 = vmatpush.bf16.msra.mxu0 %v3357
    %4551 = vmatpush.bf16.msra.mxu0 %v3352
    %4552 = vmatpush.bf16.msra.mxu0 %v3347
    %4553 = vmatmul.bf16.gmra.mxu0 %v903
    %v4554 = vpop.f32.mrf.mxu0
    %v4555 = vadd.f32 %v4542, %v4554
    %v4556 = vpop.f32.mrf.mxu0
    %4557 = vdwg.mxu0
    %4558 = vmatpush.bf16.msra.mxu0 %v3422
    %4559 = vmatpush.bf16.msra.mxu0 %v3417
    %4560 = vmatpush.bf16.msra.mxu0 %v3412
    %4561 = vmatpush.bf16.msra.mxu0 %v3407
    %4562 = vmatpush.bf16.msra.mxu0 %v3402
    %4563 = vmatpush.bf16.msra.mxu0 %v3397
    %4564 = vmatpush.bf16.msra.mxu0 %v3392
    %4565 = vmatpush.bf16.msra.mxu0 %v3387
    %4566 = vmatmul.bf16.gmra.mxu0 %v904
    %v4567 = vpop.f32.mrf.mxu0
    %v4568 = vadd.f32 %v4555, %v4567
    %v4569 = vpop.f32.mrf.mxu0
    %4570 = vdwg.mxu0
    %4571 = vmatpush.bf16.msra.mxu0 %v3462
    %4572 = vmatpush.bf16.msra.mxu0 %v3457
    %4573 = vmatpush.bf16.msra.mxu0 %v3452
    %4574 = vmatpush.bf16.msra.mxu0 %v3447
    %4575 = vmatpush.bf16.msra.mxu0 %v3442
    %4576 = vmatpush.bf16.msra.mxu0 %v3437
    %4577 = vmatpush.bf16.msra.mxu0 %v3432
    %4578 = vmatpush.bf16.msra.mxu0 %v3427
    %4579 = vmatmul.bf16.gmra.mxu0 %v905
    %v4580 = vpop.f32.mrf.mxu0
    %v4581 = vadd.f32 %v4568, %v4580
    %v4582 = vpop.f32.mrf.mxu0
    %4583 = vdwg.mxu0
    %4584 = vmatpush.bf16.msra.mxu0 %v3502
    %4585 = vmatpush.bf16.msra.mxu0 %v3497
    %4586 = vmatpush.bf16.msra.mxu0 %v3492
    %4587 = vmatpush.bf16.msra.mxu0 %v3487
    %4588 = vmatpush.bf16.msra.mxu0 %v3482
    %4589 = vmatpush.bf16.msra.mxu0 %v3477
    %4590 = vmatpush.bf16.msra.mxu0 %v3472
    %4591 = vmatpush.bf16.msra.mxu0 %v3467
    %4592 = vmatmul.bf16.gmra.mxu0 %v906
    %v4593 = vpop.f32.mrf.mxu0
    %v4594 = vadd.f32 %v4581, %v4593
    %v4595 = vpop.f32.mrf.mxu0
    %4596 = vdwg.mxu0
    %4597 = vmatpush.bf16.msra.mxu0 %v3542
    %4598 = vmatpush.bf16.msra.mxu0 %v3537
    %4599 = vmatpush.bf16.msra.mxu0 %v3532
    %4600 = vmatpush.bf16.msra.mxu0 %v3527
    %4601 = vmatpush.bf16.msra.mxu0 %v3522
    %4602 = vmatpush.bf16.msra.mxu0 %v3517
    %4603 = vmatpush.bf16.msra.mxu0 %v3512
    %4604 = vmatpush.bf16.msra.mxu0 %v3507
    %4605 = vmatmul.bf16.gmra.mxu0 %v907
    %v4606 = vpop.f32.mrf.mxu0
    %v4607 = vadd.f32 %v4594, %v4606
    %v4608 = vpop.f32.mrf.mxu0
    %4609 = vdwg.mxu0
    %4610 = vmatpush.bf16.msra.mxu0 %v3582
    %4611 = vmatpush.bf16.msra.mxu0 %v3577
    %4612 = vmatpush.bf16.msra.mxu0 %v3572
    %4613 = vmatpush.bf16.msra.mxu0 %v3567
    %4614 = vmatpush.bf16.msra.mxu0 %v3562
    %4615 = vmatpush.bf16.msra.mxu0 %v3557
    %4616 = vmatpush.bf16.msra.mxu0 %v3552
    %4617 = vmatpush.bf16.msra.mxu0 %v3547
    %4618 = vmatmul.bf16.gmra.mxu0 %v908
    %v4619 = vpop.f32.mrf.mxu0
    %v4620 = vadd.f32 %v4607, %v4619
    %v4621 = vpop.f32.mrf.mxu0
    %4622 = vdwg.mxu0
    %4623 = vmatpush.bf16.msra.mxu0 %v3622
    %4624 = vmatpush.bf16.msra.mxu0 %v3617
    %4625 = vmatpush.bf16.msra.mxu0 %v3612
    %4626 = vmatpush.bf16.msra.mxu0 %v3607
    %4627 = vmatpush.bf16.msra.mxu0 %v3602
    %4628 = vmatpush.bf16.msra.mxu0 %v3597
    %4629 = vmatpush.bf16.msra.mxu0 %v3592
    %4630 = vmatpush.bf16.msra.mxu0 %v3587
    %4631 = vmatmul.bf16.gmra.mxu0 %v909
    %v4632 = vpop.f32.mrf.mxu0
    %v4633 = vadd.f32 %v4620, %v4632
    %v4634 = vpop.f32.mrf.mxu0
    %4635 = vdwg.mxu0
    %4636 = vmatpush.bf16.msra.mxu0 %v3662
    %4637 = vmatpush.bf16.msra.mxu0 %v3657
    %4638 = vmatpush.bf16.msra.mxu0 %v3652
    %4639 = vmatpush.bf16.msra.mxu0 %v3647
    %4640 = vmatpush.bf16.msra.mxu0 %v3642
    %4641 = vmatpush.bf16.msra.mxu0 %v3637
    %4642 = vmatpush.bf16.msra.mxu0 %v3632
    %4643 = vmatpush.bf16.msra.mxu0 %v3627
    %4644 = vmatmul.bf16.gmra.mxu0 %v910
    %v4645 = vpop.f32.mrf.mxu0
    %v4646 = vadd.f32 %v4633, %v4645
    %v4647 = vpop.f32.mrf.mxu0
    %4648 = vdwg.mxu0
    %4649 = vmatpush.bf16.msra.mxu0 %v3702
    %4650 = vmatpush.bf16.msra.mxu0 %v3697
    %4651 = vmatpush.bf16.msra.mxu0 %v3692
    %4652 = vmatpush.bf16.msra.mxu0 %v3687
    %4653 = vmatpush.bf16.msra.mxu0 %v3682
    %4654 = vmatpush.bf16.msra.mxu0 %v3677
    %4655 = vmatpush.bf16.msra.mxu0 %v3672
    %4656 = vmatpush.bf16.msra.mxu0 %v3667
    %4657 = vmatmul.bf16.gmra.mxu0 %v911
    %v4658 = vpop.f32.mrf.mxu0
    %v4659 = vadd.f32 %v4646, %v4658
    %v4660 = vpop.f32.mrf.mxu0
    %4661 = vdwg.mxu0
    %4662 = vmatpush.bf16.msra.mxu0 %v3742
    %4663 = vmatpush.bf16.msra.mxu0 %v3737
    %4664 = vmatpush.bf16.msra.mxu0 %v3732
    %4665 = vmatpush.bf16.msra.mxu0 %v3727
    %4666 = vmatpush.bf16.msra.mxu0 %v3722
    %4667 = vmatpush.bf16.msra.mxu0 %v3717
    %4668 = vmatpush.bf16.msra.mxu0 %v3712
    %4669 = vmatpush.bf16.msra.mxu0 %v3707
    %4670 = vmatmul.bf16.gmra.mxu0 %v912
    %v4671 = vpop.f32.mrf.mxu0
    %v4672 = vadd.f32 %v4659, %v4671
    %v4673 = vpop.f32.mrf.mxu0
    %4674 = vdwg.mxu0
    %4675 = vmatpush.bf16.msra.mxu0 %v3782
    %4676 = vmatpush.bf16.msra.mxu0 %v3777
    %4677 = vmatpush.bf16.msra.mxu0 %v3772
    %4678 = vmatpush.bf16.msra.mxu0 %v3767
    %4679 = vmatpush.bf16.msra.mxu0 %v3762
    %4680 = vmatpush.bf16.msra.mxu0 %v3757
    %4681 = vmatpush.bf16.msra.mxu0 %v3752
    %4682 = vmatpush.bf16.msra.mxu0 %v3747
    %4683 = vmatmul.bf16.gmra.mxu0 %v913
    %v4684 = vpop.f32.mrf.mxu0
    %v4685 = vadd.f32 %v4672, %v4684
    %v4686 = vpop.f32.mrf.mxu0
    %4687 = vdwg.mxu0
    %4688 = vmatpush.bf16.msra.mxu0 %v3143
    %4689 = vmatpush.bf16.msra.mxu0 %v3138
    %4690 = vmatpush.bf16.msra.mxu0 %v3133
    %4691 = vmatpush.bf16.msra.mxu0 %v3128
    %4692 = vmatpush.bf16.msra.mxu0 %v3123
    %4693 = vmatpush.bf16.msra.mxu0 %v3118
    %4694 = vmatpush.bf16.msra.mxu0 %v3113
    %4695 = vmatpush.bf16.msra.mxu0 %v3108
    %4696 = vmatmul.bf16.gmra.mxu0 %v897
    %v4697 = vpop.f32.mrf.mxu0
    %v4698 = vadd.f32 0.0, %v4697
    %v4699 = vpop.f32.mrf.mxu0
    %4700 = vdwg.mxu0
    %4701 = vmatpush.bf16.msra.mxu0 %v3183
    %4702 = vmatpush.bf16.msra.mxu0 %v3178
    %4703 = vmatpush.bf16.msra.mxu0 %v3173
    %4704 = vmatpush.bf16.msra.mxu0 %v3168
    %4705 = vmatpush.bf16.msra.mxu0 %v3163
    %4706 = vmatpush.bf16.msra.mxu0 %v3158
    %4707 = vmatpush.bf16.msra.mxu0 %v3153
    %4708 = vmatpush.bf16.msra.mxu0 %v3148
    %4709 = vmatmul.bf16.gmra.mxu0 %v898
    %v4710 = vpop.f32.mrf.mxu0
    %v4711 = vadd.f32 %v4698, %v4710
    %v4712 = vpop.f32.mrf.mxu0
    %4713 = vdwg.mxu0
    %4714 = vmatpush.bf16.msra.mxu0 %v3223
    %4715 = vmatpush.bf16.msra.mxu0 %v3218
    %4716 = vmatpush.bf16.msra.mxu0 %v3213
    %4717 = vmatpush.bf16.msra.mxu0 %v3208
    %4718 = vmatpush.bf16.msra.mxu0 %v3203
    %4719 = vmatpush.bf16.msra.mxu0 %v3198
    %4720 = vmatpush.bf16.msra.mxu0 %v3193
    %4721 = vmatpush.bf16.msra.mxu0 %v3188
    %4722 = vmatmul.bf16.gmra.mxu0 %v899
    %v4723 = vpop.f32.mrf.mxu0
    %v4724 = vadd.f32 %v4711, %v4723
    %v4725 = vpop.f32.mrf.mxu0
    %4726 = vdwg.mxu0
    %4727 = vmatpush.bf16.msra.mxu0 %v3263
    %4728 = vmatpush.bf16.msra.mxu0 %v3258
    %4729 = vmatpush.bf16.msra.mxu0 %v3253
    %4730 = vmatpush.bf16.msra.mxu0 %v3248
    %4731 = vmatpush.bf16.msra.mxu0 %v3243
    %4732 = vmatpush.bf16.msra.mxu0 %v3238
    %4733 = vmatpush.bf16.msra.mxu0 %v3233
    %4734 = vmatpush.bf16.msra.mxu0 %v3228
    %4735 = vmatmul.bf16.gmra.mxu0 %v900
    %v4736 = vpop.f32.mrf.mxu0
    %v4737 = vadd.f32 %v4724, %v4736
    %v4738 = vpop.f32.mrf.mxu0
    %4739 = vdwg.mxu0
    %4740 = vmatpush.bf16.msra.mxu0 %v3303
    %4741 = vmatpush.bf16.msra.mxu0 %v3298
    %4742 = vmatpush.bf16.msra.mxu0 %v3293
    %4743 = vmatpush.bf16.msra.mxu0 %v3288
    %4744 = vmatpush.bf16.msra.mxu0 %v3283
    %4745 = vmatpush.bf16.msra.mxu0 %v3278
    %4746 = vmatpush.bf16.msra.mxu0 %v3273
    %4747 = vmatpush.bf16.msra.mxu0 %v3268
    %4748 = vmatmul.bf16.gmra.mxu0 %v901
    %v4749 = vpop.f32.mrf.mxu0
    %v4750 = vadd.f32 %v4737, %v4749
    %v4751 = vpop.f32.mrf.mxu0
    %4752 = vdwg.mxu0
    %4753 = vmatpush.bf16.msra.mxu0 %v3343
    %4754 = vmatpush.bf16.msra.mxu0 %v3338
    %4755 = vmatpush.bf16.msra.mxu0 %v3333
    %4756 = vmatpush.bf16.msra.mxu0 %v3328
    %4757 = vmatpush.bf16.msra.mxu0 %v3323
    %4758 = vmatpush.bf16.msra.mxu0 %v3318
    %4759 = vmatpush.bf16.msra.mxu0 %v3313
    %4760 = vmatpush.bf16.msra.mxu0 %v3308
    %4761 = vmatmul.bf16.gmra.mxu0 %v902
    %v4762 = vpop.f32.mrf.mxu0
    %v4763 = vadd.f32 %v4750, %v4762
    %v4764 = vpop.f32.mrf.mxu0
    %4765 = vdwg.mxu0
    %4766 = vmatpush.bf16.msra.mxu0 %v3383
    %4767 = vmatpush.bf16.msra.mxu0 %v3378
    %4768 = vmatpush.bf16.msra.mxu0 %v3373
    %4769 = vmatpush.bf16.msra.mxu0 %v3368
    %4770 = vmatpush.bf16.msra.mxu0 %v3363
    %4771 = vmatpush.bf16.msra.mxu0 %v3358
    %4772 = vmatpush.bf16.msra.mxu0 %v3353
    %4773 = vmatpush.bf16.msra.mxu0 %v3348
    %4774 = vmatmul.bf16.gmra.mxu0 %v903
    %v4775 = vpop.f32.mrf.mxu0
    %v4776 = vadd.f32 %v4763, %v4775
    %v4777 = vpop.f32.mrf.mxu0
    %4778 = vdwg.mxu0
    %4779 = vmatpush.bf16.msra.mxu0 %v3423
    %4780 = vmatpush.bf16.msra.mxu0 %v3418
    %4781 = vmatpush.bf16.msra.mxu0 %v3413
    %4782 = vmatpush.bf16.msra.mxu0 %v3408
    %4783 = vmatpush.bf16.msra.mxu0 %v3403
    %4784 = vmatpush.bf16.msra.mxu0 %v3398
    %4785 = vmatpush.bf16.msra.mxu0 %v3393
    %4786 = vmatpush.bf16.msra.mxu0 %v3388
    %4787 = vmatmul.bf16.gmra.mxu0 %v904
    %v4788 = vpop.f32.mrf.mxu0
    %v4789 = vadd.f32 %v4776, %v4788
    %v4790 = vpop.f32.mrf.mxu0
    %4791 = vdwg.mxu0
    %4792 = vmatpush.bf16.msra.mxu0 %v3463
    %4793 = vmatpush.bf16.msra.mxu0 %v3458
    %4794 = vmatpush.bf16.msra.mxu0 %v3453
    %4795 = vmatpush.bf16.msra.mxu0 %v3448
    %4796 = vmatpush.bf16.msra.mxu0 %v3443
    %4797 = vmatpush.bf16.msra.mxu0 %v3438
    %4798 = vmatpush.bf16.msra.mxu0 %v3433
    %4799 = vmatpush.bf16.msra.mxu0 %v3428
    %4800 = vmatmul.bf16.gmra.mxu0 %v905
    %v4801 = vpop.f32.mrf.mxu0
    %v4802 = vadd.f32 %v4789, %v4801
    %v4803 = vpop.f32.mrf.mxu0
    %4804 = vdwg.mxu0
    %4805 = vmatpush.bf16.msra.mxu0 %v3503
    %4806 = vmatpush.bf16.msra.mxu0 %v3498
    %4807 = vmatpush.bf16.msra.mxu0 %v3493
    %4808 = vmatpush.bf16.msra.mxu0 %v3488
    %4809 = vmatpush.bf16.msra.mxu0 %v3483
    %4810 = vmatpush.bf16.msra.mxu0 %v3478
    %4811 = vmatpush.bf16.msra.mxu0 %v3473
    %4812 = vmatpush.bf16.msra.mxu0 %v3468
    %4813 = vmatmul.bf16.gmra.mxu0 %v906
    %v4814 = vpop.f32.mrf.mxu0
    %v4815 = vadd.f32 %v4802, %v4814
    %v4816 = vpop.f32.mrf.mxu0
    %4817 = vdwg.mxu0
    %4818 = vmatpush.bf16.msra.mxu0 %v3543
    %4819 = vmatpush.bf16.msra.mxu0 %v3538
    %4820 = vmatpush.bf16.msra.mxu0 %v3533
    %4821 = vmatpush.bf16.msra.mxu0 %v3528
    %4822 = vmatpush.bf16.msra.mxu0 %v3523
    %4823 = vmatpush.bf16.msra.mxu0 %v3518
    %4824 = vmatpush.bf16.msra.mxu0 %v3513
    %4825 = vmatpush.bf16.msra.mxu0 %v3508
    %4826 = vmatmul.bf16.gmra.mxu0 %v907
    %v4827 = vpop.f32.mrf.mxu0
    %v4828 = vadd.f32 %v4815, %v4827
    %v4829 = vpop.f32.mrf.mxu0
    %4830 = vdwg.mxu0
    %4831 = vmatpush.bf16.msra.mxu0 %v3583
    %4832 = vmatpush.bf16.msra.mxu0 %v3578
    %4833 = vmatpush.bf16.msra.mxu0 %v3573
    %4834 = vmatpush.bf16.msra.mxu0 %v3568
    %4835 = vmatpush.bf16.msra.mxu0 %v3563
    %4836 = vmatpush.bf16.msra.mxu0 %v3558
    %4837 = vmatpush.bf16.msra.mxu0 %v3553
    %4838 = vmatpush.bf16.msra.mxu0 %v3548
    %4839 = vmatmul.bf16.gmra.mxu0 %v908
    %v4840 = vpop.f32.mrf.mxu0
    %v4841 = vadd.f32 %v4828, %v4840
    %v4842 = vpop.f32.mrf.mxu0
    %4843 = vdwg.mxu0
    %4844 = vmatpush.bf16.msra.mxu0 %v3623
    %4845 = vmatpush.bf16.msra.mxu0 %v3618
    %4846 = vmatpush.bf16.msra.mxu0 %v3613
    %4847 = vmatpush.bf16.msra.mxu0 %v3608
    %4848 = vmatpush.bf16.msra.mxu0 %v3603
    %4849 = vmatpush.bf16.msra.mxu0 %v3598
    %4850 = vmatpush.bf16.msra.mxu0 %v3593
    %4851 = vmatpush.bf16.msra.mxu0 %v3588
    %4852 = vmatmul.bf16.gmra.mxu0 %v909
    %v4853 = vpop.f32.mrf.mxu0
    %v4854 = vadd.f32 %v4841, %v4853
    %v4855 = vpop.f32.mrf.mxu0
    %4856 = vdwg.mxu0
    %4857 = vmatpush.bf16.msra.mxu0 %v3663
    %4858 = vmatpush.bf16.msra.mxu0 %v3658
    %4859 = vmatpush.bf16.msra.mxu0 %v3653
    %4860 = vmatpush.bf16.msra.mxu0 %v3648
    %4861 = vmatpush.bf16.msra.mxu0 %v3643
    %4862 = vmatpush.bf16.msra.mxu0 %v3638
    %4863 = vmatpush.bf16.msra.mxu0 %v3633
    %4864 = vmatpush.bf16.msra.mxu0 %v3628
    %4865 = vmatmul.bf16.gmra.mxu0 %v910
    %v4866 = vpop.f32.mrf.mxu0
    %v4867 = vadd.f32 %v4854, %v4866
    %v4868 = vpop.f32.mrf.mxu0
    %4869 = vdwg.mxu0
    %4870 = vmatpush.bf16.msra.mxu0 %v3703
    %4871 = vmatpush.bf16.msra.mxu0 %v3698
    %4872 = vmatpush.bf16.msra.mxu0 %v3693
    %4873 = vmatpush.bf16.msra.mxu0 %v3688
    %4874 = vmatpush.bf16.msra.mxu0 %v3683
    %4875 = vmatpush.bf16.msra.mxu0 %v3678
    %4876 = vmatpush.bf16.msra.mxu0 %v3673
    %4877 = vmatpush.bf16.msra.mxu0 %v3668
    %4878 = vmatmul.bf16.gmra.mxu0 %v911
    %v4879 = vpop.f32.mrf.mxu0
    %v4880 = vadd.f32 %v4867, %v4879
    %v4881 = vpop.f32.mrf.mxu0
    %4882 = vdwg.mxu0
    %4883 = vmatpush.bf16.msra.mxu0 %v3743
    %4884 = vmatpush.bf16.msra.mxu0 %v3738
    %4885 = vmatpush.bf16.msra.mxu0 %v3733
    %4886 = vmatpush.bf16.msra.mxu0 %v3728
    %4887 = vmatpush.bf16.msra.mxu0 %v3723
    %4888 = vmatpush.bf16.msra.mxu0 %v3718
    %4889 = vmatpush.bf16.msra.mxu0 %v3713
    %4890 = vmatpush.bf16.msra.mxu0 %v3708
    %4891 = vmatmul.bf16.gmra.mxu0 %v912
    %v4892 = vpop.f32.mrf.mxu0
    %v4893 = vadd.f32 %v4880, %v4892
    %v4894 = vpop.f32.mrf.mxu0
    %4895 = vdwg.mxu0
    %4896 = vmatpush.bf16.msra.mxu0 %v3783
    %4897 = vmatpush.bf16.msra.mxu0 %v3778
    %4898 = vmatpush.bf16.msra.mxu0 %v3773
    %4899 = vmatpush.bf16.msra.mxu0 %v3768
    %4900 = vmatpush.bf16.msra.mxu0 %v3763
    %4901 = vmatpush.bf16.msra.mxu0 %v3758
    %4902 = vmatpush.bf16.msra.mxu0 %v3753
    %4903 = vmatpush.bf16.msra.mxu0 %v3748
    %4904 = vmatmul.bf16.gmra.mxu0 %v913
    %v4905 = vpop.f32.mrf.mxu0
    %v4906 = vadd.f32 %v4893, %v4905
    %v4907 = vpop.f32.mrf.mxu0
    %4908 = vdwg.mxu0
    %4909 = vmatpush.bf16.msra.mxu0 %v3144
    %4910 = vmatpush.bf16.msra.mxu0 %v3139
    %4911 = vmatpush.bf16.msra.mxu0 %v3134
    %4912 = vmatpush.bf16.msra.mxu0 %v3129
    %4913 = vmatpush.bf16.msra.mxu0 %v3124
    %4914 = vmatpush.bf16.msra.mxu0 %v3119
    %4915 = vmatpush.bf16.msra.mxu0 %v3114
    %4916 = vmatpush.bf16.msra.mxu0 %v3109
    %4917 = vmatmul.bf16.gmra.mxu0 %v897
    %v4918 = vpop.f32.mrf.mxu0
    %v4919 = vadd.f32 0.0, %v4918
    %v4920 = vpop.f32.mrf.mxu0
    %4921 = vdwg.mxu0
    %4922 = vmatpush.bf16.msra.mxu0 %v3184
    %4923 = vmatpush.bf16.msra.mxu0 %v3179
    %4924 = vmatpush.bf16.msra.mxu0 %v3174
    %4925 = vmatpush.bf16.msra.mxu0 %v3169
    %4926 = vmatpush.bf16.msra.mxu0 %v3164
    %4927 = vmatpush.bf16.msra.mxu0 %v3159
    %4928 = vmatpush.bf16.msra.mxu0 %v3154
    %4929 = vmatpush.bf16.msra.mxu0 %v3149
    %4930 = vmatmul.bf16.gmra.mxu0 %v898
    %v4931 = vpop.f32.mrf.mxu0
    %v4932 = vadd.f32 %v4919, %v4931
    %v4933 = vpop.f32.mrf.mxu0
    %4934 = vdwg.mxu0
    %4935 = vmatpush.bf16.msra.mxu0 %v3224
    %4936 = vmatpush.bf16.msra.mxu0 %v3219
    %4937 = vmatpush.bf16.msra.mxu0 %v3214
    %4938 = vmatpush.bf16.msra.mxu0 %v3209
    %4939 = vmatpush.bf16.msra.mxu0 %v3204
    %4940 = vmatpush.bf16.msra.mxu0 %v3199
    %4941 = vmatpush.bf16.msra.mxu0 %v3194
    %4942 = vmatpush.bf16.msra.mxu0 %v3189
    %4943 = vmatmul.bf16.gmra.mxu0 %v899
    %v4944 = vpop.f32.mrf.mxu0
    %v4945 = vadd.f32 %v4932, %v4944
    %v4946 = vpop.f32.mrf.mxu0
    %4947 = vdwg.mxu0
    %4948 = vmatpush.bf16.msra.mxu0 %v3264
    %4949 = vmatpush.bf16.msra.mxu0 %v3259
    %4950 = vmatpush.bf16.msra.mxu0 %v3254
    %4951 = vmatpush.bf16.msra.mxu0 %v3249
    %4952 = vmatpush.bf16.msra.mxu0 %v3244
    %4953 = vmatpush.bf16.msra.mxu0 %v3239
    %4954 = vmatpush.bf16.msra.mxu0 %v3234
    %4955 = vmatpush.bf16.msra.mxu0 %v3229
    %4956 = vmatmul.bf16.gmra.mxu0 %v900
    %v4957 = vpop.f32.mrf.mxu0
    %v4958 = vadd.f32 %v4945, %v4957
    %v4959 = vpop.f32.mrf.mxu0
    %4960 = vdwg.mxu0
    %4961 = vmatpush.bf16.msra.mxu0 %v3304
    %4962 = vmatpush.bf16.msra.mxu0 %v3299
    %4963 = vmatpush.bf16.msra.mxu0 %v3294
    %4964 = vmatpush.bf16.msra.mxu0 %v3289
    %4965 = vmatpush.bf16.msra.mxu0 %v3284
    %4966 = vmatpush.bf16.msra.mxu0 %v3279
    %4967 = vmatpush.bf16.msra.mxu0 %v3274
    %4968 = vmatpush.bf16.msra.mxu0 %v3269
    %4969 = vmatmul.bf16.gmra.mxu0 %v901
    %v4970 = vpop.f32.mrf.mxu0
    %v4971 = vadd.f32 %v4958, %v4970
    %v4972 = vpop.f32.mrf.mxu0
    %4973 = vdwg.mxu0
    %4974 = vmatpush.bf16.msra.mxu0 %v3344
    %4975 = vmatpush.bf16.msra.mxu0 %v3339
    %4976 = vmatpush.bf16.msra.mxu0 %v3334
    %4977 = vmatpush.bf16.msra.mxu0 %v3329
    %4978 = vmatpush.bf16.msra.mxu0 %v3324
    %4979 = vmatpush.bf16.msra.mxu0 %v3319
    %4980 = vmatpush.bf16.msra.mxu0 %v3314
    %4981 = vmatpush.bf16.msra.mxu0 %v3309
    %4982 = vmatmul.bf16.gmra.mxu0 %v902
    %v4983 = vpop.f32.mrf.mxu0
    %v4984 = vadd.f32 %v4971, %v4983
    %v4985 = vpop.f32.mrf.mxu0
    %4986 = vdwg.mxu0
    %4987 = vmatpush.bf16.msra.mxu0 %v3384
    %4988 = vmatpush.bf16.msra.mxu0 %v3379
    %4989 = vmatpush.bf16.msra.mxu0 %v3374
    %4990 = vmatpush.bf16.msra.mxu0 %v3369
    %4991 = vmatpush.bf16.msra.mxu0 %v3364
    %4992 = vmatpush.bf16.msra.mxu0 %v3359
    %4993 = vmatpush.bf16.msra.mxu0 %v3354
    %4994 = vmatpush.bf16.msra.mxu0 %v3349
    %4995 = vmatmul.bf16.gmra.mxu0 %v903
    %v4996 = vpop.f32.mrf.mxu0
    %v4997 = vadd.f32 %v4984, %v4996
    %v4998 = vpop.f32.mrf.mxu0
    %4999 = vdwg.mxu0
    %5000 = vmatpush.bf16.msra.mxu0 %v3424
    %5001 = vmatpush.bf16.msra.mxu0 %v3419
    %5002 = vmatpush.bf16.msra.mxu0 %v3414
    %5003 = vmatpush.bf16.msra.mxu0 %v3409
    %5004 = vmatpush.bf16.msra.mxu0 %v3404
    %5005 = vmatpush.bf16.msra.mxu0 %v3399
    %5006 = vmatpush.bf16.msra.mxu0 %v3394
    %5007 = vmatpush.bf16.msra.mxu0 %v3389
    %5008 = vmatmul.bf16.gmra.mxu0 %v904
    %v5009 = vpop.f32.mrf.mxu0
    %v5010 = vadd.f32 %v4997, %v5009
    %v5011 = vpop.f32.mrf.mxu0
    %5012 = vdwg.mxu0
    %5013 = vmatpush.bf16.msra.mxu0 %v3464
    %5014 = vmatpush.bf16.msra.mxu0 %v3459
    %5015 = vmatpush.bf16.msra.mxu0 %v3454
    %5016 = vmatpush.bf16.msra.mxu0 %v3449
    %5017 = vmatpush.bf16.msra.mxu0 %v3444
    %5018 = vmatpush.bf16.msra.mxu0 %v3439
    %5019 = vmatpush.bf16.msra.mxu0 %v3434
    %5020 = vmatpush.bf16.msra.mxu0 %v3429
    %5021 = vmatmul.bf16.gmra.mxu0 %v905
    %v5022 = vpop.f32.mrf.mxu0
    %v5023 = vadd.f32 %v5010, %v5022
    %v5024 = vpop.f32.mrf.mxu0
    %5025 = vdwg.mxu0
    %5026 = vmatpush.bf16.msra.mxu0 %v3504
    %5027 = vmatpush.bf16.msra.mxu0 %v3499
    %5028 = vmatpush.bf16.msra.mxu0 %v3494
    %5029 = vmatpush.bf16.msra.mxu0 %v3489
    %5030 = vmatpush.bf16.msra.mxu0 %v3484
    %5031 = vmatpush.bf16.msra.mxu0 %v3479
    %5032 = vmatpush.bf16.msra.mxu0 %v3474
    %5033 = vmatpush.bf16.msra.mxu0 %v3469
    %5034 = vmatmul.bf16.gmra.mxu0 %v906
    %v5035 = vpop.f32.mrf.mxu0
    %v5036 = vadd.f32 %v5023, %v5035
    %v5037 = vpop.f32.mrf.mxu0
    %5038 = vdwg.mxu0
    %5039 = vmatpush.bf16.msra.mxu0 %v3544
    %5040 = vmatpush.bf16.msra.mxu0 %v3539
    %5041 = vmatpush.bf16.msra.mxu0 %v3534
    %5042 = vmatpush.bf16.msra.mxu0 %v3529
    %5043 = vmatpush.bf16.msra.mxu0 %v3524
    %5044 = vmatpush.bf16.msra.mxu0 %v3519
    %5045 = vmatpush.bf16.msra.mxu0 %v3514
    %5046 = vmatpush.bf16.msra.mxu0 %v3509
    %5047 = vmatmul.bf16.gmra.mxu0 %v907
    %v5048 = vpop.f32.mrf.mxu0
    %v5049 = vadd.f32 %v5036, %v5048
    %v5050 = vpop.f32.mrf.mxu0
    %5051 = vdwg.mxu0
    %5052 = vmatpush.bf16.msra.mxu0 %v3584
    %5053 = vmatpush.bf16.msra.mxu0 %v3579
    %5054 = vmatpush.bf16.msra.mxu0 %v3574
    %5055 = vmatpush.bf16.msra.mxu0 %v3569
    %5056 = vmatpush.bf16.msra.mxu0 %v3564
    %5057 = vmatpush.bf16.msra.mxu0 %v3559
    %5058 = vmatpush.bf16.msra.mxu0 %v3554
    %5059 = vmatpush.bf16.msra.mxu0 %v3549
    %5060 = vmatmul.bf16.gmra.mxu0 %v908
    %v5061 = vpop.f32.mrf.mxu0
    %v5062 = vadd.f32 %v5049, %v5061
    %v5063 = vpop.f32.mrf.mxu0
    %5064 = vdwg.mxu0
    %5065 = vmatpush.bf16.msra.mxu0 %v3624
    %5066 = vmatpush.bf16.msra.mxu0 %v3619
    %5067 = vmatpush.bf16.msra.mxu0 %v3614
    %5068 = vmatpush.bf16.msra.mxu0 %v3609
    %5069 = vmatpush.bf16.msra.mxu0 %v3604
    %5070 = vmatpush.bf16.msra.mxu0 %v3599
    %5071 = vmatpush.bf16.msra.mxu0 %v3594
    %5072 = vmatpush.bf16.msra.mxu0 %v3589
    %5073 = vmatmul.bf16.gmra.mxu0 %v909
    %v5074 = vpop.f32.mrf.mxu0
    %v5075 = vadd.f32 %v5062, %v5074
    %v5076 = vpop.f32.mrf.mxu0
    %5077 = vdwg.mxu0
    %5078 = vmatpush.bf16.msra.mxu0 %v3664
    %5079 = vmatpush.bf16.msra.mxu0 %v3659
    %5080 = vmatpush.bf16.msra.mxu0 %v3654
    %5081 = vmatpush.bf16.msra.mxu0 %v3649
    %5082 = vmatpush.bf16.msra.mxu0 %v3644
    %5083 = vmatpush.bf16.msra.mxu0 %v3639
    %5084 = vmatpush.bf16.msra.mxu0 %v3634
    %5085 = vmatpush.bf16.msra.mxu0 %v3629
    %5086 = vmatmul.bf16.gmra.mxu0 %v910
    %v5087 = vpop.f32.mrf.mxu0
    %v5088 = vadd.f32 %v5075, %v5087
    %v5089 = vpop.f32.mrf.mxu0
    %5090 = vdwg.mxu0
    %5091 = vmatpush.bf16.msra.mxu0 %v3704
    %5092 = vmatpush.bf16.msra.mxu0 %v3699
    %5093 = vmatpush.bf16.msra.mxu0 %v3694
    %5094 = vmatpush.bf16.msra.mxu0 %v3689
    %5095 = vmatpush.bf16.msra.mxu0 %v3684
    %5096 = vmatpush.bf16.msra.mxu0 %v3679
    %5097 = vmatpush.bf16.msra.mxu0 %v3674
    %5098 = vmatpush.bf16.msra.mxu0 %v3669
    %5099 = vmatmul.bf16.gmra.mxu0 %v911
    %v5100 = vpop.f32.mrf.mxu0
    %v5101 = vadd.f32 %v5088, %v5100
    %v5102 = vpop.f32.mrf.mxu0
    %5103 = vdwg.mxu0
    %5104 = vmatpush.bf16.msra.mxu0 %v3744
    %5105 = vmatpush.bf16.msra.mxu0 %v3739
    %5106 = vmatpush.bf16.msra.mxu0 %v3734
    %5107 = vmatpush.bf16.msra.mxu0 %v3729
    %5108 = vmatpush.bf16.msra.mxu0 %v3724
    %5109 = vmatpush.bf16.msra.mxu0 %v3719
    %5110 = vmatpush.bf16.msra.mxu0 %v3714
    %5111 = vmatpush.bf16.msra.mxu0 %v3709
    %5112 = vmatmul.bf16.gmra.mxu0 %v912
    %v5113 = vpop.f32.mrf.mxu0
    %v5114 = vadd.f32 %v5101, %v5113
    %v5115 = vpop.f32.mrf.mxu0
    %5116 = vdwg.mxu0
    %5117 = vmatpush.bf16.msra.mxu0 %v3784
    %5118 = vmatpush.bf16.msra.mxu0 %v3779
    %5119 = vmatpush.bf16.msra.mxu0 %v3774
    %5120 = vmatpush.bf16.msra.mxu0 %v3769
    %5121 = vmatpush.bf16.msra.mxu0 %v3764
    %5122 = vmatpush.bf16.msra.mxu0 %v3759
    %5123 = vmatpush.bf16.msra.mxu0 %v3754
    %5124 = vmatpush.bf16.msra.mxu0 %v3749
    %5125 = vmatmul.bf16.gmra.mxu0 %v913
    %v5126 = vpop.f32.mrf.mxu0
    %v5127 = vadd.f32 %v5114, %v5126
    %v5128 = vpop.f32.mrf.mxu0
    %5129 = vdwg.mxu0
    %5130 = vmatpush.bf16.msra.mxu0 %v3145
    %5131 = vmatpush.bf16.msra.mxu0 %v3140
    %5132 = vmatpush.bf16.msra.mxu0 %v3135
    %5133 = vmatpush.bf16.msra.mxu0 %v3130
    %5134 = vmatpush.bf16.msra.mxu0 %v3125
    %5135 = vmatpush.bf16.msra.mxu0 %v3120
    %5136 = vmatpush.bf16.msra.mxu0 %v3115
    %5137 = vmatpush.bf16.msra.mxu0 %v3110
    %5138 = vmatmul.bf16.gmra.mxu0 %v897
    %v5139 = vpop.f32.mrf.mxu0
    %v5140 = vadd.f32 0.0, %v5139
    %v5141 = vpop.f32.mrf.mxu0
    %5142 = vdwg.mxu0
    %5143 = vmatpush.bf16.msra.mxu0 %v3185
    %5144 = vmatpush.bf16.msra.mxu0 %v3180
    %5145 = vmatpush.bf16.msra.mxu0 %v3175
    %5146 = vmatpush.bf16.msra.mxu0 %v3170
    %5147 = vmatpush.bf16.msra.mxu0 %v3165
    %5148 = vmatpush.bf16.msra.mxu0 %v3160
    %5149 = vmatpush.bf16.msra.mxu0 %v3155
    %5150 = vmatpush.bf16.msra.mxu0 %v3150
    %5151 = vmatmul.bf16.gmra.mxu0 %v898
    %v5152 = vpop.f32.mrf.mxu0
    %v5153 = vadd.f32 %v5140, %v5152
    %v5154 = vpop.f32.mrf.mxu0
    %5155 = vdwg.mxu0
    %5156 = vmatpush.bf16.msra.mxu0 %v3225
    %5157 = vmatpush.bf16.msra.mxu0 %v3220
    %5158 = vmatpush.bf16.msra.mxu0 %v3215
    %5159 = vmatpush.bf16.msra.mxu0 %v3210
    %5160 = vmatpush.bf16.msra.mxu0 %v3205
    %5161 = vmatpush.bf16.msra.mxu0 %v3200
    %5162 = vmatpush.bf16.msra.mxu0 %v3195
    %5163 = vmatpush.bf16.msra.mxu0 %v3190
    %5164 = vmatmul.bf16.gmra.mxu0 %v899
    %v5165 = vpop.f32.mrf.mxu0
    %v5166 = vadd.f32 %v5153, %v5165
    %v5167 = vpop.f32.mrf.mxu0
    %5168 = vdwg.mxu0
    %5169 = vmatpush.bf16.msra.mxu0 %v3265
    %5170 = vmatpush.bf16.msra.mxu0 %v3260
    %5171 = vmatpush.bf16.msra.mxu0 %v3255
    %5172 = vmatpush.bf16.msra.mxu0 %v3250
    %5173 = vmatpush.bf16.msra.mxu0 %v3245
    %5174 = vmatpush.bf16.msra.mxu0 %v3240
    %5175 = vmatpush.bf16.msra.mxu0 %v3235
    %5176 = vmatpush.bf16.msra.mxu0 %v3230
    %5177 = vmatmul.bf16.gmra.mxu0 %v900
    %v5178 = vpop.f32.mrf.mxu0
    %v5179 = vadd.f32 %v5166, %v5178
    %v5180 = vpop.f32.mrf.mxu0
    %5181 = vdwg.mxu0
    %5182 = vmatpush.bf16.msra.mxu0 %v3305
    %5183 = vmatpush.bf16.msra.mxu0 %v3300
    %5184 = vmatpush.bf16.msra.mxu0 %v3295
    %5185 = vmatpush.bf16.msra.mxu0 %v3290
    %5186 = vmatpush.bf16.msra.mxu0 %v3285
    %5187 = vmatpush.bf16.msra.mxu0 %v3280
    %5188 = vmatpush.bf16.msra.mxu0 %v3275
    %5189 = vmatpush.bf16.msra.mxu0 %v3270
    %5190 = vmatmul.bf16.gmra.mxu0 %v901
    %v5191 = vpop.f32.mrf.mxu0
    %v5192 = vadd.f32 %v5179, %v5191
    %v5193 = vpop.f32.mrf.mxu0
    %5194 = vdwg.mxu0
    %5195 = vmatpush.bf16.msra.mxu0 %v3345
    %5196 = vmatpush.bf16.msra.mxu0 %v3340
    %5197 = vmatpush.bf16.msra.mxu0 %v3335
    %5198 = vmatpush.bf16.msra.mxu0 %v3330
    %5199 = vmatpush.bf16.msra.mxu0 %v3325
    %5200 = vmatpush.bf16.msra.mxu0 %v3320
    %5201 = vmatpush.bf16.msra.mxu0 %v3315
    %5202 = vmatpush.bf16.msra.mxu0 %v3310
    %5203 = vmatmul.bf16.gmra.mxu0 %v902
    %v5204 = vpop.f32.mrf.mxu0
    %v5205 = vadd.f32 %v5192, %v5204
    %v5206 = vpop.f32.mrf.mxu0
    %5207 = vdwg.mxu0
    %5208 = vmatpush.bf16.msra.mxu0 %v3385
    %5209 = vmatpush.bf16.msra.mxu0 %v3380
    %5210 = vmatpush.bf16.msra.mxu0 %v3375
    %5211 = vmatpush.bf16.msra.mxu0 %v3370
    %5212 = vmatpush.bf16.msra.mxu0 %v3365
    %5213 = vmatpush.bf16.msra.mxu0 %v3360
    %5214 = vmatpush.bf16.msra.mxu0 %v3355
    %5215 = vmatpush.bf16.msra.mxu0 %v3350
    %5216 = vmatmul.bf16.gmra.mxu0 %v903
    %v5217 = vpop.f32.mrf.mxu0
    %v5218 = vadd.f32 %v5205, %v5217
    %v5219 = vpop.f32.mrf.mxu0
    %5220 = vdwg.mxu0
    %5221 = vmatpush.bf16.msra.mxu0 %v3425
    %5222 = vmatpush.bf16.msra.mxu0 %v3420
    %5223 = vmatpush.bf16.msra.mxu0 %v3415
    %5224 = vmatpush.bf16.msra.mxu0 %v3410
    %5225 = vmatpush.bf16.msra.mxu0 %v3405
    %5226 = vmatpush.bf16.msra.mxu0 %v3400
    %5227 = vmatpush.bf16.msra.mxu0 %v3395
    %5228 = vmatpush.bf16.msra.mxu0 %v3390
    %5229 = vmatmul.bf16.gmra.mxu0 %v904
    %v5230 = vpop.f32.mrf.mxu0
    %v5231 = vadd.f32 %v5218, %v5230
    %v5232 = vpop.f32.mrf.mxu0
    %5233 = vdwg.mxu0
    %5234 = vmatpush.bf16.msra.mxu0 %v3465
    %5235 = vmatpush.bf16.msra.mxu0 %v3460
    %5236 = vmatpush.bf16.msra.mxu0 %v3455
    %5237 = vmatpush.bf16.msra.mxu0 %v3450
    %5238 = vmatpush.bf16.msra.mxu0 %v3445
    %5239 = vmatpush.bf16.msra.mxu0 %v3440
    %5240 = vmatpush.bf16.msra.mxu0 %v3435
    %5241 = vmatpush.bf16.msra.mxu0 %v3430
    %5242 = vmatmul.bf16.gmra.mxu0 %v905
    %v5243 = vpop.f32.mrf.mxu0
    %v5244 = vadd.f32 %v5231, %v5243
    %v5245 = vpop.f32.mrf.mxu0
    %5246 = vdwg.mxu0
    %5247 = vmatpush.bf16.msra.mxu0 %v3505
    %5248 = vmatpush.bf16.msra.mxu0 %v3500
    %5249 = vmatpush.bf16.msra.mxu0 %v3495
    %5250 = vmatpush.bf16.msra.mxu0 %v3490
    %5251 = vmatpush.bf16.msra.mxu0 %v3485
    %5252 = vmatpush.bf16.msra.mxu0 %v3480
    %5253 = vmatpush.bf16.msra.mxu0 %v3475
    %5254 = vmatpush.bf16.msra.mxu0 %v3470
    %5255 = vmatmul.bf16.gmra.mxu0 %v906
    %v5256 = vpop.f32.mrf.mxu0
    %v5257 = vadd.f32 %v5244, %v5256
    %v5258 = vpop.f32.mrf.mxu0
    %5259 = vdwg.mxu0
    %5260 = vmatpush.bf16.msra.mxu0 %v3545
    %5261 = vmatpush.bf16.msra.mxu0 %v3540
    %5262 = vmatpush.bf16.msra.mxu0 %v3535
    %5263 = vmatpush.bf16.msra.mxu0 %v3530
    %5264 = vmatpush.bf16.msra.mxu0 %v3525
    %5265 = vmatpush.bf16.msra.mxu0 %v3520
    %5266 = vmatpush.bf16.msra.mxu0 %v3515
    %5267 = vmatpush.bf16.msra.mxu0 %v3510
    %5268 = vmatmul.bf16.gmra.mxu0 %v907
    %v5269 = vpop.f32.mrf.mxu0
    %v5270 = vadd.f32 %v5257, %v5269
    %v5271 = vpop.f32.mrf.mxu0
    %5272 = vdwg.mxu0
    %5273 = vmatpush.bf16.msra.mxu0 %v3585
    %5274 = vmatpush.bf16.msra.mxu0 %v3580
    %5275 = vmatpush.bf16.msra.mxu0 %v3575
    %5276 = vmatpush.bf16.msra.mxu0 %v3570
    %5277 = vmatpush.bf16.msra.mxu0 %v3565
    %5278 = vmatpush.bf16.msra.mxu0 %v3560
    %5279 = vmatpush.bf16.msra.mxu0 %v3555
    %5280 = vmatpush.bf16.msra.mxu0 %v3550
    %5281 = vmatmul.bf16.gmra.mxu0 %v908
    %v5282 = vpop.f32.mrf.mxu0
    %v5283 = vadd.f32 %v5270, %v5282
    %v5284 = vpop.f32.mrf.mxu0
    %5285 = vdwg.mxu0
    %5286 = vmatpush.bf16.msra.mxu0 %v3625
    %5287 = vmatpush.bf16.msra.mxu0 %v3620
    %5288 = vmatpush.bf16.msra.mxu0 %v3615
    %5289 = vmatpush.bf16.msra.mxu0 %v3610
    %5290 = vmatpush.bf16.msra.mxu0 %v3605
    %5291 = vmatpush.bf16.msra.mxu0 %v3600
    %5292 = vmatpush.bf16.msra.mxu0 %v3595
    %5293 = vmatpush.bf16.msra.mxu0 %v3590
    %5294 = vmatmul.bf16.gmra.mxu0 %v909
    %v5295 = vpop.f32.mrf.mxu0
    %v5296 = vadd.f32 %v5283, %v5295
    %v5297 = vpop.f32.mrf.mxu0
    %5298 = vdwg.mxu0
    %5299 = vmatpush.bf16.msra.mxu0 %v3665
    %5300 = vmatpush.bf16.msra.mxu0 %v3660
    %5301 = vmatpush.bf16.msra.mxu0 %v3655
    %5302 = vmatpush.bf16.msra.mxu0 %v3650
    %5303 = vmatpush.bf16.msra.mxu0 %v3645
    %5304 = vmatpush.bf16.msra.mxu0 %v3640
    %5305 = vmatpush.bf16.msra.mxu0 %v3635
    %5306 = vmatpush.bf16.msra.mxu0 %v3630
    %5307 = vmatmul.bf16.gmra.mxu0 %v910
    %v5308 = vpop.f32.mrf.mxu0
    %v5309 = vadd.f32 %v5296, %v5308
    %v5310 = vpop.f32.mrf.mxu0
    %5311 = vdwg.mxu0
    %5312 = vmatpush.bf16.msra.mxu0 %v3705
    %5313 = vmatpush.bf16.msra.mxu0 %v3700
    %5314 = vmatpush.bf16.msra.mxu0 %v3695
    %5315 = vmatpush.bf16.msra.mxu0 %v3690
    %5316 = vmatpush.bf16.msra.mxu0 %v3685
    %5317 = vmatpush.bf16.msra.mxu0 %v3680
    %5318 = vmatpush.bf16.msra.mxu0 %v3675
    %5319 = vmatpush.bf16.msra.mxu0 %v3670
    %5320 = vmatmul.bf16.gmra.mxu0 %v911
    %v5321 = vpop.f32.mrf.mxu0
    %v5322 = vadd.f32 %v5309, %v5321
    %v5323 = vpop.f32.mrf.mxu0
    %5324 = vdwg.mxu0
    %5325 = vmatpush.bf16.msra.mxu0 %v3745
    %5326 = vmatpush.bf16.msra.mxu0 %v3740
    %5327 = vmatpush.bf16.msra.mxu0 %v3735
    %5328 = vmatpush.bf16.msra.mxu0 %v3730
    %5329 = vmatpush.bf16.msra.mxu0 %v3725
    %5330 = vmatpush.bf16.msra.mxu0 %v3720
    %5331 = vmatpush.bf16.msra.mxu0 %v3715
    %5332 = vmatpush.bf16.msra.mxu0 %v3710
    %5333 = vmatmul.bf16.gmra.mxu0 %v912
    %v5334 = vpop.f32.mrf.mxu0
    %v5335 = vadd.f32 %v5322, %v5334
    %v5336 = vpop.f32.mrf.mxu0
    %5337 = vdwg.mxu0
    %5338 = vmatpush.bf16.msra.mxu0 %v3785
    %5339 = vmatpush.bf16.msra.mxu0 %v3780
    %5340 = vmatpush.bf16.msra.mxu0 %v3775
    %5341 = vmatpush.bf16.msra.mxu0 %v3770
    %5342 = vmatpush.bf16.msra.mxu0 %v3765
    %5343 = vmatpush.bf16.msra.mxu0 %v3760
    %5344 = vmatpush.bf16.msra.mxu0 %v3755
    %5345 = vmatpush.bf16.msra.mxu0 %v3750
    %5346 = vmatmul.bf16.gmra.mxu0 %v913
    %v5347 = vpop.f32.mrf.mxu0
    %v5348 = vadd.f32 %v5335, %v5347
    %v5349 = vpop.f32.mrf.mxu0
    %5350 = vdwg.mxu0
    %5351 = vmatpush.bf16.msra.mxu0 %v3146
    %5352 = vmatpush.bf16.msra.mxu0 %v3141
    %5353 = vmatpush.bf16.msra.mxu0 %v3136
    %5354 = vmatpush.bf16.msra.mxu0 %v3131
    %5355 = vmatpush.bf16.msra.mxu0 %v3126
    %5356 = vmatpush.bf16.msra.mxu0 %v3121
    %5357 = vmatpush.bf16.msra.mxu0 %v3116
    %5358 = vmatpush.bf16.msra.mxu0 %v3111
    %5359 = vmatmul.bf16.gmra.mxu0 %v897
    %v5360 = vpop.f32.mrf.mxu0
    %v5361 = vadd.f32 0.0, %v5360
    %v5362 = vpop.f32.mrf.mxu0
    %5363 = vdwg.mxu0
    %5364 = vmatpush.bf16.msra.mxu0 %v3186
    %5365 = vmatpush.bf16.msra.mxu0 %v3181
    %5366 = vmatpush.bf16.msra.mxu0 %v3176
    %5367 = vmatpush.bf16.msra.mxu0 %v3171
    %5368 = vmatpush.bf16.msra.mxu0 %v3166
    %5369 = vmatpush.bf16.msra.mxu0 %v3161
    %5370 = vmatpush.bf16.msra.mxu0 %v3156
    %5371 = vmatpush.bf16.msra.mxu0 %v3151
    %5372 = vmatmul.bf16.gmra.mxu0 %v898
    %v5373 = vpop.f32.mrf.mxu0
    %v5374 = vadd.f32 %v5361, %v5373
    %v5375 = vpop.f32.mrf.mxu0
    %5376 = vdwg.mxu0
    %5377 = vmatpush.bf16.msra.mxu0 %v3226
    %5378 = vmatpush.bf16.msra.mxu0 %v3221
    %5379 = vmatpush.bf16.msra.mxu0 %v3216
    %5380 = vmatpush.bf16.msra.mxu0 %v3211
    %5381 = vmatpush.bf16.msra.mxu0 %v3206
    %5382 = vmatpush.bf16.msra.mxu0 %v3201
    %5383 = vmatpush.bf16.msra.mxu0 %v3196
    %5384 = vmatpush.bf16.msra.mxu0 %v3191
    %5385 = vmatmul.bf16.gmra.mxu0 %v899
    %v5386 = vpop.f32.mrf.mxu0
    %v5387 = vadd.f32 %v5374, %v5386
    %v5388 = vpop.f32.mrf.mxu0
    %5389 = vdwg.mxu0
    %5390 = vmatpush.bf16.msra.mxu0 %v3266
    %5391 = vmatpush.bf16.msra.mxu0 %v3261
    %5392 = vmatpush.bf16.msra.mxu0 %v3256
    %5393 = vmatpush.bf16.msra.mxu0 %v3251
    %5394 = vmatpush.bf16.msra.mxu0 %v3246
    %5395 = vmatpush.bf16.msra.mxu0 %v3241
    %5396 = vmatpush.bf16.msra.mxu0 %v3236
    %5397 = vmatpush.bf16.msra.mxu0 %v3231
    %5398 = vmatmul.bf16.gmra.mxu0 %v900
    %v5399 = vpop.f32.mrf.mxu0
    %v5400 = vadd.f32 %v5387, %v5399
    %v5401 = vpop.f32.mrf.mxu0
    %5402 = vdwg.mxu0
    %5403 = vmatpush.bf16.msra.mxu0 %v3306
    %5404 = vmatpush.bf16.msra.mxu0 %v3301
    %5405 = vmatpush.bf16.msra.mxu0 %v3296
    %5406 = vmatpush.bf16.msra.mxu0 %v3291
    %5407 = vmatpush.bf16.msra.mxu0 %v3286
    %5408 = vmatpush.bf16.msra.mxu0 %v3281
    %5409 = vmatpush.bf16.msra.mxu0 %v3276
    %5410 = vmatpush.bf16.msra.mxu0 %v3271
    %5411 = vmatmul.bf16.gmra.mxu0 %v901
    %v5412 = vpop.f32.mrf.mxu0
    %v5413 = vadd.f32 %v5400, %v5412
    %v5414 = vpop.f32.mrf.mxu0
    %5415 = vdwg.mxu0
    %5416 = vmatpush.bf16.msra.mxu0 %v3346
    %5417 = vmatpush.bf16.msra.mxu0 %v3341
    %5418 = vmatpush.bf16.msra.mxu0 %v3336
    %5419 = vmatpush.bf16.msra.mxu0 %v3331
    %5420 = vmatpush.bf16.msra.mxu0 %v3326
    %5421 = vmatpush.bf16.msra.mxu0 %v3321
    %5422 = vmatpush.bf16.msra.mxu0 %v3316
    %5423 = vmatpush.bf16.msra.mxu0 %v3311
    %5424 = vmatmul.bf16.gmra.mxu0 %v902
    %v5425 = vpop.f32.mrf.mxu0
    %v5426 = vadd.f32 %v5413, %v5425
    %v5427 = vpop.f32.mrf.mxu0
    %5428 = vdwg.mxu0
    %5429 = vmatpush.bf16.msra.mxu0 %v3386
    %5430 = vmatpush.bf16.msra.mxu0 %v3381
    %5431 = vmatpush.bf16.msra.mxu0 %v3376
    %5432 = vmatpush.bf16.msra.mxu0 %v3371
    %5433 = vmatpush.bf16.msra.mxu0 %v3366
    %5434 = vmatpush.bf16.msra.mxu0 %v3361
    %5435 = vmatpush.bf16.msra.mxu0 %v3356
    %5436 = vmatpush.bf16.msra.mxu0 %v3351
    %5437 = vmatmul.bf16.gmra.mxu0 %v903
    %v5438 = vpop.f32.mrf.mxu0
    %v5439 = vadd.f32 %v5426, %v5438
    %v5440 = vpop.f32.mrf.mxu0
    %5441 = vdwg.mxu0
    %5442 = vmatpush.bf16.msra.mxu0 %v3426
    %5443 = vmatpush.bf16.msra.mxu0 %v3421
    %5444 = vmatpush.bf16.msra.mxu0 %v3416
    %5445 = vmatpush.bf16.msra.mxu0 %v3411
    %5446 = vmatpush.bf16.msra.mxu0 %v3406
    %5447 = vmatpush.bf16.msra.mxu0 %v3401
    %5448 = vmatpush.bf16.msra.mxu0 %v3396
    %5449 = vmatpush.bf16.msra.mxu0 %v3391
    %5450 = vmatmul.bf16.gmra.mxu0 %v904
    %v5451 = vpop.f32.mrf.mxu0
    %v5452 = vadd.f32 %v5439, %v5451
    %v5453 = vpop.f32.mrf.mxu0
    %5454 = vdwg.mxu0
    %5455 = vmatpush.bf16.msra.mxu0 %v3466
    %5456 = vmatpush.bf16.msra.mxu0 %v3461
    %5457 = vmatpush.bf16.msra.mxu0 %v3456
    %5458 = vmatpush.bf16.msra.mxu0 %v3451
    %5459 = vmatpush.bf16.msra.mxu0 %v3446
    %5460 = vmatpush.bf16.msra.mxu0 %v3441
    %5461 = vmatpush.bf16.msra.mxu0 %v3436
    %5462 = vmatpush.bf16.msra.mxu0 %v3431
    %5463 = vmatmul.bf16.gmra.mxu0 %v905
    %v5464 = vpop.f32.mrf.mxu0
    %v5465 = vadd.f32 %v5452, %v5464
    %v5466 = vpop.f32.mrf.mxu0
    %5467 = vdwg.mxu0
    %5468 = vmatpush.bf16.msra.mxu0 %v3506
    %5469 = vmatpush.bf16.msra.mxu0 %v3501
    %5470 = vmatpush.bf16.msra.mxu0 %v3496
    %5471 = vmatpush.bf16.msra.mxu0 %v3491
    %5472 = vmatpush.bf16.msra.mxu0 %v3486
    %5473 = vmatpush.bf16.msra.mxu0 %v3481
    %5474 = vmatpush.bf16.msra.mxu0 %v3476
    %5475 = vmatpush.bf16.msra.mxu0 %v3471
    %5476 = vmatmul.bf16.gmra.mxu0 %v906
    %v5477 = vpop.f32.mrf.mxu0
    %v5478 = vadd.f32 %v5465, %v5477
    %v5479 = vpop.f32.mrf.mxu0
    %5480 = vdwg.mxu0
    %5481 = vmatpush.bf16.msra.mxu0 %v3546
    %5482 = vmatpush.bf16.msra.mxu0 %v3541
    %5483 = vmatpush.bf16.msra.mxu0 %v3536
    %5484 = vmatpush.bf16.msra.mxu0 %v3531
    %5485 = vmatpush.bf16.msra.mxu0 %v3526
    %5486 = vmatpush.bf16.msra.mxu0 %v3521
    %5487 = vmatpush.bf16.msra.mxu0 %v3516
    %5488 = vmatpush.bf16.msra.mxu0 %v3511
    %5489 = vmatmul.bf16.gmra.mxu0 %v907
    %v5490 = vpop.f32.mrf.mxu0
    %v5491 = vadd.f32 %v5478, %v5490
    %v5492 = vpop.f32.mrf.mxu0
    %5493 = vdwg.mxu0
    %5494 = vmatpush.bf16.msra.mxu0 %v3586
    %5495 = vmatpush.bf16.msra.mxu0 %v3581
    %5496 = vmatpush.bf16.msra.mxu0 %v3576
    %5497 = vmatpush.bf16.msra.mxu0 %v3571
    %5498 = vmatpush.bf16.msra.mxu0 %v3566
    %5499 = vmatpush.bf16.msra.mxu0 %v3561
    %5500 = vmatpush.bf16.msra.mxu0 %v3556
    %5501 = vmatpush.bf16.msra.mxu0 %v3551
    %5502 = vmatmul.bf16.gmra.mxu0 %v908
    %v5503 = vpop.f32.mrf.mxu0
    %v5504 = vadd.f32 %v5491, %v5503
    %v5505 = vpop.f32.mrf.mxu0
    %5506 = vdwg.mxu0
    %5507 = vmatpush.bf16.msra.mxu0 %v3626
    %5508 = vmatpush.bf16.msra.mxu0 %v3621
    %5509 = vmatpush.bf16.msra.mxu0 %v3616
    %5510 = vmatpush.bf16.msra.mxu0 %v3611
    %5511 = vmatpush.bf16.msra.mxu0 %v3606
    %5512 = vmatpush.bf16.msra.mxu0 %v3601
    %5513 = vmatpush.bf16.msra.mxu0 %v3596
    %5514 = vmatpush.bf16.msra.mxu0 %v3591
    %5515 = vmatmul.bf16.gmra.mxu0 %v909
    %v5516 = vpop.f32.mrf.mxu0
    %v5517 = vadd.f32 %v5504, %v5516
    %v5518 = vpop.f32.mrf.mxu0
    %5519 = vdwg.mxu0
    %5520 = vmatpush.bf16.msra.mxu0 %v3666
    %5521 = vmatpush.bf16.msra.mxu0 %v3661
    %5522 = vmatpush.bf16.msra.mxu0 %v3656
    %5523 = vmatpush.bf16.msra.mxu0 %v3651
    %5524 = vmatpush.bf16.msra.mxu0 %v3646
    %5525 = vmatpush.bf16.msra.mxu0 %v3641
    %5526 = vmatpush.bf16.msra.mxu0 %v3636
    %5527 = vmatpush.bf16.msra.mxu0 %v3631
    %5528 = vmatmul.bf16.gmra.mxu0 %v910
    %v5529 = vpop.f32.mrf.mxu0
    %v5530 = vadd.f32 %v5517, %v5529
    %v5531 = vpop.f32.mrf.mxu0
    %5532 = vdwg.mxu0
    %5533 = vmatpush.bf16.msra.mxu0 %v3706
    %5534 = vmatpush.bf16.msra.mxu0 %v3701
    %5535 = vmatpush.bf16.msra.mxu0 %v3696
    %5536 = vmatpush.bf16.msra.mxu0 %v3691
    %5537 = vmatpush.bf16.msra.mxu0 %v3686
    %5538 = vmatpush.bf16.msra.mxu0 %v3681
    %5539 = vmatpush.bf16.msra.mxu0 %v3676
    %5540 = vmatpush.bf16.msra.mxu0 %v3671
    %5541 = vmatmul.bf16.gmra.mxu0 %v911
    %v5542 = vpop.f32.mrf.mxu0
    %v5543 = vadd.f32 %v5530, %v5542
    %v5544 = vpop.f32.mrf.mxu0
    %5545 = vdwg.mxu0
    %5546 = vmatpush.bf16.msra.mxu0 %v3746
    %5547 = vmatpush.bf16.msra.mxu0 %v3741
    %5548 = vmatpush.bf16.msra.mxu0 %v3736
    %5549 = vmatpush.bf16.msra.mxu0 %v3731
    %5550 = vmatpush.bf16.msra.mxu0 %v3726
    %5551 = vmatpush.bf16.msra.mxu0 %v3721
    %5552 = vmatpush.bf16.msra.mxu0 %v3716
    %5553 = vmatpush.bf16.msra.mxu0 %v3711
    %5554 = vmatmul.bf16.gmra.mxu0 %v912
    %v5555 = vpop.f32.mrf.mxu0
    %v5556 = vadd.f32 %v5543, %v5555
    %v5557 = vpop.f32.mrf.mxu0
    %5558 = vdwg.mxu0
    %5559 = vmatpush.bf16.msra.mxu0 %v3786
    %5560 = vmatpush.bf16.msra.mxu0 %v3781
    %5561 = vmatpush.bf16.msra.mxu0 %v3776
    %5562 = vmatpush.bf16.msra.mxu0 %v3771
    %5563 = vmatpush.bf16.msra.mxu0 %v3766
    %5564 = vmatpush.bf16.msra.mxu0 %v3761
    %5565 = vmatpush.bf16.msra.mxu0 %v3756
    %5566 = vmatpush.bf16.msra.mxu0 %v3751
    %5567 = vmatmul.bf16.gmra.mxu0 %v913
    %v5568 = vpop.f32.mrf.mxu0
    %v5569 = vadd.f32 %v5556, %v5568
    %v5570 = vpop.f32.mrf.mxu0
    %5571 = vdwg.mxu0
    %v5572 = vmax.f32 %v4685, 0.0
    %v5573 = vmax.f32 %v4906, 0.0
    %v5574 = vmax.f32 %v5127, 0.0
    %v5575 = vmax.f32 %v5348, 0.0
    %v5576 = vmax.f32 %v5569, 0.0
    %v5577 = vpack.c.bf16 %v5572, %v5572
    %v5578 = vpack.c.bf16 %v5573, %v5573
    %v5579 = vpack.c.bf16 %v5574, %v5574
    %v5580 = vpack.c.bf16 %v5575, %v5575
    %v5581 = vpack.c.bf16 %v5576, %v5576
    %v5582 = vld [vmem:[#allocation4] sm:$0xf]
    %v5583 = vld [vmem:[#allocation4 + $0x4] sm:$0xf]
    %v5584 = vld [vmem:[#allocation4 + $0x8] sm:$0xf]
    %v5585 = vld [vmem:[#allocation4 + $0xc] sm:$0xf]
    %v5586 = vld [vmem:[#allocation4 + $0x10] sm:$0xf]
    %v5587 = vld [vmem:[#allocation4 + $0x14] sm:$0xf]
    %v5588 = vld [vmem:[#allocation4 + $0x18] sm:$0xf]
    %v5589 = vld [vmem:[#allocation4 + $0x1c] sm:$0xf]
    %v5590 = vld [vmem:[#allocation4 + $0x20] sm:$0xf]
    %v5591 = vld [vmem:[#allocation4 + $0x24] sm:$0xf]
    %v5592 = vld [vmem:[#allocation4 + $0x28] sm:$0xf]
    %v5593 = vld [vmem:[#allocation4 + $0x2c] sm:$0xf]
    %v5594 = vld [vmem:[#allocation4 + $0x30] sm:$0xf]
    %v5595 = vld [vmem:[#allocation4 + $0x34] sm:$0xf]
    %v5596 = vld [vmem:[#allocation4 + $0x38] sm:$0xf]
    %v5597 = vld [vmem:[#allocation4 + $0x3c] sm:$0xf]
    %v5598 = vld [vmem:[#allocation4 + $0x40] sm:$0xf]
    %v5599 = vld [vmem:[#allocation4 + $0x44] sm:$0xf]
    %v5600 = vld [vmem:[#allocation4 + $0x48] sm:$0xf]
    %v5601 = vld [vmem:[#allocation4 + $0x4c] sm:$0xf]
    %v5602 = vld [vmem:[#allocation4 + $0x50] sm:$0xf]
    %v5603 = vld [vmem:[#allocation4 + $0x54] sm:$0xf]
    %v5604 = vld [vmem:[#allocation4 + $0x58] sm:$0xf]
    %v5605 = vld [vmem:[#allocation4 + $0x5c] sm:$0xf]
    %v5606 = vld [vmem:[#allocation4 + $0x60] sm:$0xf]
    %v5607 = vld [vmem:[#allocation4 + $0x64] sm:$0xf]
    %v5608 = vld [vmem:[#allocation4 + $0x68] sm:$0xf]
    %v5609 = vld [vmem:[#allocation4 + $0x6c] sm:$0xf]
    %v5610 = vld [vmem:[#allocation4 + $0x70] sm:$0xf]
    %v5611 = vld [vmem:[#allocation4 + $0x74] sm:$0xf]
    %v5612 = vld [vmem:[#allocation4 + $0x78] sm:$0xf]
    %v5613 = vld [vmem:[#allocation4 + $0x7c] sm:$0xf]
    %v5614 = vld [vmem:[#allocation4 + $0x80] sm:$0xf]
    %v5615 = vld [vmem:[#allocation4 + $0x84] sm:$0xf]
    %v5616 = vld [vmem:[#allocation4 + $0x88] sm:$0xf]
    %v5617 = vld [vmem:[#allocation4 + $0x8c] sm:$0xf]
    %v5618 = vld [vmem:[#allocation4 + $0x90] sm:$0xf]
    %v5619 = vld [vmem:[#allocation4 + $0x94] sm:$0xf]
    %v5620 = vld [vmem:[#allocation4 + $0x98] sm:$0xf]
    %v5621 = vld [vmem:[#allocation4 + $0x9c] sm:$0xf]
    %v5622 = vld [vmem:[#allocation4 + $0xa0] sm:$0xf]
    %v5623 = vld [vmem:[#allocation4 + $0xa4] sm:$0xf]
    %v5624 = vld [vmem:[#allocation4 + $0xa8] sm:$0xf]
    %v5625 = vld [vmem:[#allocation4 + $0xac] sm:$0xf]
    %v5626 = vld [vmem:[#allocation4 + $0xb0] sm:$0xf]
    %v5627 = vld [vmem:[#allocation4 + $0xb4] sm:$0xf]
    %v5628 = vld [vmem:[#allocation4 + $0xb8] sm:$0xf]
    %v5629 = vld [vmem:[#allocation4 + $0xbc] sm:$0xf]
    %v5630 = vld [vmem:[#allocation4 + $0xc0] sm:$0xf]
    %v5631 = vld [vmem:[#allocation4 + $0xc4] sm:$0xf]
    %v5632 = vld [vmem:[#allocation4 + $0xc8] sm:$0xf]
    %v5633 = vld [vmem:[#allocation4 + $0xcc] sm:$0xf]
    %v5634 = vld [vmem:[#allocation4 + $0xd0] sm:$0xf]
    %v5635 = vld [vmem:[#allocation4 + $0xd4] sm:$0xf]
    %v5636 = vld [vmem:[#allocation4 + $0xd8] sm:$0xf]
    %v5637 = vld [vmem:[#allocation4 + $0xdc] sm:$0xf]
    %v5638 = vld [vmem:[#allocation4 + $0xe0] sm:$0xf]
    %v5639 = vld [vmem:[#allocation4 + $0xe4] sm:$0xf]
    %v5640 = vld [vmem:[#allocation4 + $0xe8] sm:$0xf]
    %v5641 = vld [vmem:[#allocation4 + $0xec] sm:$0xf]
    %v5642 = vld [vmem:[#allocation4 + $0xf0] sm:$0xf]
    %v5643 = vld [vmem:[#allocation4 + $0xf4] sm:$0xf]
    %v5644 = vld [vmem:[#allocation4 + $0xf8] sm:$0xf]
    %v5645 = vld [vmem:[#allocation4 + $0xfc] sm:$0xf]
    %v5646 = vld [vmem:[#allocation4 + $0x100] sm:$0xf]
    %v5647 = vld [vmem:[#allocation4 + $0x104] sm:$0xf]
    %v5648 = vld [vmem:[#allocation4 + $0x108] sm:$0xf]
    %v5649 = vld [vmem:[#allocation4 + $0x10c] sm:$0xf]
    %v5650 = vld [vmem:[#allocation4 + $0x110] sm:$0xf]
    %v5651 = vld [vmem:[#allocation4 + $0x114] sm:$0xf]
    %v5652 = vld [vmem:[#allocation4 + $0x118] sm:$0xf]
    %v5653 = vld [vmem:[#allocation4 + $0x11c] sm:$0xf]
    %v5654 = vld [vmem:[#allocation4 + $0x120] sm:$0xf]
    %v5655 = vld [vmem:[#allocation4 + $0x124] sm:$0xf]
    %v5656 = vld [vmem:[#allocation4 + $0x128] sm:$0xf]
    %v5657 = vld [vmem:[#allocation4 + $0x12c] sm:$0xf]
    %v5658 = vld [vmem:[#allocation4 + $0x130] sm:$0xf]
    %v5659 = vld [vmem:[#allocation4 + $0x134] sm:$0xf]
    %v5660 = vld [vmem:[#allocation4 + $0x138] sm:$0xf]
    %v5661 = vld [vmem:[#allocation4 + $0x13c] sm:$0xf]
    %v5742 = vunpack.c.l.b16 %v5582
    %v5743 = vunpack.c.l.b16 %v5583
    %v5744 = vunpack.c.l.b16 %v5584
    %v5745 = vunpack.c.l.b16 %v5585
    %v5746 = vunpack.c.l.b16 %v5586
    %v5747 = vunpack.c.l.b16 %v5587
    %v5748 = vunpack.c.l.b16 %v5588
    %v5749 = vunpack.c.l.b16 %v5589
    %v5750 = vunpack.c.l.b16 %v5590
    %v5751 = vunpack.c.l.b16 %v5591
    %v5752 = vunpack.c.l.b16 %v5592
    %v5753 = vunpack.c.l.b16 %v5593
    %v5754 = vunpack.c.l.b16 %v5594
    %v5755 = vunpack.c.l.b16 %v5595
    %v5756 = vunpack.c.l.b16 %v5596
    %v5757 = vunpack.c.l.b16 %v5597
    %v5758 = vunpack.c.l.b16 %v5598
    %v5759 = vunpack.c.l.b16 %v5599
    %v5760 = vunpack.c.l.b16 %v5600
    %v5761 = vunpack.c.l.b16 %v5601
    %v5762 = vunpack.c.l.b16 %v5602
    %v5763 = vunpack.c.l.b16 %v5603
    %v5764 = vunpack.c.l.b16 %v5604
    %v5765 = vunpack.c.l.b16 %v5605
    %v5766 = vunpack.c.l.b16 %v5606
    %v5767 = vunpack.c.l.b16 %v5607
    %v5768 = vunpack.c.l.b16 %v5608
    %v5769 = vunpack.c.l.b16 %v5609
    %v5770 = vunpack.c.l.b16 %v5610
    %v5771 = vunpack.c.l.b16 %v5611
    %v5772 = vunpack.c.l.b16 %v5612
    %v5773 = vunpack.c.l.b16 %v5613
    %v5774 = vunpack.c.l.b16 %v5614
    %v5775 = vunpack.c.l.b16 %v5615
    %v5776 = vunpack.c.l.b16 %v5616
    %v5777 = vunpack.c.l.b16 %v5617
    %v5778 = vunpack.c.l.b16 %v5618
    %v5779 = vunpack.c.l.b16 %v5619
    %v5780 = vunpack.c.l.b16 %v5620
    %v5781 = vunpack.c.l.b16 %v5621
    %v5782 = vunpack.c.l.b16 %v5622
    %v5783 = vunpack.c.l.b16 %v5623
    %v5784 = vunpack.c.l.b16 %v5624
    %v5785 = vunpack.c.l.b16 %v5625
    %v5786 = vunpack.c.l.b16 %v5626
    %v5787 = vunpack.c.l.b16 %v5627
    %v5788 = vunpack.c.l.b16 %v5628
    %v5789 = vunpack.c.l.b16 %v5629
    %v5790 = vunpack.c.l.b16 %v5630
    %v5791 = vunpack.c.l.b16 %v5631
    %v5792 = vunpack.c.l.b16 %v5632
    %v5793 = vunpack.c.l.b16 %v5633
    %v5794 = vunpack.c.l.b16 %v5634
    %v5795 = vunpack.c.l.b16 %v5635
    %v5796 = vunpack.c.l.b16 %v5636
    %v5797 = vunpack.c.l.b16 %v5637
    %v5798 = vunpack.c.l.b16 %v5638
    %v5799 = vunpack.c.l.b16 %v5639
    %v5800 = vunpack.c.l.b16 %v5640
    %v5801 = vunpack.c.l.b16 %v5641
    %v5802 = vunpack.c.l.b16 %v5642
    %v5803 = vunpack.c.l.b16 %v5643
    %v5804 = vunpack.c.l.b16 %v5644
    %v5805 = vunpack.c.l.b16 %v5645
    %v5806 = vunpack.c.l.b16 %v5646
    %v5807 = vunpack.c.l.b16 %v5647
    %v5808 = vunpack.c.l.b16 %v5648
    %v5809 = vunpack.c.l.b16 %v5649
    %v5810 = vunpack.c.l.b16 %v5650
    %v5811 = vunpack.c.l.b16 %v5651
    %v5812 = vunpack.c.l.b16 %v5652
    %v5813 = vunpack.c.l.b16 %v5653
    %v5814 = vunpack.c.l.b16 %v5654
    %v5815 = vunpack.c.l.b16 %v5655
    %v5816 = vunpack.c.l.b16 %v5656
    %v5817 = vunpack.c.l.b16 %v5657
    %v5818 = vunpack.c.l.b16 %v5658
    %v5819 = vunpack.c.l.b16 %v5659
    %v5820 = vunpack.c.l.b16 %v5660
    %v5821 = vunpack.c.l.b16 %v5661
    %v5822 = vpack.c.b16 %v5743, %v5742
    %v5823 = vpack.c.b16 %v5745, %v5744
    %v5824 = vpack.c.b16 %v5747, %v5746
    %v5825 = vpack.c.b16 %v5749, %v5748
    %v5826 = vpack.c.b16 %v5751, %v5750
    %v5827 = vpack.c.b16 %v5753, %v5752
    %v5828 = vpack.c.b16 %v5755, %v5754
    %v5829 = vpack.c.b16 %v5757, %v5756
    %v5830 = vpack.c.b16 %v5759, %v5758
    %v5831 = vpack.c.b16 %v5761, %v5760
    %v5832 = vpack.c.b16 %v5763, %v5762
    %v5833 = vpack.c.b16 %v5765, %v5764
    %v5834 = vpack.c.b16 %v5767, %v5766
    %v5835 = vpack.c.b16 %v5769, %v5768
    %v5836 = vpack.c.b16 %v5771, %v5770
    %v5837 = vpack.c.b16 %v5773, %v5772
    %v5838 = vpack.c.b16 %v5775, %v5774
    %v5839 = vpack.c.b16 %v5777, %v5776
    %v5840 = vpack.c.b16 %v5779, %v5778
    %v5841 = vpack.c.b16 %v5781, %v5780
    %v5842 = vpack.c.b16 %v5783, %v5782
    %v5843 = vpack.c.b16 %v5785, %v5784
    %v5844 = vpack.c.b16 %v5787, %v5786
    %v5845 = vpack.c.b16 %v5789, %v5788
    %v5846 = vpack.c.b16 %v5791, %v5790
    %v5847 = vpack.c.b16 %v5793, %v5792
    %v5848 = vpack.c.b16 %v5795, %v5794
    %v5849 = vpack.c.b16 %v5797, %v5796
    %v5850 = vpack.c.b16 %v5799, %v5798
    %v5851 = vpack.c.b16 %v5801, %v5800
    %v5852 = vpack.c.b16 %v5803, %v5802
    %v5853 = vpack.c.b16 %v5805, %v5804
    %v5854 = vpack.c.b16 %v5807, %v5806
    %v5855 = vpack.c.b16 %v5809, %v5808
    %v5856 = vpack.c.b16 %v5811, %v5810
    %v5857 = vpack.c.b16 %v5813, %v5812
    %v5858 = vpack.c.b16 %v5815, %v5814
    %v5859 = vpack.c.b16 %v5817, %v5816
    %v5860 = vpack.c.b16 %v5819, %v5818
    %v5861 = vpack.c.b16 %v5821, %v5820
    %5902 = vmatpush.bf16.msra.mxu0 %v5829
    %5903 = vmatpush.bf16.msra.mxu0 %v5828
    %5904 = vmatpush.bf16.msra.mxu0 %v5827
    %5905 = vmatpush.bf16.msra.mxu0 %v5826
    %5906 = vmatpush.bf16.msra.mxu0 %v5825
    %5907 = vmatpush.bf16.msra.mxu0 %v5824
    %5908 = vmatpush.bf16.msra.mxu0 %v5823
    %5909 = vmatpush.bf16.msra.mxu0 %v5822
    %5910 = vmatmul.bf16.gmra.mxu0 %v5577
    %v5911 = vpop.f32.mrf.mxu0
    %v5912 = vadd.f32 0.0, %v5911
    %v5913 = vpop.f32.mrf.mxu0
    %5914 = vdwg.mxu0
    %5915 = vmatpush.bf16.msra.mxu0 %v5837
    %5916 = vmatpush.bf16.msra.mxu0 %v5836
    %5917 = vmatpush.bf16.msra.mxu0 %v5835
    %5918 = vmatpush.bf16.msra.mxu0 %v5834
    %5919 = vmatpush.bf16.msra.mxu0 %v5833
    %5920 = vmatpush.bf16.msra.mxu0 %v5832
    %5921 = vmatpush.bf16.msra.mxu0 %v5831
    %5922 = vmatpush.bf16.msra.mxu0 %v5830
    %5923 = vmatmul.bf16.gmra.mxu0 %v5578
    %v5924 = vpop.f32.mrf.mxu0
    %v5925 = vadd.f32 %v5912, %v5924
    %v5926 = vpop.f32.mrf.mxu0
    %5927 = vdwg.mxu0
    %5928 = vmatpush.bf16.msra.mxu0 %v5845
    %5929 = vmatpush.bf16.msra.mxu0 %v5844
    %5930 = vmatpush.bf16.msra.mxu0 %v5843
    %5931 = vmatpush.bf16.msra.mxu0 %v5842
    %5932 = vmatpush.bf16.msra.mxu0 %v5841
    %5933 = vmatpush.bf16.msra.mxu0 %v5840
    %5934 = vmatpush.bf16.msra.mxu0 %v5839
    %5935 = vmatpush.bf16.msra.mxu0 %v5838
    %5936 = vmatmul.bf16.gmra.mxu0 %v5579
    %v5937 = vpop.f32.mrf.mxu0
    %v5938 = vadd.f32 %v5925, %v5937
    %v5939 = vpop.f32.mrf.mxu0
    %5940 = vdwg.mxu0
    %5941 = vmatpush.bf16.msra.mxu0 %v5853
    %5942 = vmatpush.bf16.msra.mxu0 %v5852
    %5943 = vmatpush.bf16.msra.mxu0 %v5851
    %5944 = vmatpush.bf16.msra.mxu0 %v5850
    %5945 = vmatpush.bf16.msra.mxu0 %v5849
    %5946 = vmatpush.bf16.msra.mxu0 %v5848
    %5947 = vmatpush.bf16.msra.mxu0 %v5847
    %5948 = vmatpush.bf16.msra.mxu0 %v5846
    %5949 = vmatmul.bf16.gmra.mxu0 %v5580
    %v5950 = vpop.f32.mrf.mxu0
    %v5951 = vadd.f32 %v5938, %v5950
    %v5952 = vpop.f32.mrf.mxu0
    %5953 = vdwg.mxu0
    %5954 = vmatpush.bf16.msra.mxu0 %v5861
    %5955 = vmatpush.bf16.msra.mxu0 %v5860
    %5956 = vmatpush.bf16.msra.mxu0 %v5859
    %5957 = vmatpush.bf16.msra.mxu0 %v5858
    %5958 = vmatpush.bf16.msra.mxu0 %v5857
    %5959 = vmatpush.bf16.msra.mxu0 %v5856
    %5960 = vmatpush.bf16.msra.mxu0 %v5855
    %5961 = vmatpush.bf16.msra.mxu0 %v5854
    %5962 = vmatmul.bf16.gmra.mxu0 %v5581
    %v5963 = vpop.f32.mrf.mxu0
    %v5964 = vadd.f32 %v5951, %v5963
    %v5965 = vpop.f32.mrf.mxu0
    %5966 = vdwg.mxu0
    %5967 = vst [vmem:[%s3] sm:$0xff] %v5964
    // Predicated region
    $region22: #{concatnet_forward.1} parent=1 // pred_check
      _
    $region23: #{concatnet_forward.1} parent=1 // pred_check_branch
      %5969 = sbr.rel (0) target = $region25
    $region24: #{concatnet_forward.1} parent=1 // pred_region
      _
    $region25: #{concatnet_forward.1} parent=1 // pred_fallthru
      _
    // Predicated region
    $region26: #{concatnet_forward.1} parent=1 // pred_check
      _
    $region27: #{concatnet_forward.1} parent=1 // pred_check_branch
      %5971 = sbr.rel (0) target = $region29
    $region28: #{concatnet_forward.1} parent=1 // pred_region
      _
    $region29: #{concatnet_forward.1} parent=1 // pred_fallthru
      _
    %5972 = vsyncpa [#allocation3], 1
    %5973 = vsyncpa [#allocation5], 1

</llo_original>
